<compile_context>
chip_gen: v7x
topology: tpu7x:2x2x1
jax: 0.10.0
libtpu: 0.0.40
codegen_flags: <defaults>
</compile_context>

<pallas_src>
import functools

import jax
import jax.numpy as jnp
from jax.experimental import pallas as pl
from jax.experimental.pallas import tpu as pltpu


# ---------------------------------------------------------------------------
# 1) Hoisted input projection: gx = x @ W_ih + b_ih over the whole sequence.
# ---------------------------------------------------------------------------
def _input_proj_kernel(x_ref, w_ref, b_ref, gx_ref):
    x = x_ref[...].astype(w_ref.dtype)          # cast on the VMEM tile (not in HBM)
    acc = jnp.dot(x, w_ref[...], preferred_element_type=jnp.float32)
    gx_ref[...] = (acc + b_ref[...].astype(jnp.float32)).astype(gx_ref.dtype)


def _input_projection(x_rows, w_ih_bf16, b_ih):
    rows, d_in = x_rows.shape
    g3 = w_ih_bf16.shape[1]
    # Row tile: full array when small, else 256 rows (multiple of 8 sublanes).
    row_tile = rows if rows <= 256 else 256
    grid = (pl.cdiv(rows, row_tile),)
    return pl.pallas_call(
        _input_proj_kernel,
        out_shape=jax.ShapeDtypeStruct((rows, g3), jnp.float32),
        grid_spec=pltpu.PrefetchScalarGridSpec(
            num_scalar_prefetch=0,
            grid=grid,
            in_specs=[
                pl.BlockSpec((row_tile, d_in), lambda i: (i, 0)),
                pl.BlockSpec((d_in, g3), lambda i: (0, 0)),
                pl.BlockSpec((1, g3), lambda i: (0, 0)),
            ],
            out_specs=pl.BlockSpec((row_tile, g3), lambda i: (i, 0)),
        ),
        compiler_params=pltpu.CompilerParams(
            dimension_semantics=("parallel",)),
    )(x_rows, w_ih_bf16, b_ih)


# ---------------------------------------------------------------------------
# 2) Serial recurrence, time axis blocked, inner timesteps unrolled.
# ---------------------------------------------------------------------------
def _gru_recurrence_kernel(gx_ref, m_ref, h0_ref, whh_ref, bhh_ref,
                           seq_ref, hlast_ref, h_sc,
                           *, hidden_size, time_block):
    i = pl.program_id(0)
    H = hidden_size

    @pl.when(i == 0)
    def _():
        h_sc[...] = h0_ref[...].astype(jnp.float32)

    whh = whh_ref[...]                              # (H, 3H) bf16, VMEM resident
    bhh = bhh_ref[...].astype(jnp.float32)          # (1, 3H)

    def step(j, h):
        gx = gx_ref[j].astype(jnp.float32)          # (B, 3H) precomputed projection
        m = m_ref[j].astype(jnp.float32)            # (B, H)  pre-broadcast step mask
        gh = jnp.dot(h.astype(whh.dtype), whh,
                     preferred_element_type=jnp.float32) + bhh
        # NOTE: with H a multiple of 128 these gate slices are lane-aligned.
        r = jax.nn.sigmoid(gx[:, 0 * H:1 * H] + gh[:, 0 * H:1 * H])
        z = jax.nn.sigmoid(gx[:, 1 * H:2 * H] + gh[:, 1 * H:2 * H])
        n = jnp.tanh(gx[:, 2 * H:3 * H] + r * gh[:, 2 * H:3 * H])
        h_new = n + z * (h - n)                     # == (1 - z) * n + z * h
        h_next = h + m * (h_new - h)                # masked step carries previous h
        seq_ref[j] = h_next.astype(seq_ref.dtype)
        return h_next

    h_final = jax.lax.fori_loop(0, time_block, step, h_sc[...], unroll=True)
    h_sc[...] = h_final

    @pl.when(i == pl.num_programs(0) - 1)           # store final state exactly once
    def _():
        hlast_ref[...] = h_final.astype(hlast_ref.dtype)


def _gru_layer(x, m_bh, h0, w_ih, w_hh, b_ih, b_hh, *, time_block):
    """One EpGRU layer over the (time-padded) sequence."""
    T_pad, B, D_in = x.shape
    H = h0.shape[-1]

    gx = _input_projection(x.reshape(T_pad * B, D_in),
                           w_ih.astype(jnp.bfloat16), b_ih)
    gx = gx.reshape(T_pad, B, 3 * H)

    grid = (T_pad // time_block,)
    kernel = functools.partial(_gru_recurrence_kernel,
                               hidden_size=H, time_block=time_block)
    seq, h_last = pl.pallas_call(
        kernel,
        out_shape=(jax.ShapeDtypeStruct((T_pad, B, H), jnp.float32),
                   jax.ShapeDtypeStruct((B, H), jnp.float32)),
        grid_spec=pltpu.PrefetchScalarGridSpec(
            num_scalar_prefetch=0,
            grid=grid,
            in_specs=[
                pl.BlockSpec((time_block, B, 3 * H), lambda i: (i, 0, 0)),  # gx
                pl.BlockSpec((time_block, B, H), lambda i: (i, 0, 0)),      # mask
                pl.BlockSpec((B, H), lambda i: (0, 0)),                     # h0
                # TODO(synk): for large H on v7x (64 MiB VMEM), single-buffer the
                # constant-index weight/bias specs (pipeline_mode=pl.Buffered(1))
                # and raise vmem_limit_bytes explicitly.
                pl.BlockSpec((H, 3 * H), lambda i: (0, 0)),                 # W_hh (bf16)
                pl.BlockSpec((1, 3 * H), lambda i: (0, 0)),                 # b_hh
            ],
            out_specs=[
                pl.BlockSpec((time_block, B, H), lambda i: (i, 0, 0)),      # sequence
                pl.BlockSpec((B, H), lambda i: (0, 0)),                     # final state
            ],
            scratch_shapes=[pltpu.VMEM((B, H), jnp.float32)],
        ),
        compiler_params=pltpu.CompilerParams(
            dimension_semantics=("arbitrary",)),    # time recurrence is serial
    )(gx, m_bh, h0, w_hh.astype(jnp.bfloat16), b_hh)
    return seq, h_last


# ---------------------------------------------------------------------------
# Parameters and module forward.
# ---------------------------------------------------------------------------
def _xavier_uniform(key, shape):
    fan_in, fan_out = shape
    a = (6.0 / (fan_in + fan_out)) ** 0.5
    return jax.random.uniform(key, shape, jnp.float32, -a, a)


def init_ep_gru_params(key, input_size, hidden_size, num_layers):
    """xavier_uniform input kernels; recurrent kernels approximated the same;
    zero biases."""
    params = []
    d_in = input_size
    for _ in range(num_layers):
        key, k1, k2 = jax.random.split(key, 3)
        params.append(dict(
            w_ih=_xavier_uniform(k1, (d_in, 3 * hidden_size)),
            w_hh=_xavier_uniform(k2, (hidden_size, 3 * hidden_size)),
            b_ih=jnp.zeros((1, 3 * hidden_size), jnp.float32),
            b_hh=jnp.zeros((1, 3 * hidden_size), jnp.float32),
        ))
        d_in = hidden_size
    return params


@jax.jit
def ep_gru_forward(params, x, m, state_t0=None):
    """EpGRU.forward: stack of forward-direction EpGRU_Layers (batch_first=False).

    x: (T, B, D_in), m: (T, B).  Returns (sequence (T, B, H), last-layer state (B, H)).
    """
    T_, B, _ = x.shape
    H = params[0]["w_hh"].shape[0]

    # Block the time axis: time_block steps per sequential grid iteration.
    time_block = min(T_, 32)
    T_pad = pl.cdiv(T_, time_block) * time_block
    pad = T_pad - T_
    if pad:
        x = jnp.pad(x, ((0, pad), (0, 0), (0, 0)))

    # Pad mask with zeros (a masked step carries h unchanged, so padding does
    # not affect the final state) and pre-broadcast to (T_pad, B, H) bf16 so
    # the kernel sees lane-dense blocks with no per-step broadcast_in_dim.
    m_p = m.astype(jnp.float32)
    if pad:
        m_p = jnp.pad(m_p, ((0, pad), (0, 0)))
    m_bh = jnp.broadcast_to(m_p[:, :, None], (T_pad, B, H)).astype(jnp.bfloat16)

    seq = x
    state = None
    for p in params:
        # EpGRU.forward passes the same state_t0 to every layer.
        h0 = state_t0 if state_t0 is not None else jnp.zeros((B, H), jnp.float32)
        seq, state = _gru_layer(seq, m_bh, h0, p["w_ih"], p["w_hh"],
                                p["b_ih"], p["b_hh"], time_block=time_block)
        # TODO(synk): for deep stacks, emit inter-layer `seq` in bf16 (or fuse
        # adjacent layers in one kernel) to cut the (T,B,H) HBM round-trip.
    if pad:
        seq = seq[:T_]
    return seq, state


if __name__ == "__main__":
    T_, B = 8, 2
    input_size, hidden_size, num_layers = 4, 32, 2

    key = jax.random.PRNGKey(0)
    kx, kp = jax.random.split(key)

    x = jax.random.normal(kx, (T_, B, input_size), jnp.float32)
    # mask: all steps valid except the last step of batch element 1
    m = jnp.ones((T_, B), jnp.float32).at[T_ - 1, 1].set(0.0)

    params = init_ep_gru_params(kp, input_size, hidden_size, num_layers)

    seq, state = ep_gru_forward(params, x, m)
    jax.block_until_ready((seq, state))

    assert seq.shape == (T_, B, hidden_size)
    assert state.shape == (B, hidden_size)
    assert bool(jnp.all(jnp.isfinite(seq))) and bool(jnp.all(jnp.isfinite(state)))
    print("KERNEL_OK")
</pallas_src>

<mosaic_0001>
module attributes {stable_mosaic.version = 11 : i64} {
  func.func @_input_proj_kernel(%arg0: i32, %arg1: memref<16x32xf32, #tpu.memory_space<vmem>>, %arg2: memref<32x96xbf16, #tpu.memory_space<vmem>>, %arg3: memref<1x96xf32, #tpu.memory_space<vmem>>, %arg4: memref<16x96xf32, #tpu.memory_space<vmem>>) attributes {dimension_semantics = [#tpu.dimension_semantics<parallel>], iteration_bounds = array<i64: 1>, scalar_prefetch = 0 : i64, scratch_operands = 0 : i64, tpu.core_type = #tpu.core_type<tc>, window_params = [{transform_indices = @transform_0, window_bounds = array<i64: 16, 32>}, {pipeline_mode = #tpu.pipeline_mode<synchronous>, transform_indices = @transform_1, window_bounds = array<i64: 32, 96>}, {pipeline_mode = #tpu.pipeline_mode<synchronous>, transform_indices = @transform_2, window_bounds = array<i64: 1, 96>}, {transform_indices = @transform_3, window_bounds = array<i64: 16, 96>}]} {
    %c0 = arith.constant 0 : index
    %c0_0 = arith.constant 0 : index
    %0 = vector.load %arg1[%c0, %c0_0] : memref<16x32xf32, #tpu.memory_space<vmem>>, vector<16x32xf32>
    %1 = arith.truncf %0 : vector<16x32xf32> to vector<16x32xbf16>
    %c0_1 = arith.constant 0 : index
    %c0_2 = arith.constant 0 : index
    %2 = vector.load %arg2[%c0_1, %c0_2] : memref<32x96xbf16, #tpu.memory_space<vmem>>, vector<32x96xbf16>
    %cst = arith.constant dense<0.000000e+00> : vector<16x96xf32>
    %3 = tpu.matmul %1, %2, %cst {dimension_numbers = #tpu.dot_dimension_numbers<[1], [0], [0], [1], [0, 0, 1, 1], [], []>} : vector<16x32xbf16>, vector<32x96xbf16>, vector<16x96xf32> -> vector<16x96xf32>
    %c0_3 = arith.constant 0 : index
    %c0_4 = arith.constant 0 : index
    %4 = vector.load %arg3[%c0_3, %c0_4] : memref<1x96xf32, #tpu.memory_space<vmem>>, vector<1x96xf32>
    %5 = vector.broadcast %4 : vector<1x96xf32> to vector<16x96xf32>
    %6 = arith.addf %3, %5 : vector<16x96xf32>
    %c0_5 = arith.constant 0 : index
    %c0_6 = arith.constant 0 : index
    %7 = vector.load %arg4[%c0_5, %c0_6] : memref<16x96xf32, #tpu.memory_space<vmem>>, vector<16x96xf32>
    tpu.vector_store %arg4[%c0_5, %c0_6], %6 {strides = array<i32>} : memref<16x96xf32, #tpu.memory_space<vmem>>, vector<16x96xf32>,
    return
  }
  func.func @transform_0(%arg0: i32) -> (i32, i32) {
    %c0_i32 = arith.constant 0 : i32
    %c0_i32_0 = arith.constant 0 : i32
    return %arg0, %c0_i32 : i32, i32
  }
  func.func @transform_1(%arg0: i32) -> (i32, i32) {
    %c0_i32 = arith.constant 0 : i32
    %c0_i32_0 = arith.constant 0 : i32
    %c0_i32_1 = arith.constant 0 : i32
    return %c0_i32, %c0_i32_0 : i32, i32
  }
  func.func @transform_2(%arg0: i32) -> (i32, i32) {
    %c0_i32 = arith.constant 0 : i32
    %c0_i32_0 = arith.constant 0 : i32
    %c0_i32_1 = arith.constant 0 : i32
    return %c0_i32, %c0_i32_0 : i32, i32
  }
  func.func @transform_3(%arg0: i32) -> (i32, i32) {
    %c0_i32 = arith.constant 0 : i32
    %c0_i32_0 = arith.constant 0 : i32
    return %arg0, %c0_i32 : i32, i32
  }
}

module attributes {stable_mosaic.version = 11 : i64} {
  func.func @_input_proj_kernel(%arg0: i32, %arg1: memref<16x4xf32, #tpu.memory_space<vmem>>, %arg2: memref<4x96xbf16, #tpu.memory_space<vmem>>, %arg3: memref<1x96xf32, #tpu.memory_space<vmem>>, %arg4: memref<16x96xf32, #tpu.memory_space<vmem>>) attributes {dimension_semantics = [#tpu.dimension_semantics<parallel>], iteration_bounds = array<i64: 1>, scalar_prefetch = 0 : i64, scratch_operands = 0 : i64, tpu.core_type = #tpu.core_type<tc>, window_params = [{transform_indices = @transform_0, window_bounds = array<i64: 16, 4>}, {pipeline_mode = #tpu.pipeline_mode<synchronous>, transform_indices = @transform_1, window_bounds = array<i64: 4, 96>}, {pipeline_mode = #tpu.pipeline_mode<synchronous>, transform_indices = @transform_2, window_bounds = array<i64: 1, 96>}, {transform_indices = @transform_3, window_bounds = array<i64: 16, 96>}]} {
    %c0 = arith.constant 0 : index
    %c0_0 = arith.constant 0 : index
    %0 = vector.load %arg1[%c0, %c0_0] : memref<16x4xf32, #tpu.memory_space<vmem>>, vector<16x4xf32>
    %1 = arith.truncf %0 : vector<16x4xf32> to vector<16x4xbf16>
    %c0_1 = arith.constant 0 : index
    %c0_2 = arith.constant 0 : index
    %2 = vector.load %arg2[%c0_1, %c0_2] : memref<4x96xbf16, #tpu.memory_space<vmem>>, vector<4x96xbf16>
    %cst = arith.constant dense<0.000000e+00> : vector<16x96xf32>
    %3 = tpu.matmul %1, %2, %cst {dimension_numbers = #tpu.dot_dimension_numbers<[1], [0], [0], [1], [0, 0, 1, 1], [], []>} : vector<16x4xbf16>, vector<4x96xbf16>, vector<16x96xf32> -> vector<16x96xf32>
    %c0_3 = arith.constant 0 : index
    %c0_4 = arith.constant 0 : index
    %4 = vector.load %arg3[%c0_3, %c0_4] : memref<1x96xf32, #tpu.memory_space<vmem>>, vector<1x96xf32>
    %5 = vector.broadcast %4 : vector<1x96xf32> to vector<16x96xf32>
    %6 = arith.addf %3, %5 : vector<16x96xf32>
    %c0_5 = arith.constant 0 : index
    %c0_6 = arith.constant 0 : index
    %7 = vector.load %arg4[%c0_5, %c0_6] : memref<16x96xf32, #tpu.memory_space<vmem>>, vector<16x96xf32>
    tpu.vector_store %arg4[%c0_5, %c0_6], %6 {strides = array<i32>} : memref<16x96xf32, #tpu.memory_space<vmem>>, vector<16x96xf32>,
    return
  }
  func.func @transform_0(%arg0: i32) -> (i32, i32) {
    %c0_i32 = arith.constant 0 : i32
    %c0_i32_0 = arith.constant 0 : i32
    return %arg0, %c0_i32 : i32, i32
  }
  func.func @transform_1(%arg0: i32) -> (i32, i32) {
    %c0_i32 = arith.constant 0 : i32
    %c0_i32_0 = arith.constant 0 : i32
    %c0_i32_1 = arith.constant 0 : i32
    return %c0_i32, %c0_i32_0 : i32, i32
  }
  func.func @transform_2(%arg0: i32) -> (i32, i32) {
    %c0_i32 = arith.constant 0 : i32
    %c0_i32_0 = arith.constant 0 : i32
    %c0_i32_1 = arith.constant 0 : i32
    return %c0_i32, %c0_i32_0 : i32, i32
  }
  func.func @transform_3(%arg0: i32) -> (i32, i32) {
    %c0_i32 = arith.constant 0 : i32
    %c0_i32_0 = arith.constant 0 : i32
    return %arg0, %c0_i32 : i32, i32
  }
}

module attributes {stable_mosaic.version = 11 : i64} {
  func.func @_gru_recurrence_kernel(%arg0: i32, %arg1: memref<8x2x96xf32, #tpu.memory_space<vmem>>, %arg2: memref<8x2x32xbf16, #tpu.memory_space<vmem>>, %arg3: memref<2x32xf32, #tpu.memory_space<vmem>>, %arg4: memref<32x96xbf16, #tpu.memory_space<vmem>>, %arg5: memref<1x96xf32, #tpu.memory_space<vmem>>, %arg6: memref<8x2x32xf32, #tpu.memory_space<vmem>>, %arg7: memref<2x32xf32, #tpu.memory_space<vmem>>, %arg8: memref<2x32xf32, #tpu.memory_space<vmem>>) attributes {dimension_semantics = [#tpu.dimension_semantics<arbitrary>], iteration_bounds = array<i64: 1>, scalar_prefetch = 0 : i64, scratch_operands = 1 : i64, tpu.core_type = #tpu.core_type<tc>, window_params = [{transform_indices = @transform_0, window_bounds = array<i64: 8, 2, 96>}, {transform_indices = @transform_1, window_bounds = array<i64: 8, 2, 32>}, {pipeline_mode = #tpu.pipeline_mode<synchronous>, transform_indices = @transform_2, window_bounds = array<i64: 2, 32>}, {pipeline_mode = #tpu.pipeline_mode<synchronous>, transform_indices = @transform_3, window_bounds = array<i64: 32, 96>}, {pipeline_mode = #tpu.pipeline_mode<synchronous>, transform_indices = @transform_4, window_bounds = array<i64: 1, 96>}, {transform_indices = @transform_5, window_bounds = array<i64: 8, 2, 32>}, {pipeline_mode = #tpu.pipeline_mode<synchronous>, transform_indices = @transform_6, window_bounds = array<i64: 2, 32>}]} {
    %c0_i32 = arith.constant 0 : i32
    %0 = arith.cmpi eq, %arg0, %c0_i32 : i32
    %1 = arith.extui %0 : i1 to i32
    %c0_i32_0 = arith.constant 0 : i32
    %2 = arith.cmpi ne, %1, %c0_i32_0 : i32
    scf.if %2 {
      %c0_82 = arith.constant 0 : index
      %c0_83 = arith.constant 0 : index
      %346 = vector.load %arg3[%c0_82, %c0_83] : memref<2x32xf32, #tpu.memory_space<vmem>>, vector<2x32xf32>
      %c0_84 = arith.constant 0 : index
      %c0_85 = arith.constant 0 : index
      %347 = vector.load %arg8[%c0_84, %c0_85] : memref<2x32xf32, #tpu.memory_space<vmem>>, vector<2x32xf32>
      tpu.vector_store %arg8[%c0_84, %c0_85], %346 {strides = array<i32>} : memref<2x32xf32, #tpu.memory_space<vmem>>, vector<2x32xf32>,
    } else {
    }
    %c0 = arith.constant 0 : index
    %c0_1 = arith.constant 0 : index
    %3 = vector.load %arg4[%c0, %c0_1] : memref<32x96xbf16, #tpu.memory_space<vmem>>, vector<32x96xbf16>
    %c0_2 = arith.constant 0 : index
    %c0_3 = arith.constant 0 : index
    %4 = vector.load %arg5[%c0_2, %c0_3] : memref<1x96xf32, #tpu.memory_space<vmem>>, vector<1x96xf32>
    %c0_4 = arith.constant 0 : index
    %c0_5 = arith.constant 0 : index
    %5 = vector.load %arg8[%c0_4, %c0_5] : memref<2x32xf32, #tpu.memory_space<vmem>>, vector<2x32xf32>
    %c0_i32_6 = arith.constant 0 : i32
    %6 = arith.index_cast %c0_i32_6 : i32 to index
    %c0_7 = arith.constant 0 : index
    %c0_8 = arith.constant 0 : index
    %7 = vector.load %arg1[%6, %c0_7, %c0_8] : memref<8x2x96xf32, #tpu.memory_space<vmem>>, vector<1x2x96xf32>
    %8 = vector.shape_cast %7 : vector<1x2x96xf32> to vector<2x96xf32>
    %9 = arith.index_cast %c0_i32_6 : i32 to index
    %c0_9 = arith.constant 0 : index
    %c0_10 = arith.constant 0 : index
    %10 = vector.load %arg2[%9, %c0_9, %c0_10] : memref<8x2x32xbf16, #tpu.memory_space<vmem>>, vector<1x2x32xbf16>
    %11 = vector.shape_cast %10 : vector<1x2x32xbf16> to vector<2x32xbf16>
    %12 = arith.extf %11 : vector<2x32xbf16> to vector<2x32xf32>
    %13 = arith.truncf %5 : vector<2x32xf32> to vector<2x32xbf16>
    %cst = arith.constant dense<0.000000e+00> : vector<2x96xf32>
    %14 = tpu.matmul %13, %3, %cst {dimension_numbers = #tpu.dot_dimension_numbers<[1], [0], [0], [1], [0, 0, 1, 1], [], []>} : vector<2x32xbf16>, vector<32x96xbf16>, vector<2x96xf32> -> vector<2x96xf32>
    %15 = vector.broadcast %4 : vector<1x96xf32> to vector<2x96xf32>
    %16 = arith.addf %14, %15 : vector<2x96xf32>
    %17 = vector.extract_strided_slice %8 {offsets = [0, 0], sizes = [2, 32], strides = [1, 1]} : vector<2x96xf32> to vector<2x32xf32>
    %18 = vector.extract_strided_slice %16 {offsets = [0, 0], sizes = [2, 32], strides = [1, 1]} : vector<2x96xf32> to vector<2x32xf32>
    %19 = arith.addf %17, %18 : vector<2x32xf32>
    %20 = arith.negf %19 : vector<2x32xf32>
    %21 = math.exp %20 : vector<2x32xf32>
    %cst_11 = arith.constant 1.000000e+00 : f32
    %22 = vector.broadcast %cst_11 : f32 to vector<2x32xf32>
    %23 = arith.addf %22, %21 : vector<2x32xf32>
    %24 = arith.divf %22, %23 : vector<2x32xf32>
    %25 = vector.extract_strided_slice %8 {offsets = [0, 32], sizes = [2, 32], strides = [1, 1]} : vector<2x96xf32> to vector<2x32xf32>
    %26 = vector.extract_strided_slice %16 {offsets = [0, 32], sizes = [2, 32], strides = [1, 1]} : vector<2x96xf32> to vector<2x32xf32>
    %27 = arith.addf %25, %26 : vector<2x32xf32>
    %28 = arith.negf %27 : vector<2x32xf32>
    %29 = math.exp %28 : vector<2x32xf32>
    %cst_12 = arith.constant 1.000000e+00 : f32
    %30 = vector.broadcast %cst_12 : f32 to vector<2x32xf32>
    %31 = arith.addf %30, %29 : vector<2x32xf32>
    %32 = arith.divf %30, %31 : vector<2x32xf32>
    %33 = vector.extract_strided_slice %8 {offsets = [0, 64], sizes = [2, 32], strides = [1, 1]} : vector<2x96xf32> to vector<2x32xf32>
    %34 = vector.extract_strided_slice %16 {offsets = [0, 64], sizes = [2, 32], strides = [1, 1]} : vector<2x96xf32> to vector<2x32xf32>
    %35 = arith.mulf %24, %34 : vector<2x32xf32>
    %36 = arith.addf %33, %35 : vector<2x32xf32>
    %37 = math.tanh %36 : vector<2x32xf32>
    %38 = arith.subf %5, %37 : vector<2x32xf32>
    %39 = arith.mulf %32, %38 : vector<2x32xf32>
    %40 = arith.addf %37, %39 : vector<2x32xf32>
    %41 = arith.subf %40, %5 : vector<2x32xf32>
    %42 = arith.mulf %12, %41 : vector<2x32xf32>
    %43 = arith.addf %5, %42 : vector<2x32xf32>
    %44 = arith.index_cast %c0_i32_6 : i32 to index
    %c0_13 = arith.constant 0 : index
    %c0_14 = arith.constant 0 : index
    %45 = vector.load %arg6[%44, %c0_13, %c0_14] : memref<8x2x32xf32, #tpu.memory_space<vmem>>, vector<1x2x32xf32>
    %46 = vector.shape_cast %45 : vector<1x2x32xf32> to vector<2x32xf32>
    %47 = vector.shape_cast %43 : vector<2x32xf32> to vector<1x2x32xf32>
    tpu.vector_store %arg6[%44, %c0_13, %c0_14], %47 {strides = array<i32>} : memref<8x2x32xf32, #tpu.memory_space<vmem>>, vector<1x2x32xf32>,
    %c1_i32 = arith.constant 1 : i32
    %48 = arith.index_cast %c1_i32 : i32 to index
    %c0_15 = arith.constant 0 : index
    %c0_16 = arith.constant 0 : index
    %49 = vector.load %arg1[%48, %c0_15, %c0_16] : memref<8x2x96xf32, #tpu.memory_space<vmem>>, vector<1x2x96xf32>
    %50 = vector.shape_cast %49 : vector<1x2x96xf32> to vector<2x96xf32>
    %51 = arith.index_cast %c1_i32 : i32 to index
    %c0_17 = arith.constant 0 : index
    %c0_18 = arith.constant 0 : index
    %52 = vector.load %arg2[%51, %c0_17, %c0_18] : memref<8x2x32xbf16, #tpu.memory_space<vmem>>, vector<1x2x32xbf16>
    %53 = vector.shape_cast %52 : vector<1x2x32xbf16> to vector<2x32xbf16>
    %54 = arith.extf %53 : vector<2x32xbf16> to vector<2x32xf32>
    %55 = arith.truncf %43 : vector<2x32xf32> to vector<2x32xbf16>
    %cst_19 = arith.constant dense<0.000000e+00> : vector<2x96xf32>
    %56 = tpu.matmul %55, %3, %cst_19 {dimension_numbers = #tpu.dot_dimension_numbers<[1], [0], [0], [1], [0, 0, 1, 1], [], []>} : vector<2x32xbf16>, vector<32x96xbf16>, vector<2x96xf32> -> vector<2x96xf32>
    %57 = vector.broadcast %4 : vector<1x96xf32> to vector<2x96xf32>
    %58 = arith.addf %56, %57 : vector<2x96xf32>
    %59 = vector.extract_strided_slice %50 {offsets = [0, 0], sizes = [2, 32], strides = [1, 1]} : vector<2x96xf32> to vector<2x32xf32>
    %60 = vector.extract_strided_slice %58 {offsets = [0, 0], sizes = [2, 32], strides = [1, 1]} : vector<2x96xf32> to vector<2x32xf32>
    %61 = arith.addf %59, %60 : vector<2x32xf32>
    %62 = arith.negf %61 : vector<2x32xf32>
    %63 = math.exp %62 : vector<2x32xf32>
    %cst_20 = arith.constant 1.000000e+00 : f32
    %64 = vector.broadcast %cst_20 : f32 to vector<2x32xf32>
    %65 = arith.addf %64, %63 : vector<2x32xf32>
    %66 = arith.divf %64, %65 : vector<2x32xf32>
    %67 = vector.extract_strided_slice %50 {offsets = [0, 32], sizes = [2, 32], strides = [1, 1]} : vector<2x96xf32> to vector<2x32xf32>
    %68 = vector.extract_strided_slice %58 {offsets = [0, 32], sizes = [2, 32], strides = [1, 1]} : vector<2x96xf32> to vector<2x32xf32>
    %69 = arith.addf %67, %68 : vector<2x32xf32>
    %70 = arith.negf %69 : vector<2x32xf32>
    %71 = math.exp %70 : vector<2x32xf32>
    %cst_21 = arith.constant 1.000000e+00 : f32
    %72 = vector.broadcast %cst_21 : f32 to vector<2x32xf32>
    %73 = arith.addf %72, %71 : vector<2x32xf32>
    %74 = arith.divf %72, %73 : vector<2x32xf32>
    %75 = vector.extract_strided_slice %50 {offsets = [0, 64], sizes = [2, 32], strides = [1, 1]} : vector<2x96xf32> to vector<2x32xf32>
    %76 = vector.extract_strided_slice %58 {offsets = [0, 64], sizes = [2, 32], strides = [1, 1]} : vector<2x96xf32> to vector<2x32xf32>
    %77 = arith.mulf %66, %76 : vector<2x32xf32>
    %78 = arith.addf %75, %77 : vector<2x32xf32>
    %79 = math.tanh %78 : vector<2x32xf32>
    %80 = arith.subf %43, %79 : vector<2x32xf32>
    %81 = arith.mulf %74, %80 : vector<2x32xf32>
    %82 = arith.addf %79, %81 : vector<2x32xf32>
    %83 = arith.subf %82, %43 : vector<2x32xf32>
    %84 = arith.mulf %54, %83 : vector<2x32xf32>
    %85 = arith.addf %43, %84 : vector<2x32xf32>
    %86 = arith.index_cast %c1_i32 : i32 to index
    %c0_22 = arith.constant 0 : index
    %c0_23 = arith.constant 0 : index
    %87 = vector.load %arg6[%86, %c0_22, %c0_23] : memref<8x2x32xf32, #tpu.memory_space<vmem>>, vector<1x2x32xf32>
    %88 = vector.shape_cast %87 : vector<1x2x32xf32> to vector<2x32xf32>
    %89 = vector.shape_cast %85 : vector<2x32xf32> to vector<1x2x32xf32>
    tpu.vector_store %arg6[%86, %c0_22, %c0_23], %89 {strides = array<i32>} : memref<8x2x32xf32, #tpu.memory_space<vmem>>, vector<1x2x32xf32>,
    %c2_i32 = arith.constant 2 : i32
    %90 = arith.index_cast %c2_i32 : i32 to index
    %c0_24 = arith.constant 0 : index
    %c0_25 = arith.constant 0 : index
    %91 = vector.load %arg1[%90, %c0_24, %c0_25] : memref<8x2x96xf32, #tpu.memory_space<vmem>>, vector<1x2x96xf32>
    %92 = vector.shape_cast %91 : vector<1x2x96xf32> to vector<2x96xf32>
    %93 = arith.index_cast %c2_i32 : i32 to index
    %c0_26 = arith.constant 0 : index
    %c0_27 = arith.constant 0 : index
    %94 = vector.load %arg2[%93, %c0_26, %c0_27] : memref<8x2x32xbf16, #tpu.memory_space<vmem>>, vector<1x2x32xbf16>
    %95 = vector.shape_cast %94 : vector<1x2x32xbf16> to vector<2x32xbf16>
    %96 = arith.extf %95 : vector<2x32xbf16> to vector<2x32xf32>
    %97 = arith.truncf %85 : vector<2x32xf32> to vector<2x32xbf16>
    %cst_28 = arith.constant dense<0.000000e+00> : vector<2x96xf32>
    %98 = tpu.matmul %97, %3, %cst_28 {dimension_numbers = #tpu.dot_dimension_numbers<[1], [0], [0], [1], [0, 0, 1, 1], [], []>} : vector<2x32xbf16>, vector<32x96xbf16>, vector<2x96xf32> -> vector<2x96xf32>
    %99 = vector.broadcast %4 : vector<1x96xf32> to vector<2x96xf32>
    %100 = arith.addf %98, %99 : vector<2x96xf32>
    %101 = vector.extract_strided_slice %92 {offsets = [0, 0], sizes = [2, 32], strides = [1, 1]} : vector<2x96xf32> to vector<2x32xf32>
    %102 = vector.extract_strided_slice %100 {offsets = [0, 0], sizes = [2, 32], strides = [1, 1]} : vector<2x96xf32> to vector<2x32xf32>
    %103 = arith.addf %101, %102 : vector<2x32xf32>
    %104 = arith.negf %103 : vector<2x32xf32>
    %105 = math.exp %104 : vector<2x32xf32>
    %cst_29 = arith.constant 1.000000e+00 : f32
    %106 = vector.broadcast %cst_29 : f32 to vector<2x32xf32>
    %107 = arith.addf %106, %105 : vector<2x32xf32>
    %108 = arith.divf %106, %107 : vector<2x32xf32>
    %109 = vector.extract_strided_slice %92 {offsets = [0, 32], sizes = [2, 32], strides = [1, 1]} : vector<2x96xf32> to vector<2x32xf32>
    %110 = vector.extract_strided_slice %100 {offsets = [0, 32], sizes = [2, 32], strides = [1, 1]} : vector<2x96xf32> to vector<2x32xf32>
    %111 = arith.addf %109, %110 : vector<2x32xf32>
    %112 = arith.negf %111 : vector<2x32xf32>
    %113 = math.exp %112 : vector<2x32xf32>
    %cst_30 = arith.constant 1.000000e+00 : f32
    %114 = vector.broadcast %cst_30 : f32 to vector<2x32xf32>
    %115 = arith.addf %114, %113 : vector<2x32xf32>
    %116 = arith.divf %114, %115 : vector<2x32xf32>
    %117 = vector.extract_strided_slice %92 {offsets = [0, 64], sizes = [2, 32], strides = [1, 1]} : vector<2x96xf32> to vector<2x32xf32>
    %118 = vector.extract_strided_slice %100 {offsets = [0, 64], sizes = [2, 32], strides = [1, 1]} : vector<2x96xf32> to vector<2x32xf32>
    %119 = arith.mulf %108, %118 : vector<2x32xf32>
    %120 = arith.addf %117, %119 : vector<2x32xf32>
    %121 = math.tanh %120 : vector<2x32xf32>
    %122 = arith.subf %85, %121 : vector<2x32xf32>
    %123 = arith.mulf %116, %122 : vector<2x32xf32>
    %124 = arith.addf %121, %123 : vector<2x32xf32>
    %125 = arith.subf %124, %85 : vector<2x32xf32>
    %126 = arith.mulf %96, %125 : vector<2x32xf32>
    %127 = arith.addf %85, %126 : vector<2x32xf32>
    %128 = arith.index_cast %c2_i32 : i32 to index
    %c0_31 = arith.constant 0 : index
    %c0_32 = arith.constant 0 : index
    %129 = vector.load %arg6[%128, %c0_31, %c0_32] : memref<8x2x32xf32, #tpu.memory_space<vmem>>, vector<1x2x32xf32>
    %130 = vector.shape_cast %129 : vector<1x2x32xf32> to vector<2x32xf32>
    %131 = vector.shape_cast %127 : vector<2x32xf32> to vector<1x2x32xf32>
    tpu.vector_store %arg6[%128, %c0_31, %c0_32], %131 {strides = array<i32>} : memref<8x2x32xf32, #tpu.memory_space<vmem>>, vector<1x2x32xf32>,
    %c3_i32 = arith.constant 3 : i32
    %132 = arith.index_cast %c3_i32 : i32 to index
    %c0_33 = arith.constant 0 : index
    %c0_34 = arith.constant 0 : index
    %133 = vector.load %arg1[%132, %c0_33, %c0_34] : memref<8x2x96xf32, #tpu.memory_space<vmem>>, vector<1x2x96xf32>
    %134 = vector.shape_cast %133 : vector<1x2x96xf32> to vector<2x96xf32>
    %135 = arith.index_cast %c3_i32 : i32 to index
    %c0_35 = arith.constant 0 : index
    %c0_36 = arith.constant 0 : index
    %136 = vector.load %arg2[%135, %c0_35, %c0_36] : memref<8x2x32xbf16, #tpu.memory_space<vmem>>, vector<1x2x32xbf16>
    %137 = vector.shape_cast %136 : vector<1x2x32xbf16> to vector<2x32xbf16>
    %138 = arith.extf %137 : vector<2x32xbf16> to vector<2x32xf32>
    %139 = arith.truncf %127 : vector<2x32xf32> to vector<2x32xbf16>
    %cst_37 = arith.constant dense<0.000000e+00> : vector<2x96xf32>
    %140 = tpu.matmul %139, %3, %cst_37 {dimension_numbers = #tpu.dot_dimension_numbers<[1], [0], [0], [1], [0, 0, 1, 1], [], []>} : vector<2x32xbf16>, vector<32x96xbf16>, vector<2x96xf32> -> vector<2x96xf32>
    %141 = vector.broadcast %4 : vector<1x96xf32> to vector<2x96xf32>
    %142 = arith.addf %140, %141 : vector<2x96xf32>
    %143 = vector.extract_strided_slice %134 {offsets = [0, 0], sizes = [2, 32], strides = [1, 1]} : vector<2x96xf32> to vector<2x32xf32>
    %144 = vector.extract_strided_slice %142 {offsets = [0, 0], sizes = [2, 32], strides = [1, 1]} : vector<2x96xf32> to vector<2x32xf32>
    %145 = arith.addf %143, %144 : vector<2x32xf32>
    %146 = arith.negf %145 : vector<2x32xf32>
    %147 = math.exp %146 : vector<2x32xf32>
    %cst_38 = arith.constant 1.000000e+00 : f32
    %148 = vector.broadcast %cst_38 : f32 to vector<2x32xf32>
    %149 = arith.addf %148, %147 : vector<2x32xf32>
    %150 = arith.divf %148, %149 : vector<2x32xf32>
    %151 = vector.extract_strided_slice %134 {offsets = [0, 32], sizes = [2, 32], strides = [1, 1]} : vector<2x96xf32> to vector<2x32xf32>
    %152 = vector.extract_strided_slice %142 {offsets = [0, 32], sizes = [2, 32], strides = [1, 1]} : vector<2x96xf32> to vector<2x32xf32>
    %153 = arith.addf %151, %152 : vector<2x32xf32>
    %154 = arith.negf %153 : vector<2x32xf32>
    %155 = math.exp %154 : vector<2x32xf32>
    %cst_39 = arith.constant 1.000000e+00 : f32
    %156 = vector.broadcast %cst_39 : f32 to vector<2x32xf32>
    %157 = arith.addf %156, %155 : vector<2x32xf32>
    %158 = arith.divf %156, %157 : vector<2x32xf32>
    %159 = vector.extract_strided_slice %134 {offsets = [0, 64], sizes = [2, 32], strides = [1, 1]} : vector<2x96xf32> to vector<2x32xf32>
    %160 = vector.extract_strided_slice %142 {offsets = [0, 64], sizes = [2, 32], strides = [1, 1]} : vector<2x96xf32> to vector<2x32xf32>
    %161 = arith.mulf %150, %160 : vector<2x32xf32>
    %162 = arith.addf %159, %161 : vector<2x32xf32>
    %163 = math.tanh %162 : vector<2x32xf32>
    %164 = arith.subf %127, %163 : vector<2x32xf32>
    %165 = arith.mulf %158, %164 : vector<2x32xf32>
    %166 = arith.addf %163, %165 : vector<2x32xf32>
    %167 = arith.subf %166, %127 : vector<2x32xf32>
    %168 = arith.mulf %138, %167 : vector<2x32xf32>
    %169 = arith.addf %127, %168 : vector<2x32xf32>
    %170 = arith.index_cast %c3_i32 : i32 to index
    %c0_40 = arith.constant 0 : index
    %c0_41 = arith.constant 0 : index
    %171 = vector.load %arg6[%170, %c0_40, %c0_41] : memref<8x2x32xf32, #tpu.memory_space<vmem>>, vector<1x2x32xf32>
    %172 = vector.shape_cast %171 : vector<1x2x32xf32> to vector<2x32xf32>
    %173 = vector.shape_cast %169 : vector<2x32xf32> to vector<1x2x32xf32>
    tpu.vector_store %arg6[%170, %c0_40, %c0_41], %173 {strides = array<i32>} : memref<8x2x32xf32, #tpu.memory_space<vmem>>, vector<1x2x32xf32>,
    %c4_i32 = arith.constant 4 : i32
    %174 = arith.index_cast %c4_i32 : i32 to index
    %c0_42 = arith.constant 0 : index
    %c0_43 = arith.constant 0 : index
    %175 = vector.load %arg1[%174, %c0_42, %c0_43] : memref<8x2x96xf32, #tpu.memory_space<vmem>>, vector<1x2x96xf32>
    %176 = vector.shape_cast %175 : vector<1x2x96xf32> to vector<2x96xf32>
    %177 = arith.index_cast %c4_i32 : i32 to index
    %c0_44 = arith.constant 0 : index
    %c0_45 = arith.constant 0 : index
    %178 = vector.load %arg2[%177, %c0_44, %c0_45] : memref<8x2x32xbf16, #tpu.memory_space<vmem>>, vector<1x2x32xbf16>
    %179 = vector.shape_cast %178 : vector<1x2x32xbf16> to vector<2x32xbf16>
    %180 = arith.extf %179 : vector<2x32xbf16> to vector<2x32xf32>
    %181 = arith.truncf %169 : vector<2x32xf32> to vector<2x32xbf16>
    %cst_46 = arith.constant dense<0.000000e+00> : vector<2x96xf32>
    %182 = tpu.matmul %181, %3, %cst_46 {dimension_numbers = #tpu.dot_dimension_numbers<[1], [0], [0], [1], [0, 0, 1, 1], [], []>} : vector<2x32xbf16>, vector<32x96xbf16>, vector<2x96xf32> -> vector<2x96xf32>
    %183 = vector.broadcast %4 : vector<1x96xf32> to vector<2x96xf32>
    %184 = arith.addf %182, %183 : vector<2x96xf32>
    %185 = vector.extract_strided_slice %176 {offsets = [0, 0], sizes = [2, 32], strides = [1, 1]} : vector<2x96xf32> to vector<2x32xf32>
    %186 = vector.extract_strided_slice %184 {offsets = [0, 0], sizes = [2, 32], strides = [1, 1]} : vector<2x96xf32> to vector<2x32xf32>
    %187 = arith.addf %185, %186 : vector<2x32xf32>
    %188 = arith.negf %187 : vector<2x32xf32>
    %189 = math.exp %188 : vector<2x32xf32>
    %cst_47 = arith.constant 1.000000e+00 : f32
    %190 = vector.broadcast %cst_47 : f32 to vector<2x32xf32>
    %191 = arith.addf %190, %189 : vector<2x32xf32>
    %192 = arith.divf %190, %191 : vector<2x32xf32>
    %193 = vector.extract_strided_slice %176 {offsets = [0, 32], sizes = [2, 32], strides = [1, 1]} : vector<2x96xf32> to vector<2x32xf32>
    %194 = vector.extract_strided_slice %184 {offsets = [0, 32], sizes = [2, 32], strides = [1, 1]} : vector<2x96xf32> to vector<2x32xf32>
    %195 = arith.addf %193, %194 : vector<2x32xf32>
    %196 = arith.negf %195 : vector<2x32xf32>
    %197 = math.exp %196 : vector<2x32xf32>
    %cst_48 = arith.constant 1.000000e+00 : f32
    %198 = vector.broadcast %cst_48 : f32 to vector<2x32xf32>
    %199 = arith.addf %198, %197 : vector<2x32xf32>
    %200 = arith.divf %198, %199 : vector<2x32xf32>
    %201 = vector.extract_strided_slice %176 {offsets = [0, 64], sizes = [2, 32], strides = [1, 1]} : vector<2x96xf32> to vector<2x32xf32>
    %202 = vector.extract_strided_slice %184 {offsets = [0, 64], sizes = [2, 32], strides = [1, 1]} : vector<2x96xf32> to vector<2x32xf32>
    %203 = arith.mulf %192, %202 : vector<2x32xf32>
    %204 = arith.addf %201, %203 : vector<2x32xf32>
    %205 = math.tanh %204 : vector<2x32xf32>
    %206 = arith.subf %169, %205 : vector<2x32xf32>
    %207 = arith.mulf %200, %206 : vector<2x32xf32>
    %208 = arith.addf %205, %207 : vector<2x32xf32>
    %209 = arith.subf %208, %169 : vector<2x32xf32>
    %210 = arith.mulf %180, %209 : vector<2x32xf32>
    %211 = arith.addf %169, %210 : vector<2x32xf32>
    %212 = arith.index_cast %c4_i32 : i32 to index
    %c0_49 = arith.constant 0 : index
    %c0_50 = arith.constant 0 : index
    %213 = vector.load %arg6[%212, %c0_49, %c0_50] : memref<8x2x32xf32, #tpu.memory_space<vmem>>, vector<1x2x32xf32>
    %214 = vector.shape_cast %213 : vector<1x2x32xf32> to vector<2x32xf32>
    %215 = vector.shape_cast %211 : vector<2x32xf32> to vector<1x2x32xf32>
    tpu.vector_store %arg6[%212, %c0_49, %c0_50], %215 {strides = array<i32>} : memref<8x2x32xf32, #tpu.memory_space<vmem>>, vector<1x2x32xf32>,
    %c5_i32 = arith.constant 5 : i32
    %216 = arith.index_cast %c5_i32 : i32 to index
    %c0_51 = arith.constant 0 : index
    %c0_52 = arith.constant 0 : index
    %217 = vector.load %arg1[%216, %c0_51, %c0_52] : memref<8x2x96xf32, #tpu.memory_space<vmem>>, vector<1x2x96xf32>
    %218 = vector.shape_cast %217 : vector<1x2x96xf32> to vector<2x96xf32>
    %219 = arith.index_cast %c5_i32 : i32 to index
    %c0_53 = arith.constant 0 : index
    %c0_54 = arith.constant 0 : index
    %220 = vector.load %arg2[%219, %c0_53, %c0_54] : memref<8x2x32xbf16, #tpu.memory_space<vmem>>, vector<1x2x32xbf16>
    %221 = vector.shape_cast %220 : vector<1x2x32xbf16> to vector<2x32xbf16>
    %222 = arith.extf %221 : vector<2x32xbf16> to vector<2x32xf32>
    %223 = arith.truncf %211 : vector<2x32xf32> to vector<2x32xbf16>
    %cst_55 = arith.constant dense<0.000000e+00> : vector<2x96xf32>
    %224 = tpu.matmul %223, %3, %cst_55 {dimension_numbers = #tpu.dot_dimension_numbers<[1], [0], [0], [1], [0, 0, 1, 1], [], []>} : vector<2x32xbf16>, vector<32x96xbf16>, vector<2x96xf32> -> vector<2x96xf32>
    %225 = vector.broadcast %4 : vector<1x96xf32> to vector<2x96xf32>
    %226 = arith.addf %224, %225 : vector<2x96xf32>
    %227 = vector.extract_strided_slice %218 {offsets = [0, 0], sizes = [2, 32], strides = [1, 1]} : vector<2x96xf32> to vector<2x32xf32>
    %228 = vector.extract_strided_slice %226 {offsets = [0, 0], sizes = [2, 32], strides = [1, 1]} : vector<2x96xf32> to vector<2x32xf32>
    %229 = arith.addf %227, %228 : vector<2x32xf32>
    %230 = arith.negf %229 : vector<2x32xf32>
    %231 = math.exp %230 : vector<2x32xf32>
    %cst_56 = arith.constant 1.000000e+00 : f32
    %232 = vector.broadcast %cst_56 : f32 to vector<2x32xf32>
    %233 = arith.addf %232, %231 : vector<2x32xf32>
    %234 = arith.divf %232, %233 : vector<2x32xf32>
    %235 = vector.extract_strided_slice %218 {offsets = [0, 32], sizes = [2, 32], strides = [1, 1]} : vector<2x96xf32> to vector<2x32xf32>
    %236 = vector.extract_strided_slice %226 {offsets = [0, 32], sizes = [2, 32], strides = [1, 1]} : vector<2x96xf32> to vector<2x32xf32>
    %237 = arith.addf %235, %236 : vector<2x32xf32>
    %238 = arith.negf %237 : vector<2x32xf32>
    %239 = math.exp %238 : vector<2x32xf32>
    %cst_57 = arith.constant 1.000000e+00 : f32
    %240 = vector.broadcast %cst_57 : f32 to vector<2x32xf32>
    %241 = arith.addf %240, %239 : vector<2x32xf32>
    %242 = arith.divf %240, %241 : vector<2x32xf32>
    %243 = vector.extract_strided_slice %218 {offsets = [0, 64], sizes = [2, 32], strides = [1, 1]} : vector<2x96xf32> to vector<2x32xf32>
    %244 = vector.extract_strided_slice %226 {offsets = [0, 64], sizes = [2, 32], strides = [1, 1]} : vector<2x96xf32> to vector<2x32xf32>
    %245 = arith.mulf %234, %244 : vector<2x32xf32>
    %246 = arith.addf %243, %245 : vector<2x32xf32>
    %247 = math.tanh %246 : vector<2x32xf32>
    %248 = arith.subf %211, %247 : vector<2x32xf32>
    %249 = arith.mulf %242, %248 : vector<2x32xf32>
    %250 = arith.addf %247, %249 : vector<2x32xf32>
    %251 = arith.subf %250, %211 : vector<2x32xf32>
    %252 = arith.mulf %222, %251 : vector<2x32xf32>
    %253 = arith.addf %211, %252 : vector<2x32xf32>
    %254 = arith.index_cast %c5_i32 : i32 to index
    %c0_58 = arith.constant 0 : index
    %c0_59 = arith.constant 0 : index
    %255 = vector.load %arg6[%254, %c0_58, %c0_59] : memref<8x2x32xf32, #tpu.memory_space<vmem>>, vector<1x2x32xf32>
    %256 = vector.shape_cast %255 : vector<1x2x32xf32> to vector<2x32xf32>
    %257 = vector.shape_cast %253 : vector<2x32xf32> to vector<1x2x32xf32>
    tpu.vector_store %arg6[%254, %c0_58, %c0_59], %257 {strides = array<i32>} : memref<8x2x32xf32, #tpu.memory_space<vmem>>, vector<1x2x32xf32>,
    %c6_i32 = arith.constant 6 : i32
    %258 = arith.index_cast %c6_i32 : i32 to index
    %c0_60 = arith.constant 0 : index
    %c0_61 = arith.constant 0 : index
    %259 = vector.load %arg1[%258, %c0_60, %c0_61] : memref<8x2x96xf32, #tpu.memory_space<vmem>>, vector<1x2x96xf32>
    %260 = vector.shape_cast %259 : vector<1x2x96xf32> to vector<2x96xf32>
    %261 = arith.index_cast %c6_i32 : i32 to index
    %c0_62 = arith.constant 0 : index
    %c0_63 = arith.constant 0 : index
    %262 = vector.load %arg2[%261, %c0_62, %c0_63] : memref<8x2x32xbf16, #tpu.memory_space<vmem>>, vector<1x2x32xbf16>
    %263 = vector.shape_cast %262 : vector<1x2x32xbf16> to vector<2x32xbf16>
    %264 = arith.extf %263 : vector<2x32xbf16> to vector<2x32xf32>
    %265 = arith.truncf %253 : vector<2x32xf32> to vector<2x32xbf16>
    %cst_64 = arith.constant dense<0.000000e+00> : vector<2x96xf32>
    %266 = tpu.matmul %265, %3, %cst_64 {dimension_numbers = #tpu.dot_dimension_numbers<[1], [0], [0], [1], [0, 0, 1, 1], [], []>} : vector<2x32xbf16>, vector<32x96xbf16>, vector<2x96xf32> -> vector<2x96xf32>
    %267 = vector.broadcast %4 : vector<1x96xf32> to vector<2x96xf32>
    %268 = arith.addf %266, %267 : vector<2x96xf32>
    %269 = vector.extract_strided_slice %260 {offsets = [0, 0], sizes = [2, 32], strides = [1, 1]} : vector<2x96xf32> to vector<2x32xf32>
    %270 = vector.extract_strided_slice %268 {offsets = [0, 0], sizes = [2, 32], strides = [1, 1]} : vector<2x96xf32> to vector<2x32xf32>
    %271 = arith.addf %269, %270 : vector<2x32xf32>
    %272 = arith.negf %271 : vector<2x32xf32>
    %273 = math.exp %272 : vector<2x32xf32>
    %cst_65 = arith.constant 1.000000e+00 : f32
    %274 = vector.broadcast %cst_65 : f32 to vector<2x32xf32>
    %275 = arith.addf %274, %273 : vector<2x32xf32>
    %276 = arith.divf %274, %275 : vector<2x32xf32>
    %277 = vector.extract_strided_slice %260 {offsets = [0, 32], sizes = [2, 32], strides = [1, 1]} : vector<2x96xf32> to vector<2x32xf32>
    %278 = vector.extract_strided_slice %268 {offsets = [0, 32], sizes = [2, 32], strides = [1, 1]} : vector<2x96xf32> to vector<2x32xf32>
    %279 = arith.addf %277, %278 : vector<2x32xf32>
    %280 = arith.negf %279 : vector<2x32xf32>
    %281 = math.exp %280 : vector<2x32xf32>
    %cst_66 = arith.constant 1.000000e+00 : f32
    %282 = vector.broadcast %cst_66 : f32 to vector<2x32xf32>
    %283 = arith.addf %282, %281 : vector<2x32xf32>
    %284 = arith.divf %282, %283 : vector<2x32xf32>
    %285 = vector.extract_strided_slice %260 {offsets = [0, 64], sizes = [2, 32], strides = [1, 1]} : vector<2x96xf32> to vector<2x32xf32>
    %286 = vector.extract_strided_slice %268 {offsets = [0, 64], sizes = [2, 32], strides = [1, 1]} : vector<2x96xf32> to vector<2x32xf32>
    %287 = arith.mulf %276, %286 : vector<2x32xf32>
    %288 = arith.addf %285, %287 : vector<2x32xf32>
    %289 = math.tanh %288 : vector<2x32xf32>
    %290 = arith.subf %253, %289 : vector<2x32xf32>
    %291 = arith.mulf %284, %290 : vector<2x32xf32>
    %292 = arith.addf %289, %291 : vector<2x32xf32>
    %293 = arith.subf %292, %253 : vector<2x32xf32>
    %294 = arith.mulf %264, %293 : vector<2x32xf32>
    %295 = arith.addf %253, %294 : vector<2x32xf32>
    %296 = arith.index_cast %c6_i32 : i32 to index
    %c0_67 = arith.constant 0 : index
    %c0_68 = arith.constant 0 : index
    %297 = vector.load %arg6[%296, %c0_67, %c0_68] : memref<8x2x32xf32, #tpu.memory_space<vmem>>, vector<1x2x32xf32>
    %298 = vector.shape_cast %297 : vector<1x2x32xf32> to vector<2x32xf32>
    %299 = vector.shape_cast %295 : vector<2x32xf32> to vector<1x2x32xf32>
    tpu.vector_store %arg6[%296, %c0_67, %c0_68], %299 {strides = array<i32>} : memref<8x2x32xf32, #tpu.memory_space<vmem>>, vector<1x2x32xf32>,
    %c7_i32 = arith.constant 7 : i32
    %300 = arith.index_cast %c7_i32 : i32 to index
    %c0_69 = arith.constant 0 : index
    %c0_70 = arith.constant 0 : index
    %301 = vector.load %arg1[%300, %c0_69, %c0_70] : memref<8x2x96xf32, #tpu.memory_space<vmem>>, vector<1x2x96xf32>
    %302 = vector.shape_cast %301 : vector<1x2x96xf32> to vector<2x96xf32>
    %303 = arith.index_cast %c7_i32 : i32 to index
    %c0_71 = arith.constant 0 : index
    %c0_72 = arith.constant 0 : index
    %304 = vector.load %arg2[%303, %c0_71, %c0_72] : memref<8x2x32xbf16, #tpu.memory_space<vmem>>, vector<1x2x32xbf16>
    %305 = vector.shape_cast %304 : vector<1x2x32xbf16> to vector<2x32xbf16>
    %306 = arith.extf %305 : vector<2x32xbf16> to vector<2x32xf32>
    %307 = arith.truncf %295 : vector<2x32xf32> to vector<2x32xbf16>
    %cst_73 = arith.constant dense<0.000000e+00> : vector<2x96xf32>
    %308 = tpu.matmul %307, %3, %cst_73 {dimension_numbers = #tpu.dot_dimension_numbers<[1], [0], [0], [1], [0, 0, 1, 1], [], []>} : vector<2x32xbf16>, vector<32x96xbf16>, vector<2x96xf32> -> vector<2x96xf32>
    %309 = vector.broadcast %4 : vector<1x96xf32> to vector<2x96xf32>
    %310 = arith.addf %308, %309 : vector<2x96xf32>
    %311 = vector.extract_strided_slice %302 {offsets = [0, 0], sizes = [2, 32], strides = [1, 1]} : vector<2x96xf32> to vector<2x32xf32>
    %312 = vector.extract_strided_slice %310 {offsets = [0, 0], sizes = [2, 32], strides = [1, 1]} : vector<2x96xf32> to vector<2x32xf32>
    %313 = arith.addf %311, %312 : vector<2x32xf32>
    %314 = arith.negf %313 : vector<2x32xf32>
    %315 = math.exp %314 : vector<2x32xf32>
    %cst_74 = arith.constant 1.000000e+00 : f32
    %316 = vector.broadcast %cst_74 : f32 to vector<2x32xf32>
    %317 = arith.addf %316, %315 : vector<2x32xf32>
    %318 = arith.divf %316, %317 : vector<2x32xf32>
    %319 = vector.extract_strided_slice %302 {offsets = [0, 32], sizes = [2, 32], strides = [1, 1]} : vector<2x96xf32> to vector<2x32xf32>
    %320 = vector.extract_strided_slice %310 {offsets = [0, 32], sizes = [2, 32], strides = [1, 1]} : vector<2x96xf32> to vector<2x32xf32>
    %321 = arith.addf %319, %320 : vector<2x32xf32>
    %322 = arith.negf %321 : vector<2x32xf32>
    %323 = math.exp %322 : vector<2x32xf32>
    %cst_75 = arith.constant 1.000000e+00 : f32
    %324 = vector.broadcast %cst_75 : f32 to vector<2x32xf32>
    %325 = arith.addf %324, %323 : vector<2x32xf32>
    %326 = arith.divf %324, %325 : vector<2x32xf32>
    %327 = vector.extract_strided_slice %302 {offsets = [0, 64], sizes = [2, 32], strides = [1, 1]} : vector<2x96xf32> to vector<2x32xf32>
    %328 = vector.extract_strided_slice %310 {offsets = [0, 64], sizes = [2, 32], strides = [1, 1]} : vector<2x96xf32> to vector<2x32xf32>
    %329 = arith.mulf %318, %328 : vector<2x32xf32>
    %330 = arith.addf %327, %329 : vector<2x32xf32>
    %331 = math.tanh %330 : vector<2x32xf32>
    %332 = arith.subf %295, %331 : vector<2x32xf32>
    %333 = arith.mulf %326, %332 : vector<2x32xf32>
    %334 = arith.addf %331, %333 : vector<2x32xf32>
    %335 = arith.subf %334, %295 : vector<2x32xf32>
    %336 = arith.mulf %306, %335 : vector<2x32xf32>
    %337 = arith.addf %295, %336 : vector<2x32xf32>
    %338 = arith.index_cast %c7_i32 : i32 to index
    %c0_76 = arith.constant 0 : index
    %c0_77 = arith.constant 0 : index
    %339 = vector.load %arg6[%338, %c0_76, %c0_77] : memref<8x2x32xf32, #tpu.memory_space<vmem>>, vector<1x2x32xf32>
    %340 = vector.shape_cast %339 : vector<1x2x32xf32> to vector<2x32xf32>
    %341 = vector.shape_cast %337 : vector<2x32xf32> to vector<1x2x32xf32>
    tpu.vector_store %arg6[%338, %c0_76, %c0_77], %341 {strides = array<i32>} : memref<8x2x32xf32, #tpu.memory_space<vmem>>, vector<1x2x32xf32>,
    %c8_i32 = arith.constant 8 : i32
    %c0_78 = arith.constant 0 : index
    %c0_79 = arith.constant 0 : index
    %342 = vector.load %arg8[%c0_78, %c0_79] : memref<2x32xf32, #tpu.memory_space<vmem>>, vector<2x32xf32>
    tpu.vector_store %arg8[%c0_78, %c0_79], %337 {strides = array<i32>} : memref<2x32xf32, #tpu.memory_space<vmem>>, vector<2x32xf32>,
    %c0_i32_80 = arith.constant 0 : i32
    %343 = arith.cmpi eq, %arg0, %c0_i32_80 : i32
    %344 = arith.extui %343 : i1 to i32
    %c0_i32_81 = arith.constant 0 : i32
    %345 = arith.cmpi ne, %344, %c0_i32_81 : i32
    scf.if %345 {
      %c0_82 = arith.constant 0 : index
      %c0_83 = arith.constant 0 : index
      %346 = vector.load %arg7[%c0_82, %c0_83] : memref<2x32xf32, #tpu.memory_space<vmem>>, vector<2x32xf32>
      tpu.vector_store %arg7[%c0_82, %c0_83], %337 {strides = array<i32>} : memref<2x32xf32, #tpu.memory_space<vmem>>, vector<2x32xf32>,
    } else {
    }
    return
  }
  func.func @transform_0(%arg0: i32) -> (i32, i32, i32) {
    %c0_i32 = arith.constant 0 : i32
    %c0_i32_0 = arith.constant 0 : i32
    %c0_i32_1 = arith.constant 0 : i32
    return %arg0, %c0_i32, %c0_i32_0 : i32, i32, i32
  }
  func.func @transform_1(%arg0: i32) -> (i32, i32, i32) {
    %c0_i32 = arith.constant 0 : i32
    %c0_i32_0 = arith.constant 0 : i32
    %c0_i32_1 = arith.constant 0 : i32
    return %arg0, %c0_i32, %c0_i32_0 : i32, i32, i32
  }
  func.func @transform_2(%arg0: i32) -> (i32, i32) {
    %c0_i32 = arith.constant 0 : i32
    %c0_i32_0 = arith.constant 0 : i32
    %c0_i32_1 = arith.constant 0 : i32
    return %c0_i32, %c0_i32_0 : i32, i32
  }
  func.func @transform_3(%arg0: i32) -> (i32, i32) {
    %c0_i32 = arith.constant 0 : i32
    %c0_i32_0 = arith.constant 0 : i32
    %c0_i32_1 = arith.constant 0 : i32
    return %c0_i32, %c0_i32_0 : i32, i32
  }
  func.func @transform_4(%arg0: i32) -> (i32, i32) {
    %c0_i32 = arith.constant 0 : i32
    %c0_i32_0 = arith.constant 0 : i32
    %c0_i32_1 = arith.constant 0 : i32
    return %c0_i32, %c0_i32_0 : i32, i32
  }
  func.func @transform_5(%arg0: i32) -> (i32, i32, i32) {
    %c0_i32 = arith.constant 0 : i32
    %c0_i32_0 = arith.constant 0 : i32
    %c0_i32_1 = arith.constant 0 : i32
    return %arg0, %c0_i32, %c0_i32_0 : i32, i32, i32
  }
  func.func @transform_6(%arg0: i32) -> (i32, i32) {
    %c0_i32 = arith.constant 0 : i32
    %c0_i32_0 = arith.constant 0 : i32
    %c0_i32_1 = arith.constant 0 : i32
    return %c0_i32, %c0_i32_0 : i32, i32
  }
}

module attributes {stable_mosaic.version = 11 : i64} {
  func.func @_gru_recurrence_kernel(%arg0: i32, %arg1: memref<8x2x96xf32, #tpu.memory_space<vmem>>, %arg2: memref<8x2x32xbf16, #tpu.memory_space<vmem>>, %arg3: memref<2x32xf32, #tpu.memory_space<vmem>>, %arg4: memref<32x96xbf16, #tpu.memory_space<vmem>>, %arg5: memref<1x96xf32, #tpu.memory_space<vmem>>, %arg6: memref<8x2x32xf32, #tpu.memory_space<vmem>>, %arg7: memref<2x32xf32, #tpu.memory_space<vmem>>, %arg8: memref<2x32xf32, #tpu.memory_space<vmem>>) attributes {dimension_semantics = [#tpu.dimension_semantics<arbitrary>], iteration_bounds = array<i64: 1>, scalar_prefetch = 0 : i64, scratch_operands = 1 : i64, tpu.core_type = #tpu.core_type<tc>, window_params = [{transform_indices = @transform_0, window_bounds = array<i64: 8, 2, 96>}, {transform_indices = @transform_1, window_bounds = array<i64: 8, 2, 32>}, {pipeline_mode = #tpu.pipeline_mode<synchronous>, transform_indices = @transform_2, window_bounds = array<i64: 2, 32>}, {pipeline_mode = #tpu.pipeline_mode<synchronous>, transform_indices = @transform_3, window_bounds = array<i64: 32, 96>}, {pipeline_mode = #tpu.pipeline_mode<synchronous>, transform_indices = @transform_4, window_bounds = array<i64: 1, 96>}, {transform_indices = @transform_5, window_bounds = array<i64: 8, 2, 32>}, {pipeline_mode = #tpu.pipeline_mode<synchronous>, transform_indices = @transform_6, window_bounds = array<i64: 2, 32>}]} {
    %c0_i32 = arith.constant 0 : i32
    %0 = arith.cmpi eq, %arg0, %c0_i32 : i32
    %1 = arith.extui %0 : i1 to i32
    %c0_i32_0 = arith.constant 0 : i32
    %2 = arith.cmpi ne, %1, %c0_i32_0 : i32
    scf.if %2 {
      %c0_82 = arith.constant 0 : index
      %c0_83 = arith.constant 0 : index
      %346 = vector.load %arg3[%c0_82, %c0_83] : memref<2x32xf32, #tpu.memory_space<vmem>>, vector<2x32xf32>
      %c0_84 = arith.constant 0 : index
      %c0_85 = arith.constant 0 : index
      %347 = vector.load %arg8[%c0_84, %c0_85] : memref<2x32xf32, #tpu.memory_space<vmem>>, vector<2x32xf32>
      tpu.vector_store %arg8[%c0_84, %c0_85], %346 {strides = array<i32>} : memref<2x32xf32, #tpu.memory_space<vmem>>, vector<2x32xf32>,
    } else {
    }
    %c0 = arith.constant 0 : index
    %c0_1 = arith.constant 0 : index
    %3 = vector.load %arg4[%c0, %c0_1] : memref<32x96xbf16, #tpu.memory_space<vmem>>, vector<32x96xbf16>
    %c0_2 = arith.constant 0 : index
    %c0_3 = arith.constant 0 : index
    %4 = vector.load %arg5[%c0_2, %c0_3] : memref<1x96xf32, #tpu.memory_space<vmem>>, vector<1x96xf32>
    %c0_4 = arith.constant 0 : index
    %c0_5 = arith.constant 0 : index
    %5 = vector.load %arg8[%c0_4, %c0_5] : memref<2x32xf32, #tpu.memory_space<vmem>>, vector<2x32xf32>
    %c0_i32_6 = arith.constant 0 : i32
    %6 = arith.index_cast %c0_i32_6 : i32 to index
    %c0_7 = arith.constant 0 : index
    %c0_8 = arith.constant 0 : index
    %7 = vector.load %arg1[%6, %c0_7, %c0_8] : memref<8x2x96xf32, #tpu.memory_space<vmem>>, vector<1x2x96xf32>
    %8 = vector.shape_cast %7 : vector<1x2x96xf32> to vector<2x96xf32>
    %9 = arith.index_cast %c0_i32_6 : i32 to index
    %c0_9 = arith.constant 0 : index
    %c0_10 = arith.constant 0 : index
    %10 = vector.load %arg2[%9, %c0_9, %c0_10] : memref<8x2x32xbf16, #tpu.memory_space<vmem>>, vector<1x2x32xbf16>
    %11 = vector.shape_cast %10 : vector<1x2x32xbf16> to vector<2x32xbf16>
    %12 = arith.extf %11 : vector<2x32xbf16> to vector<2x32xf32>
    %13 = arith.truncf %5 : vector<2x32xf32> to vector<2x32xbf16>
    %cst = arith.constant dense<0.000000e+00> : vector<2x96xf32>
    %14 = tpu.matmul %13, %3, %cst {dimension_numbers = #tpu.dot_dimension_numbers<[1], [0], [0], [1], [0, 0, 1, 1], [], []>} : vector<2x32xbf16>, vector<32x96xbf16>, vector<2x96xf32> -> vector<2x96xf32>
    %15 = vector.broadcast %4 : vector<1x96xf32> to vector<2x96xf32>
    %16 = arith.addf %14, %15 : vector<2x96xf32>
    %17 = vector.extract_strided_slice %8 {offsets = [0, 0], sizes = [2, 32], strides = [1, 1]} : vector<2x96xf32> to vector<2x32xf32>
    %18 = vector.extract_strided_slice %16 {offsets = [0, 0], sizes = [2, 32], strides = [1, 1]} : vector<2x96xf32> to vector<2x32xf32>
    %19 = arith.addf %17, %18 : vector<2x32xf32>
    %20 = arith.negf %19 : vector<2x32xf32>
    %21 = math.exp %20 : vector<2x32xf32>
    %cst_11 = arith.constant 1.000000e+00 : f32
    %22 = vector.broadcast %cst_11 : f32 to vector<2x32xf32>
    %23 = arith.addf %22, %21 : vector<2x32xf32>
    %24 = arith.divf %22, %23 : vector<2x32xf32>
    %25 = vector.extract_strided_slice %8 {offsets = [0, 32], sizes = [2, 32], strides = [1, 1]} : vector<2x96xf32> to vector<2x32xf32>
    %26 = vector.extract_strided_slice %16 {offsets = [0, 32], sizes = [2, 32], strides = [1, 1]} : vector<2x96xf32> to vector<2x32xf32>
    %27 = arith.addf %25, %26 : vector<2x32xf32>
    %28 = arith.negf %27 : vector<2x32xf32>
    %29 = math.exp %28 : vector<2x32xf32>
    %cst_12 = arith.constant 1.000000e+00 : f32
    %30 = vector.broadcast %cst_12 : f32 to vector<2x32xf32>
    %31 = arith.addf %30, %29 : vector<2x32xf32>
    %32 = arith.divf %30, %31 : vector<2x32xf32>
    %33 = vector.extract_strided_slice %8 {offsets = [0, 64], sizes = [2, 32], strides = [1, 1]} : vector<2x96xf32> to vector<2x32xf32>
    %34 = vector.extract_strided_slice %16 {offsets = [0, 64], sizes = [2, 32], strides = [1, 1]} : vector<2x96xf32> to vector<2x32xf32>
    %35 = arith.mulf %24, %34 : vector<2x32xf32>
    %36 = arith.addf %33, %35 : vector<2x32xf32>
    %37 = math.tanh %36 : vector<2x32xf32>
    %38 = arith.subf %5, %37 : vector<2x32xf32>
    %39 = arith.mulf %32, %38 : vector<2x32xf32>
    %40 = arith.addf %37, %39 : vector<2x32xf32>
    %41 = arith.subf %40, %5 : vector<2x32xf32>
    %42 = arith.mulf %12, %41 : vector<2x32xf32>
    %43 = arith.addf %5, %42 : vector<2x32xf32>
    %44 = arith.index_cast %c0_i32_6 : i32 to index
    %c0_13 = arith.constant 0 : index
    %c0_14 = arith.constant 0 : index
    %45 = vector.load %arg6[%44, %c0_13, %c0_14] : memref<8x2x32xf32, #tpu.memory_space<vmem>>, vector<1x2x32xf32>
    %46 = vector.shape_cast %45 : vector<1x2x32xf32> to vector<2x32xf32>
    %47 = vector.shape_cast %43 : vector<2x32xf32> to vector<1x2x32xf32>
    tpu.vector_store %arg6[%44, %c0_13, %c0_14], %47 {strides = array<i32>} : memref<8x2x32xf32, #tpu.memory_space<vmem>>, vector<1x2x32xf32>,
    %c1_i32 = arith.constant 1 : i32
    %48 = arith.index_cast %c1_i32 : i32 to index
    %c0_15 = arith.constant 0 : index
    %c0_16 = arith.constant 0 : index
    %49 = vector.load %arg1[%48, %c0_15, %c0_16] : memref<8x2x96xf32, #tpu.memory_space<vmem>>, vector<1x2x96xf32>
    %50 = vector.shape_cast %49 : vector<1x2x96xf32> to vector<2x96xf32>
    %51 = arith.index_cast %c1_i32 : i32 to index
    %c0_17 = arith.constant 0 : index
    %c0_18 = arith.constant 0 : index
    %52 = vector.load %arg2[%51, %c0_17, %c0_18] : memref<8x2x32xbf16, #tpu.memory_space<vmem>>, vector<1x2x32xbf16>
    %53 = vector.shape_cast %52 : vector<1x2x32xbf16> to vector<2x32xbf16>
    %54 = arith.extf %53 : vector<2x32xbf16> to vector<2x32xf32>
    %55 = arith.truncf %43 : vector<2x32xf32> to vector<2x32xbf16>
    %cst_19 = arith.constant dense<0.000000e+00> : vector<2x96xf32>
    %56 = tpu.matmul %55, %3, %cst_19 {dimension_numbers = #tpu.dot_dimension_numbers<[1], [0], [0], [1], [0, 0, 1, 1], [], []>} : vector<2x32xbf16>, vector<32x96xbf16>, vector<2x96xf32> -> vector<2x96xf32>
    %57 = vector.broadcast %4 : vector<1x96xf32> to vector<2x96xf32>
    %58 = arith.addf %56, %57 : vector<2x96xf32>
    %59 = vector.extract_strided_slice %50 {offsets = [0, 0], sizes = [2, 32], strides = [1, 1]} : vector<2x96xf32> to vector<2x32xf32>
    %60 = vector.extract_strided_slice %58 {offsets = [0, 0], sizes = [2, 32], strides = [1, 1]} : vector<2x96xf32> to vector<2x32xf32>
    %61 = arith.addf %59, %60 : vector<2x32xf32>
    %62 = arith.negf %61 : vector<2x32xf32>
    %63 = math.exp %62 : vector<2x32xf32>
    %cst_20 = arith.constant 1.000000e+00 : f32
    %64 = vector.broadcast %cst_20 : f32 to vector<2x32xf32>
    %65 = arith.addf %64, %63 : vector<2x32xf32>
    %66 = arith.divf %64, %65 : vector<2x32xf32>
    %67 = vector.extract_strided_slice %50 {offsets = [0, 32], sizes = [2, 32], strides = [1, 1]} : vector<2x96xf32> to vector<2x32xf32>
    %68 = vector.extract_strided_slice %58 {offsets = [0, 32], sizes = [2, 32], strides = [1, 1]} : vector<2x96xf32> to vector<2x32xf32>
    %69 = arith.addf %67, %68 : vector<2x32xf32>
    %70 = arith.negf %69 : vector<2x32xf32>
    %71 = math.exp %70 : vector<2x32xf32>
    %cst_21 = arith.constant 1.000000e+00 : f32
    %72 = vector.broadcast %cst_21 : f32 to vector<2x32xf32>
    %73 = arith.addf %72, %71 : vector<2x32xf32>
    %74 = arith.divf %72, %73 : vector<2x32xf32>
    %75 = vector.extract_strided_slice %50 {offsets = [0, 64], sizes = [2, 32], strides = [1, 1]} : vector<2x96xf32> to vector<2x32xf32>
    %76 = vector.extract_strided_slice %58 {offsets = [0, 64], sizes = [2, 32], strides = [1, 1]} : vector<2x96xf32> to vector<2x32xf32>
    %77 = arith.mulf %66, %76 : vector<2x32xf32>
    %78 = arith.addf %75, %77 : vector<2x32xf32>
    %79 = math.tanh %78 : vector<2x32xf32>
    %80 = arith.subf %43, %79 : vector<2x32xf32>
    %81 = arith.mulf %74, %80 : vector<2x32xf32>
    %82 = arith.addf %79, %81 : vector<2x32xf32>
    %83 = arith.subf %82, %43 : vector<2x32xf32>
    %84 = arith.mulf %54, %83 : vector<2x32xf32>
    %85 = arith.addf %43, %84 : vector<2x32xf32>
    %86 = arith.index_cast %c1_i32 : i32 to index
    %c0_22 = arith.constant 0 : index
    %c0_23 = arith.constant 0 : index
    %87 = vector.load %arg6[%86, %c0_22, %c0_23] : memref<8x2x32xf32, #tpu.memory_space<vmem>>, vector<1x2x32xf32>
    %88 = vector.shape_cast %87 : vector<1x2x32xf32> to vector<2x32xf32>
    %89 = vector.shape_cast %85 : vector<2x32xf32> to vector<1x2x32xf32>
    tpu.vector_store %arg6[%86, %c0_22, %c0_23], %89 {strides = array<i32>} : memref<8x2x32xf32, #tpu.memory_space<vmem>>, vector<1x2x32xf32>,
    %c2_i32 = arith.constant 2 : i32
    %90 = arith.index_cast %c2_i32 : i32 to index
    %c0_24 = arith.constant 0 : index
    %c0_25 = arith.constant 0 : index
    %91 = vector.load %arg1[%90, %c0_24, %c0_25] : memref<8x2x96xf32, #tpu.memory_space<vmem>>, vector<1x2x96xf32>
    %92 = vector.shape_cast %91 : vector<1x2x96xf32> to vector<2x96xf32>
    %93 = arith.index_cast %c2_i32 : i32 to index
    %c0_26 = arith.constant 0 : index
    %c0_27 = arith.constant 0 : index
    %94 = vector.load %arg2[%93, %c0_26, %c0_27] : memref<8x2x32xbf16, #tpu.memory_space<vmem>>, vector<1x2x32xbf16>
    %95 = vector.shape_cast %94 : vector<1x2x32xbf16> to vector<2x32xbf16>
    %96 = arith.extf %95 : vector<2x32xbf16> to vector<2x32xf32>
    %97 = arith.truncf %85 : vector<2x32xf32> to vector<2x32xbf16>
    %cst_28 = arith.constant dense<0.000000e+00> : vector<2x96xf32>
    %98 = tpu.matmul %97, %3, %cst_28 {dimension_numbers = #tpu.dot_dimension_numbers<[1], [0], [0], [1], [0, 0, 1, 1], [], []>} : vector<2x32xbf16>, vector<32x96xbf16>, vector<2x96xf32> -> vector<2x96xf32>
    %99 = vector.broadcast %4 : vector<1x96xf32> to vector<2x96xf32>
    %100 = arith.addf %98, %99 : vector<2x96xf32>
    %101 = vector.extract_strided_slice %92 {offsets = [0, 0], sizes = [2, 32], strides = [1, 1]} : vector<2x96xf32> to vector<2x32xf32>
    %102 = vector.extract_strided_slice %100 {offsets = [0, 0], sizes = [2, 32], strides = [1, 1]} : vector<2x96xf32> to vector<2x32xf32>
    %103 = arith.addf %101, %102 : vector<2x32xf32>
    %104 = arith.negf %103 : vector<2x32xf32>
    %105 = math.exp %104 : vector<2x32xf32>
    %cst_29 = arith.constant 1.000000e+00 : f32
    %106 = vector.broadcast %cst_29 : f32 to vector<2x32xf32>
    %107 = arith.addf %106, %105 : vector<2x32xf32>
    %108 = arith.divf %106, %107 : vector<2x32xf32>
    %109 = vector.extract_strided_slice %92 {offsets = [0, 32], sizes = [2, 32], strides = [1, 1]} : vector<2x96xf32> to vector<2x32xf32>
    %110 = vector.extract_strided_slice %100 {offsets = [0, 32], sizes = [2, 32], strides = [1, 1]} : vector<2x96xf32> to vector<2x32xf32>
    %111 = arith.addf %109, %110 : vector<2x32xf32>
    %112 = arith.negf %111 : vector<2x32xf32>
    %113 = math.exp %112 : vector<2x32xf32>
    %cst_30 = arith.constant 1.000000e+00 : f32
    %114 = vector.broadcast %cst_30 : f32 to vector<2x32xf32>
    %115 = arith.addf %114, %113 : vector<2x32xf32>
    %116 = arith.divf %114, %115 : vector<2x32xf32>
    %117 = vector.extract_strided_slice %92 {offsets = [0, 64], sizes = [2, 32], strides = [1, 1]} : vector<2x96xf32> to vector<2x32xf32>
    %118 = vector.extract_strided_slice %100 {offsets = [0, 64], sizes = [2, 32], strides = [1, 1]} : vector<2x96xf32> to vector<2x32xf32>
    %119 = arith.mulf %108, %118 : vector<2x32xf32>
    %120 = arith.addf %117, %119 : vector<2x32xf32>
    %121 = math.tanh %120 : vector<2x32xf32>
    %122 = arith.subf %85, %121 : vector<2x32xf32>
    %123 = arith.mulf %116, %122 : vector<2x32xf32>
    %124 = arith.addf %121, %123 : vector<2x32xf32>
    %125 = arith.subf %124, %85 : vector<2x32xf32>
    %126 = arith.mulf %96, %125 : vector<2x32xf32>
    %127 = arith.addf %85, %126 : vector<2x32xf32>
    %128 = arith.index_cast %c2_i32 : i32 to index
    %c0_31 = arith.constant 0 : index
    %c0_32 = arith.constant 0 : index
    %129 = vector.load %arg6[%128, %c0_31, %c0_32] : memref<8x2x32xf32, #tpu.memory_space<vmem>>, vector<1x2x32xf32>
    %130 = vector.shape_cast %129 : vector<1x2x32xf32> to vector<2x32xf32>
    %131 = vector.shape_cast %127 : vector<2x32xf32> to vector<1x2x32xf32>
    tpu.vector_store %arg6[%128, %c0_31, %c0_32], %131 {strides = array<i32>} : memref<8x2x32xf32, #tpu.memory_space<vmem>>, vector<1x2x32xf32>,
    %c3_i32 = arith.constant 3 : i32
    %132 = arith.index_cast %c3_i32 : i32 to index
    %c0_33 = arith.constant 0 : index
    %c0_34 = arith.constant 0 : index
    %133 = vector.load %arg1[%132, %c0_33, %c0_34] : memref<8x2x96xf32, #tpu.memory_space<vmem>>, vector<1x2x96xf32>
    %134 = vector.shape_cast %133 : vector<1x2x96xf32> to vector<2x96xf32>
    %135 = arith.index_cast %c3_i32 : i32 to index
    %c0_35 = arith.constant 0 : index
    %c0_36 = arith.constant 0 : index
    %136 = vector.load %arg2[%135, %c0_35, %c0_36] : memref<8x2x32xbf16, #tpu.memory_space<vmem>>, vector<1x2x32xbf16>
    %137 = vector.shape_cast %136 : vector<1x2x32xbf16> to vector<2x32xbf16>
    %138 = arith.extf %137 : vector<2x32xbf16> to vector<2x32xf32>
    %139 = arith.truncf %127 : vector<2x32xf32> to vector<2x32xbf16>
    %cst_37 = arith.constant dense<0.000000e+00> : vector<2x96xf32>
    %140 = tpu.matmul %139, %3, %cst_37 {dimension_numbers = #tpu.dot_dimension_numbers<[1], [0], [0], [1], [0, 0, 1, 1], [], []>} : vector<2x32xbf16>, vector<32x96xbf16>, vector<2x96xf32> -> vector<2x96xf32>
    %141 = vector.broadcast %4 : vector<1x96xf32> to vector<2x96xf32>
    %142 = arith.addf %140, %141 : vector<2x96xf32>
    %143 = vector.extract_strided_slice %134 {offsets = [0, 0], sizes = [2, 32], strides = [1, 1]} : vector<2x96xf32> to vector<2x32xf32>
    %144 = vector.extract_strided_slice %142 {offsets = [0, 0], sizes = [2, 32], strides = [1, 1]} : vector<2x96xf32> to vector<2x32xf32>
    %145 = arith.addf %143, %144 : vector<2x32xf32>
    %146 = arith.negf %145 : vector<2x32xf32>
    %147 = math.exp %146 : vector<2x32xf32>
    %cst_38 = arith.constant 1.000000e+00 : f32
    %148 = vector.broadcast %cst_38 : f32 to vector<2x32xf32>
    %149 = arith.addf %148, %147 : vector<2x32xf32>
    %150 = arith.divf %148, %149 : vector<2x32xf32>
    %151 = vector.extract_strided_slice %134 {offsets = [0, 32], sizes = [2, 32], strides = [1, 1]} : vector<2x96xf32> to vector<2x32xf32>
    %152 = vector.extract_strided_slice %142 {offsets = [0, 32], sizes = [2, 32], strides = [1, 1]} : vector<2x96xf32> to vector<2x32xf32>
    %153 = arith.addf %151, %152 : vector<2x32xf32>
    %154 = arith.negf %153 : vector<2x32xf32>
    %155 = math.exp %154 : vector<2x32xf32>
    %cst_39 = arith.constant 1.000000e+00 : f32
    %156 = vector.broadcast %cst_39 : f32 to vector<2x32xf32>
    %157 = arith.addf %156, %155 : vector<2x32xf32>
    %158 = arith.divf %156, %157 : vector<2x32xf32>
    %159 = vector.extract_strided_slice %134 {offsets = [0, 64], sizes = [2, 32], strides = [1, 1]} : vector<2x96xf32> to vector<2x32xf32>
    %160 = vector.extract_strided_slice %142 {offsets = [0, 64], sizes = [2, 32], strides = [1, 1]} : vector<2x96xf32> to vector<2x32xf32>
    %161 = arith.mulf %150, %160 : vector<2x32xf32>
    %162 = arith.addf %159, %161 : vector<2x32xf32>
    %163 = math.tanh %162 : vector<2x32xf32>
    %164 = arith.subf %127, %163 : vector<2x32xf32>
    %165 = arith.mulf %158, %164 : vector<2x32xf32>
    %166 = arith.addf %163, %165 : vector<2x32xf32>
    %167 = arith.subf %166, %127 : vector<2x32xf32>
    %168 = arith.mulf %138, %167 : vector<2x32xf32>
    %169 = arith.addf %127, %168 : vector<2x32xf32>
    %170 = arith.index_cast %c3_i32 : i32 to index
    %c0_40 = arith.constant 0 : index
    %c0_41 = arith.constant 0 : index
    %171 = vector.load %arg6[%170, %c0_40, %c0_41] : memref<8x2x32xf32, #tpu.memory_space<vmem>>, vector<1x2x32xf32>
    %172 = vector.shape_cast %171 : vector<1x2x32xf32> to vector<2x32xf32>
    %173 = vector.shape_cast %169 : vector<2x32xf32> to vector<1x2x32xf32>
    tpu.vector_store %arg6[%170, %c0_40, %c0_41], %173 {strides = array<i32>} : memref<8x2x32xf32, #tpu.memory_space<vmem>>, vector<1x2x32xf32>,
    %c4_i32 = arith.constant 4 : i32
    %174 = arith.index_cast %c4_i32 : i32 to index
    %c0_42 = arith.constant 0 : index
    %c0_43 = arith.constant 0 : index
    %175 = vector.load %arg1[%174, %c0_42, %c0_43] : memref<8x2x96xf32, #tpu.memory_space<vmem>>, vector<1x2x96xf32>
    %176 = vector.shape_cast %175 : vector<1x2x96xf32> to vector<2x96xf32>
    %177 = arith.index_cast %c4_i32 : i32 to index
    %c0_44 = arith.constant 0 : index
    %c0_45 = arith.constant 0 : index
    %178 = vector.load %arg2[%177, %c0_44, %c0_45] : memref<8x2x32xbf16, #tpu.memory_space<vmem>>, vector<1x2x32xbf16>
    %179 = vector.shape_cast %178 : vector<1x2x32xbf16> to vector<2x32xbf16>
    %180 = arith.extf %179 : vector<2x32xbf16> to vector<2x32xf32>
    %181 = arith.truncf %169 : vector<2x32xf32> to vector<2x32xbf16>
    %cst_46 = arith.constant dense<0.000000e+00> : vector<2x96xf32>
    %182 = tpu.matmul %181, %3, %cst_46 {dimension_numbers = #tpu.dot_dimension_numbers<[1], [0], [0], [1], [0, 0, 1, 1], [], []>} : vector<2x32xbf16>, vector<32x96xbf16>, vector<2x96xf32> -> vector<2x96xf32>
    %183 = vector.broadcast %4 : vector<1x96xf32> to vector<2x96xf32>
    %184 = arith.addf %182, %183 : vector<2x96xf32>
    %185 = vector.extract_strided_slice %176 {offsets = [0, 0], sizes = [2, 32], strides = [1, 1]} : vector<2x96xf32> to vector<2x32xf32>
    %186 = vector.extract_strided_slice %184 {offsets = [0, 0], sizes = [2, 32], strides = [1, 1]} : vector<2x96xf32> to vector<2x32xf32>
    %187 = arith.addf %185, %186 : vector<2x32xf32>
    %188 = arith.negf %187 : vector<2x32xf32>
    %189 = math.exp %188 : vector<2x32xf32>
    %cst_47 = arith.constant 1.000000e+00 : f32
    %190 = vector.broadcast %cst_47 : f32 to vector<2x32xf32>
    %191 = arith.addf %190, %189 : vector<2x32xf32>
    %192 = arith.divf %190, %191 : vector<2x32xf32>
    %193 = vector.extract_strided_slice %176 {offsets = [0, 32], sizes = [2, 32], strides = [1, 1]} : vector<2x96xf32> to vector<2x32xf32>
    %194 = vector.extract_strided_slice %184 {offsets = [0, 32], sizes = [2, 32], strides = [1, 1]} : vector<2x96xf32> to vector<2x32xf32>
    %195 = arith.addf %193, %194 : vector<2x32xf32>
    %196 = arith.negf %195 : vector<2x32xf32>
    %197 = math.exp %196 : vector<2x32xf32>
    %cst_48 = arith.constant 1.000000e+00 : f32
    %198 = vector.broadcast %cst_48 : f32 to vector<2x32xf32>
    %199 = arith.addf %198, %197 : vector<2x32xf32>
    %200 = arith.divf %198, %199 : vector<2x32xf32>
    %201 = vector.extract_strided_slice %176 {offsets = [0, 64], sizes = [2, 32], strides = [1, 1]} : vector<2x96xf32> to vector<2x32xf32>
    %202 = vector.extract_strided_slice %184 {offsets = [0, 64], sizes = [2, 32], strides = [1, 1]} : vector<2x96xf32> to vector<2x32xf32>
    %203 = arith.mulf %192, %202 : vector<2x32xf32>
    %204 = arith.addf %201, %203 : vector<2x32xf32>
    %205 = math.tanh %204 : vector<2x32xf32>
    %206 = arith.subf %169, %205 : vector<2x32xf32>
    %207 = arith.mulf %200, %206 : vector<2x32xf32>
    %208 = arith.addf %205, %207 : vector<2x32xf32>
    %209 = arith.subf %208, %169 : vector<2x32xf32>
    %210 = arith.mulf %180, %209 : vector<2x32xf32>
    %211 = arith.addf %169, %210 : vector<2x32xf32>
    %212 = arith.index_cast %c4_i32 : i32 to index
    %c0_49 = arith.constant 0 : index
    %c0_50 = arith.constant 0 : index
    %213 = vector.load %arg6[%212, %c0_49, %c0_50] : memref<8x2x32xf32, #tpu.memory_space<vmem>>, vector<1x2x32xf32>
    %214 = vector.shape_cast %213 : vector<1x2x32xf32> to vector<2x32xf32>
    %215 = vector.shape_cast %211 : vector<2x32xf32> to vector<1x2x32xf32>
    tpu.vector_store %arg6[%212, %c0_49, %c0_50], %215 {strides = array<i32>} : memref<8x2x32xf32, #tpu.memory_space<vmem>>, vector<1x2x32xf32>,
    %c5_i32 = arith.constant 5 : i32
    %216 = arith.index_cast %c5_i32 : i32 to index
    %c0_51 = arith.constant 0 : index
    %c0_52 = arith.constant 0 : index
    %217 = vector.load %arg1[%216, %c0_51, %c0_52] : memref<8x2x96xf32, #tpu.memory_space<vmem>>, vector<1x2x96xf32>
    %218 = vector.shape_cast %217 : vector<1x2x96xf32> to vector<2x96xf32>
    %219 = arith.index_cast %c5_i32 : i32 to index
    %c0_53 = arith.constant 0 : index
    %c0_54 = arith.constant 0 : index
    %220 = vector.load %arg2[%219, %c0_53, %c0_54] : memref<8x2x32xbf16, #tpu.memory_space<vmem>>, vector<1x2x32xbf16>
    %221 = vector.shape_cast %220 : vector<1x2x32xbf16> to vector<2x32xbf16>
    %222 = arith.extf %221 : vector<2x32xbf16> to vector<2x32xf32>
    %223 = arith.truncf %211 : vector<2x32xf32> to vector<2x32xbf16>
    %cst_55 = arith.constant dense<0.000000e+00> : vector<2x96xf32>
    %224 = tpu.matmul %223, %3, %cst_55 {dimension_numbers = #tpu.dot_dimension_numbers<[1], [0], [0], [1], [0, 0, 1, 1], [], []>} : vector<2x32xbf16>, vector<32x96xbf16>, vector<2x96xf32> -> vector<2x96xf32>
    %225 = vector.broadcast %4 : vector<1x96xf32> to vector<2x96xf32>
    %226 = arith.addf %224, %225 : vector<2x96xf32>
    %227 = vector.extract_strided_slice %218 {offsets = [0, 0], sizes = [2, 32], strides = [1, 1]} : vector<2x96xf32> to vector<2x32xf32>
    %228 = vector.extract_strided_slice %226 {offsets = [0, 0], sizes = [2, 32], strides = [1, 1]} : vector<2x96xf32> to vector<2x32xf32>
    %229 = arith.addf %227, %228 : vector<2x32xf32>
    %230 = arith.negf %229 : vector<2x32xf32>
    %231 = math.exp %230 : vector<2x32xf32>
    %cst_56 = arith.constant 1.000000e+00 : f32
    %232 = vector.broadcast %cst_56 : f32 to vector<2x32xf32>
    %233 = arith.addf %232, %231 : vector<2x32xf32>
    %234 = arith.divf %232, %233 : vector<2x32xf32>
    %235 = vector.extract_strided_slice %218 {offsets = [0, 32], sizes = [2, 32], strides = [1, 1]} : vector<2x96xf32> to vector<2x32xf32>
    %236 = vector.extract_strided_slice %226 {offsets = [0, 32], sizes = [2, 32], strides = [1, 1]} : vector<2x96xf32> to vector<2x32xf32>
    %237 = arith.addf %235, %236 : vector<2x32xf32>
    %238 = arith.negf %237 : vector<2x32xf32>
    %239 = math.exp %238 : vector<2x32xf32>
    %cst_57 = arith.constant 1.000000e+00 : f32
    %240 = vector.broadcast %cst_57 : f32 to vector<2x32xf32>
    %241 = arith.addf %240, %239 : vector<2x32xf32>
    %242 = arith.divf %240, %241 : vector<2x32xf32>
    %243 = vector.extract_strided_slice %218 {offsets = [0, 64], sizes = [2, 32], strides = [1, 1]} : vector<2x96xf32> to vector<2x32xf32>
    %244 = vector.extract_strided_slice %226 {offsets = [0, 64], sizes = [2, 32], strides = [1, 1]} : vector<2x96xf32> to vector<2x32xf32>
    %245 = arith.mulf %234, %244 : vector<2x32xf32>
    %246 = arith.addf %243, %245 : vector<2x32xf32>
    %247 = math.tanh %246 : vector<2x32xf32>
    %248 = arith.subf %211, %247 : vector<2x32xf32>
    %249 = arith.mulf %242, %248 : vector<2x32xf32>
    %250 = arith.addf %247, %249 : vector<2x32xf32>
    %251 = arith.subf %250, %211 : vector<2x32xf32>
    %252 = arith.mulf %222, %251 : vector<2x32xf32>
    %253 = arith.addf %211, %252 : vector<2x32xf32>
    %254 = arith.index_cast %c5_i32 : i32 to index
    %c0_58 = arith.constant 0 : index
    %c0_59 = arith.constant 0 : index
    %255 = vector.load %arg6[%254, %c0_58, %c0_59] : memref<8x2x32xf32, #tpu.memory_space<vmem>>, vector<1x2x32xf32>
    %256 = vector.shape_cast %255 : vector<1x2x32xf32> to vector<2x32xf32>
    %257 = vector.shape_cast %253 : vector<2x32xf32> to vector<1x2x32xf32>
    tpu.vector_store %arg6[%254, %c0_58, %c0_59], %257 {strides = array<i32>} : memref<8x2x32xf32, #tpu.memory_space<vmem>>, vector<1x2x32xf32>,
    %c6_i32 = arith.constant 6 : i32
    %258 = arith.index_cast %c6_i32 : i32 to index
    %c0_60 = arith.constant 0 : index
    %c0_61 = arith.constant 0 : index
    %259 = vector.load %arg1[%258, %c0_60, %c0_61] : memref<8x2x96xf32, #tpu.memory_space<vmem>>, vector<1x2x96xf32>
    %260 = vector.shape_cast %259 : vector<1x2x96xf32> to vector<2x96xf32>
    %261 = arith.index_cast %c6_i32 : i32 to index
    %c0_62 = arith.constant 0 : index
    %c0_63 = arith.constant 0 : index
    %262 = vector.load %arg2[%261, %c0_62, %c0_63] : memref<8x2x32xbf16, #tpu.memory_space<vmem>>, vector<1x2x32xbf16>
    %263 = vector.shape_cast %262 : vector<1x2x32xbf16> to vector<2x32xbf16>
    %264 = arith.extf %263 : vector<2x32xbf16> to vector<2x32xf32>
    %265 = arith.truncf %253 : vector<2x32xf32> to vector<2x32xbf16>
    %cst_64 = arith.constant dense<0.000000e+00> : vector<2x96xf32>
    %266 = tpu.matmul %265, %3, %cst_64 {dimension_numbers = #tpu.dot_dimension_numbers<[1], [0], [0], [1], [0, 0, 1, 1], [], []>} : vector<2x32xbf16>, vector<32x96xbf16>, vector<2x96xf32> -> vector<2x96xf32>
    %267 = vector.broadcast %4 : vector<1x96xf32> to vector<2x96xf32>
    %268 = arith.addf %266, %267 : vector<2x96xf32>
    %269 = vector.extract_strided_slice %260 {offsets = [0, 0], sizes = [2, 32], strides = [1, 1]} : vector<2x96xf32> to vector<2x32xf32>
    %270 = vector.extract_strided_slice %268 {offsets = [0, 0], sizes = [2, 32], strides = [1, 1]} : vector<2x96xf32> to vector<2x32xf32>
    %271 = arith.addf %269, %270 : vector<2x32xf32>
    %272 = arith.negf %271 : vector<2x32xf32>
    %273 = math.exp %272 : vector<2x32xf32>
    %cst_65 = arith.constant 1.000000e+00 : f32
    %274 = vector.broadcast %cst_65 : f32 to vector<2x32xf32>
    %275 = arith.addf %274, %273 : vector<2x32xf32>
    %276 = arith.divf %274, %275 : vector<2x32xf32>
    %277 = vector.extract_strided_slice %260 {offsets = [0, 32], sizes = [2, 32], strides = [1, 1]} : vector<2x96xf32> to vector<2x32xf32>
    %278 = vector.extract_strided_slice %268 {offsets = [0, 32], sizes = [2, 32], strides = [1, 1]} : vector<2x96xf32> to vector<2x32xf32>
    %279 = arith.addf %277, %278 : vector<2x32xf32>
    %280 = arith.negf %279 : vector<2x32xf32>
    %281 = math.exp %280 : vector<2x32xf32>
    %cst_66 = arith.constant 1.000000e+00 : f32
    %282 = vector.broadcast %cst_66 : f32 to vector<2x32xf32>
    %283 = arith.addf %282, %281 : vector<2x32xf32>
    %284 = arith.divf %282, %283 : vector<2x32xf32>
    %285 = vector.extract_strided_slice %260 {offsets = [0, 64], sizes = [2, 32], strides = [1, 1]} : vector<2x96xf32> to vector<2x32xf32>
    %286 = vector.extract_strided_slice %268 {offsets = [0, 64], sizes = [2, 32], strides = [1, 1]} : vector<2x96xf32> to vector<2x32xf32>
    %287 = arith.mulf %276, %286 : vector<2x32xf32>
    %288 = arith.addf %285, %287 : vector<2x32xf32>
    %289 = math.tanh %288 : vector<2x32xf32>
    %290 = arith.subf %253, %289 : vector<2x32xf32>
    %291 = arith.mulf %284, %290 : vector<2x32xf32>
    %292 = arith.addf %289, %291 : vector<2x32xf32>
    %293 = arith.subf %292, %253 : vector<2x32xf32>
    %294 = arith.mulf %264, %293 : vector<2x32xf32>
    %295 = arith.addf %253, %294 : vector<2x32xf32>
    %296 = arith.index_cast %c6_i32 : i32 to index
    %c0_67 = arith.constant 0 : index
    %c0_68 = arith.constant 0 : index
    %297 = vector.load %arg6[%296, %c0_67, %c0_68] : memref<8x2x32xf32, #tpu.memory_space<vmem>>, vector<1x2x32xf32>
    %298 = vector.shape_cast %297 : vector<1x2x32xf32> to vector<2x32xf32>
    %299 = vector.shape_cast %295 : vector<2x32xf32> to vector<1x2x32xf32>
    tpu.vector_store %arg6[%296, %c0_67, %c0_68], %299 {strides = array<i32>} : memref<8x2x32xf32, #tpu.memory_space<vmem>>, vector<1x2x32xf32>,
    %c7_i32 = arith.constant 7 : i32
    %300 = arith.index_cast %c7_i32 : i32 to index
    %c0_69 = arith.constant 0 : index
    %c0_70 = arith.constant 0 : index
    %301 = vector.load %arg1[%300, %c0_69, %c0_70] : memref<8x2x96xf32, #tpu.memory_space<vmem>>, vector<1x2x96xf32>
    %302 = vector.shape_cast %301 : vector<1x2x96xf32> to vector<2x96xf32>
    %303 = arith.index_cast %c7_i32 : i32 to index
    %c0_71 = arith.constant 0 : index
    %c0_72 = arith.constant 0 : index
    %304 = vector.load %arg2[%303, %c0_71, %c0_72] : memref<8x2x32xbf16, #tpu.memory_space<vmem>>, vector<1x2x32xbf16>
    %305 = vector.shape_cast %304 : vector<1x2x32xbf16> to vector<2x32xbf16>
    %306 = arith.extf %305 : vector<2x32xbf16> to vector<2x32xf32>
    %307 = arith.truncf %295 : vector<2x32xf32> to vector<2x32xbf16>
    %cst_73 = arith.constant dense<0.000000e+00> : vector<2x96xf32>
    %308 = tpu.matmul %307, %3, %cst_73 {dimension_numbers = #tpu.dot_dimension_numbers<[1], [0], [0], [1], [0, 0, 1, 1], [], []>} : vector<2x32xbf16>, vector<32x96xbf16>, vector<2x96xf32> -> vector<2x96xf32>
    %309 = vector.broadcast %4 : vector<1x96xf32> to vector<2x96xf32>
    %310 = arith.addf %308, %309 : vector<2x96xf32>
    %311 = vector.extract_strided_slice %302 {offsets = [0, 0], sizes = [2, 32], strides = [1, 1]} : vector<2x96xf32> to vector<2x32xf32>
    %312 = vector.extract_strided_slice %310 {offsets = [0, 0], sizes = [2, 32], strides = [1, 1]} : vector<2x96xf32> to vector<2x32xf32>
    %313 = arith.addf %311, %312 : vector<2x32xf32>
    %314 = arith.negf %313 : vector<2x32xf32>
    %315 = math.exp %314 : vector<2x32xf32>
    %cst_74 = arith.constant 1.000000e+00 : f32
    %316 = vector.broadcast %cst_74 : f32 to vector<2x32xf32>
    %317 = arith.addf %316, %315 : vector<2x32xf32>
    %318 = arith.divf %316, %317 : vector<2x32xf32>
    %319 = vector.extract_strided_slice %302 {offsets = [0, 32], sizes = [2, 32], strides = [1, 1]} : vector<2x96xf32> to vector<2x32xf32>
    %320 = vector.extract_strided_slice %310 {offsets = [0, 32], sizes = [2, 32], strides = [1, 1]} : vector<2x96xf32> to vector<2x32xf32>
    %321 = arith.addf %319, %320 : vector<2x32xf32>
    %322 = arith.negf %321 : vector<2x32xf32>
    %323 = math.exp %322 : vector<2x32xf32>
    %cst_75 = arith.constant 1.000000e+00 : f32
    %324 = vector.broadcast %cst_75 : f32 to vector<2x32xf32>
    %325 = arith.addf %324, %323 : vector<2x32xf32>
    %326 = arith.divf %324, %325 : vector<2x32xf32>
    %327 = vector.extract_strided_slice %302 {offsets = [0, 64], sizes = [2, 32], strides = [1, 1]} : vector<2x96xf32> to vector<2x32xf32>
    %328 = vector.extract_strided_slice %310 {offsets = [0, 64], sizes = [2, 32], strides = [1, 1]} : vector<2x96xf32> to vector<2x32xf32>
    %329 = arith.mulf %318, %328 : vector<2x32xf32>
    %330 = arith.addf %327, %329 : vector<2x32xf32>
    %331 = math.tanh %330 : vector<2x32xf32>
    %332 = arith.subf %295, %331 : vector<2x32xf32>
    %333 = arith.mulf %326, %332 : vector<2x32xf32>
    %334 = arith.addf %331, %333 : vector<2x32xf32>
    %335 = arith.subf %334, %295 : vector<2x32xf32>
    %336 = arith.mulf %306, %335 : vector<2x32xf32>
    %337 = arith.addf %295, %336 : vector<2x32xf32>
    %338 = arith.index_cast %c7_i32 : i32 to index
    %c0_76 = arith.constant 0 : index
    %c0_77 = arith.constant 0 : index
    %339 = vector.load %arg6[%338, %c0_76, %c0_77] : memref<8x2x32xf32, #tpu.memory_space<vmem>>, vector<1x2x32xf32>
    %340 = vector.shape_cast %339 : vector<1x2x32xf32> to vector<2x32xf32>
    %341 = vector.shape_cast %337 : vector<2x32xf32> to vector<1x2x32xf32>
    tpu.vector_store %arg6[%338, %c0_76, %c0_77], %341 {strides = array<i32>} : memref<8x2x32xf32, #tpu.memory_space<vmem>>, vector<1x2x32xf32>,
    %c8_i32 = arith.constant 8 : i32
    %c0_78 = arith.constant 0 : index
    %c0_79 = arith.constant 0 : index
    %342 = vector.load %arg8[%c0_78, %c0_79] : memref<2x32xf32, #tpu.memory_space<vmem>>, vector<2x32xf32>
    tpu.vector_store %arg8[%c0_78, %c0_79], %337 {strides = array<i32>} : memref<2x32xf32, #tpu.memory_space<vmem>>, vector<2x32xf32>,
    %c0_i32_80 = arith.constant 0 : i32
    %343 = arith.cmpi eq, %arg0, %c0_i32_80 : i32
    %344 = arith.extui %343 : i1 to i32
    %c0_i32_81 = arith.constant 0 : i32
    %345 = arith.cmpi ne, %344, %c0_i32_81 : i32
    scf.if %345 {
      %c0_82 = arith.constant 0 : index
      %c0_83 = arith.constant 0 : index
      %346 = vector.load %arg7[%c0_82, %c0_83] : memref<2x32xf32, #tpu.memory_space<vmem>>, vector<2x32xf32>
      tpu.vector_store %arg7[%c0_82, %c0_83], %337 {strides = array<i32>} : memref<2x32xf32, #tpu.memory_space<vmem>>, vector<2x32xf32>,
    } else {
    }
    return
  }
  func.func @transform_0(%arg0: i32) -> (i32, i32, i32) {
    %c0_i32 = arith.constant 0 : i32
    %c0_i32_0 = arith.constant 0 : i32
    %c0_i32_1 = arith.constant 0 : i32
    return %arg0, %c0_i32, %c0_i32_0 : i32, i32, i32
  }
  func.func @transform_1(%arg0: i32) -> (i32, i32, i32) {
    %c0_i32 = arith.constant 0 : i32
    %c0_i32_0 = arith.constant 0 : i32
    %c0_i32_1 = arith.constant 0 : i32
    return %arg0, %c0_i32, %c0_i32_0 : i32, i32, i32
  }
  func.func @transform_2(%arg0: i32) -> (i32, i32) {
    %c0_i32 = arith.constant 0 : i32
    %c0_i32_0 = arith.constant 0 : i32
    %c0_i32_1 = arith.constant 0 : i32
    return %c0_i32, %c0_i32_0 : i32, i32
  }
  func.func @transform_3(%arg0: i32) -> (i32, i32) {
    %c0_i32 = arith.constant 0 : i32
    %c0_i32_0 = arith.constant 0 : i32
    %c0_i32_1 = arith.constant 0 : i32
    return %c0_i32, %c0_i32_0 : i32, i32
  }
  func.func @transform_4(%arg0: i32) -> (i32, i32) {
    %c0_i32 = arith.constant 0 : i32
    %c0_i32_0 = arith.constant 0 : i32
    %c0_i32_1 = arith.constant 0 : i32
    return %c0_i32, %c0_i32_0 : i32, i32
  }
  func.func @transform_5(%arg0: i32) -> (i32, i32, i32) {
    %c0_i32 = arith.constant 0 : i32
    %c0_i32_0 = arith.constant 0 : i32
    %c0_i32_1 = arith.constant 0 : i32
    return %arg0, %c0_i32, %c0_i32_0 : i32, i32, i32
  }
  func.func @transform_6(%arg0: i32) -> (i32, i32) {
    %c0_i32 = arith.constant 0 : i32
    %c0_i32_0 = arith.constant 0 : i32
    %c0_i32_1 = arith.constant 0 : i32
    return %c0_i32, %c0_i32_0 : i32, i32
  }
}

</mosaic_0001>

<llo_original>
// kernel: ep_gru_forward.6
$region0: #{ep_gru_forward.6}
  #allocation0 [shape = 'u32[]', space=smem, size = 0x4, offset = 0x4, fixed_abs, tag = 'smem constant byte address 0x4 - core index']
  #allocation1 [shape = 'u32[144,128]{1,0:T(1,128)}', space=vmem, size = 0x12000, scoped, tag = 'internal scratch']
  %s0 = inlined_call_operand.vmem [shape: f32[16,32], index: 0, kind: input, shape index: {}]
  %s1 = inlined_call_operand.vmem [shape: bf16[32,96], index: 1, kind: input, shape index: {}]
  %s2 = inlined_call_operand.vmem [shape: f32[1,96], index: 2, kind: input, shape index: {}]
  %s3 = inlined_call_operand.vmem [shape: f32[16,96], index: 3, kind: output, shape index: {}]
  %s4 = sld [smem:[#allocation0]]
  $region22: #{ep_gru_forward.6} parent=0
    _
  %s6 = ssub.s32 1, %s4
  %s7 = scalar_select 0, %s6, %s4
  // Predicated region
  $region2: #{ep_gru_forward.6} parent=0 // pred_check
    _
  $region3: #{ep_gru_forward.6} parent=0 // pred_check_branch
    %9 = sbr.rel (0) target = $region5
  $region4: #{ep_gru_forward.6} parent=0 // pred_region
    _
  $region5: #{ep_gru_forward.6} parent=0 // pred_fallthru
    _
  // Predicated region
  $region6: #{ep_gru_forward.6} parent=0 // pred_check
    _
  $region7: #{ep_gru_forward.6} parent=0 // pred_check_branch
    %11 = sbr.rel (0) target = $region9
  $region8: #{ep_gru_forward.6} parent=0 // pred_region
    _
  $region9: #{ep_gru_forward.6} parent=0 // pred_fallthru
    _
  // Predicated region
  $region10: #{ep_gru_forward.6} parent=0 // pred_check
    _
  $region11: #{ep_gru_forward.6} parent=0 // pred_check_branch
    %13 = sbr.rel (0) target = $region13
  $region12: #{ep_gru_forward.6} parent=0 // pred_region
    _
  $region13: #{ep_gru_forward.6} parent=0 // pred_fallthru
    _
  %v15 = vld [vmem:[%s0] sm:$0xff]
  %v16 = vld [vmem:[%s0 + $0x8] sm:$0xff]
  %v17 = vpack.c.bf16 %v16, %v15
  %v18 = vld [vmem:[%s1] sm:$0xf]
  %v19 = vld [vmem:[%s1 + $0x4] sm:$0xf]
  %v20 = vld [vmem:[%s1 + $0x8] sm:$0xf]
  %v21 = vld [vmem:[%s1 + $0xc] sm:$0xf]
  %v22 = vld [vmem:[%s2] sm:$0x1]
  %v24 = vlaneseq
  %v25 = vshrl.u32 %v24, 7
  %v26 = vsub.s32 0, %v25
  %v27 = vrot.slane %v22, %v26
  %v33 = vunpack.c.l.b16 %v18
  %v34 = vunpack.c.l.b16 %v19
  %v35 = vunpack.c.l.b16 %v20
  %v36 = vunpack.c.l.b16 %v21
  %v37 = vpack.c.b16 %v34, %v33
  %v38 = vpack.c.b16 %v36, %v35
  %vm41 = vcmask 261120
  %v43 = vsel %vm41, %v17, 0
  %45 = vmatprep.subr.bf16.mxu0 0
  %46 = vmatpush1.bf16.msra.mxu0 %v37
  %47 = vmatprep.subr.bf16.mxu0 0
  %48 = vmatpush1.bf16.msra.mxu0 %v38
  %49 = vmatprep.subr.bf16.mxu0 0
  %50 = vmatpush1.bf16.msra.mxu0 0
  %51 = vmatprep.subr.bf16.mxu0 0
  %52 = vmatpush1.bf16.msra.mxu0 0
  %53 = vmatprep.subr.bf16.mxu0 0
  %54 = vmatpush1.bf16.msra.mxu0 0
  %55 = vmatprep.subr.bf16.mxu0 0
  %56 = vmatpush1.bf16.msra.mxu0 0
  %57 = vmatprep.subr.bf16.mxu0 0
  %58 = vmatpush1.bf16.msra.mxu0 0
  %59 = vmatprep.subr.bf16.mxu0 0
  %60 = vmatpush1.bf16.msra.mxu0 0
  %61 = vmatprep.subr.bf16.mxu0 0
  %62 = vmatpush1.bf16.msra.mxu0 0
  %63 = vmatprep.subr.bf16.mxu0 0
  %64 = vmatpush1.bf16.msra.mxu0 0
  %65 = vmatprep.subr.bf16.mxu0 0
  %66 = vmatpush1.bf16.msra.mxu0 0
  %67 = vmatprep.subr.bf16.mxu0 0
  %68 = vmatpush1.bf16.msra.mxu0 0
  %69 = vmatprep.subr.bf16.mxu0 0
  %70 = vmatpush1.bf16.msra.mxu0 0
  %71 = vmatprep.subr.bf16.mxu0 0
  %72 = vmatpush1.bf16.msra.mxu0 0
  %73 = vmatprep.subr.bf16.mxu0 0
  %74 = vmatpush1.bf16.msra.mxu0 0
  %75 = vmatprep.subr.bf16.mxu0 0
  %76 = vmatpush1.bf16.msra.mxu0 0
  %77 = vmatprep.mubr.bf16.mxu0 0
  %78 = vmatmul.mubr.bf16.gmra.mrb[0].mxu0 %v43
  %v79 = vpop.f32.mrb[0].mxu0
  %v80 = vadd.f32 %v27, %v79
  %v81 = vpop.f32.mrb[0].mxu0
  %v82 = vpop.f32.mrb[0].mxu0
  %v83 = vadd.f32 %v27, %v82
  %v84 = vpop.f32.mrb[0].mxu0
  %85 = vdwg.mxu0
  %vm86 = vcmask 785408
  %87 = vst.msk [vmem:[%s3] sm:$0xff] %vm86, %v80
  %88 = vst.msk [vmem:[%s3 + $0x8] sm:$0xff] %vm86, %v83
  // Predicated region
  $region14: #{ep_gru_forward.6} parent=0 // pred_check
    _
  $region15: #{ep_gru_forward.6} parent=0 // pred_check_branch
    %90 = sbr.rel (0) target = $region17
  $region16: #{ep_gru_forward.6} parent=0 // pred_region
    _
  $region17: #{ep_gru_forward.6} parent=0 // pred_fallthru
    _
  // Predicated region
  $region18: #{ep_gru_forward.6} parent=0 // pred_check
    _
  $region19: #{ep_gru_forward.6} parent=0 // pred_check_branch
    %92 = sbr.rel (0) target = $region21
  $region20: #{ep_gru_forward.6} parent=0 // pred_region
    _
  $region21: #{ep_gru_forward.6} parent=0 // pred_fallthru
    _

// kernel: ep_gru_forward.4
$region0: #{ep_gru_forward.4}
  #allocation0 [shape = 'u32[]', space=smem, size = 0x4, offset = 0x4, fixed_abs, tag = 'smem constant byte address 0x4 - core index']
  #allocation1 [shape = 'u32[144,128]{1,0:T(1,128)}', space=vmem, size = 0x12000, scoped, tag = 'internal scratch']
  %s0 = inlined_call_operand.vmem [shape: f32[16,4], index: 0, kind: input, shape index: {}]
  %s1 = inlined_call_operand.vmem [shape: bf16[4,96], index: 1, kind: input, shape index: {}]
  %s2 = inlined_call_operand.vmem [shape: f32[1,96], index: 2, kind: input, shape index: {}]
  %s3 = inlined_call_operand.vmem [shape: f32[16,96], index: 3, kind: output, shape index: {}]
  %s4 = sld [smem:[#allocation0]]
  $region22: #{ep_gru_forward.4} parent=0
    _
  %s6 = ssub.s32 1, %s4
  %s7 = scalar_select 0, %s6, %s4
  // Predicated region
  $region2: #{ep_gru_forward.4} parent=0 // pred_check
    _
  $region3: #{ep_gru_forward.4} parent=0 // pred_check_branch
    %9 = sbr.rel (0) target = $region5
  $region4: #{ep_gru_forward.4} parent=0 // pred_region
    _
  $region5: #{ep_gru_forward.4} parent=0 // pred_fallthru
    _
  // Predicated region
  $region6: #{ep_gru_forward.4} parent=0 // pred_check
    _
  $region7: #{ep_gru_forward.4} parent=0 // pred_check_branch
    %11 = sbr.rel (0) target = $region9
  $region8: #{ep_gru_forward.4} parent=0 // pred_region
    _
  $region9: #{ep_gru_forward.4} parent=0 // pred_fallthru
    _
  // Predicated region
  $region10: #{ep_gru_forward.4} parent=0 // pred_check
    _
  $region11: #{ep_gru_forward.4} parent=0 // pred_check_branch
    %13 = sbr.rel (0) target = $region13
  $region12: #{ep_gru_forward.4} parent=0 // pred_region
    _
  $region13: #{ep_gru_forward.4} parent=0 // pred_fallthru
    _
  %v15 = vld [vmem:[%s0] sm:$0xff]
  %v16 = vld [vmem:[%s0 + $0x8] sm:$0xff]
  %v17 = vpack.c.bf16 %v16, %v15
  %v18 = vld [vmem:[%s1] sm:$0x3]
  %v19 = vld [vmem:[%s2] sm:$0x1]
  %v21 = vlaneseq
  %v22 = vshrl.u32 %v21, 7
  %v23 = vsub.s32 0, %v22
  %v24 = vrot.slane %v19, %v23
  %vm26 = vcmask 31744
  %v28 = vsel %vm26, %v17, 0
  %vm30 = vcmask 1041408
  %v32 = vsel %vm30, %v18, 0
  %34 = vmatprep.subr.bf16.mxu0 0
  %35 = vmatpush1.bf16.msra.mxu0 %v32
  %36 = vmatprep.subr.bf16.mxu0 0
  %37 = vmatpush1.bf16.msra.mxu0 0
  %38 = vmatprep.subr.bf16.mxu0 0
  %39 = vmatpush1.bf16.msra.mxu0 0
  %40 = vmatprep.subr.bf16.mxu0 0
  %41 = vmatpush1.bf16.msra.mxu0 0
  %42 = vmatprep.subr.bf16.mxu0 0
  %43 = vmatpush1.bf16.msra.mxu0 0
  %44 = vmatprep.subr.bf16.mxu0 0
  %45 = vmatpush1.bf16.msra.mxu0 0
  %46 = vmatprep.subr.bf16.mxu0 0
  %47 = vmatpush1.bf16.msra.mxu0 0
  %48 = vmatprep.subr.bf16.mxu0 0
  %49 = vmatpush1.bf16.msra.mxu0 0
  %50 = vmatprep.subr.bf16.mxu0 0
  %51 = vmatpush1.bf16.msra.mxu0 0
  %52 = vmatprep.subr.bf16.mxu0 0
  %53 = vmatpush1.bf16.msra.mxu0 0
  %54 = vmatprep.subr.bf16.mxu0 0
  %55 = vmatpush1.bf16.msra.mxu0 0
  %56 = vmatprep.subr.bf16.mxu0 0
  %57 = vmatpush1.bf16.msra.mxu0 0
  %58 = vmatprep.subr.bf16.mxu0 0
  %59 = vmatpush1.bf16.msra.mxu0 0
  %60 = vmatprep.subr.bf16.mxu0 0
  %61 = vmatpush1.bf16.msra.mxu0 0
  %62 = vmatprep.subr.bf16.mxu0 0
  %63 = vmatpush1.bf16.msra.mxu0 0
  %64 = vmatprep.subr.bf16.mxu0 0
  %65 = vmatpush1.bf16.msra.mxu0 0
  %66 = vmatprep.mubr.bf16.mxu0 0
  %67 = vmatmul.mubr.bf16.gmra.mrb[0].mxu0 %v28
  %v68 = vpop.f32.mrb[0].mxu0
  %v69 = vadd.f32 %v24, %v68
  %v70 = vpop.f32.mrb[0].mxu0
  %v71 = vpop.f32.mrb[0].mxu0
  %v72 = vadd.f32 %v24, %v71
  %v73 = vpop.f32.mrb[0].mxu0
  %74 = vdwg.mxu0
  %vm75 = vcmask 785408
  %76 = vst.msk [vmem:[%s3] sm:$0xff] %vm75, %v69
  %77 = vst.msk [vmem:[%s3 + $0x8] sm:$0xff] %vm75, %v72
  // Predicated region
  $region14: #{ep_gru_forward.4} parent=0 // pred_check
    _
  $region15: #{ep_gru_forward.4} parent=0 // pred_check_branch
    %79 = sbr.rel (0) target = $region17
  $region16: #{ep_gru_forward.4} parent=0 // pred_region
    _
  $region17: #{ep_gru_forward.4} parent=0 // pred_fallthru
    _
  // Predicated region
  $region18: #{ep_gru_forward.4} parent=0 // pred_check
    _
  $region19: #{ep_gru_forward.4} parent=0 // pred_check_branch
    %81 = sbr.rel (0) target = $region21
  $region20: #{ep_gru_forward.4} parent=0 // pred_region
    _
  $region21: #{ep_gru_forward.4} parent=0 // pred_fallthru
    _

// kernel: ep_gru_forward.5
$region0: #{ep_gru_forward.5}
  #allocation0 [shape = 'u32[]', space=smem, size = 0x4, offset = 0x4, fixed_abs, tag = 'smem constant byte address 0x4 - core index']
  #allocation1 [shape = 'u32[144,128]{1,0:T(1,128)}', space=vmem, size = 0x12000, scoped, tag = 'internal scratch']
  #allocation2 [shape = 'f32[2,32]{1,0:T(2,128)}', space=vmem, size = 0x400, scoped, tag = 'scratch operand']
  %s0 = inlined_call_operand.vmem [shape: f32[8,2,96], index: 0, kind: input, shape index: {}]
  %s1 = inlined_call_operand.vmem [shape: bf16[8,2,32], index: 1, kind: input, shape index: {}]
  %s2 = inlined_call_operand.vmem [shape: f32[2,32], index: 2, kind: input, shape index: {}]
  %s3 = inlined_call_operand.vmem [shape: bf16[32,96], index: 3, kind: input, shape index: {}]
  %s4 = inlined_call_operand.vmem [shape: f32[1,96], index: 4, kind: input, shape index: {}]
  %s5 = inlined_call_operand.vmem [shape: f32[8,2,32], index: 5, kind: output, shape index: {0}]
  %s6 = inlined_call_operand.hbm [shape: f32[2,32], index: 6, kind: output, shape index: {1}]
  %7 = xla_tuple %s5, %s6
  %s8 = sld [smem:[#allocation0]]
  $region46: #{ep_gru_forward.5} parent=0
    _
  %s10 = ssub.s32 1, %s8
  %s11 = scalar_select 0, %s10, %s8
  $region1: #{ep_gru_forward.5} parent=0
    #allocation3 [shape = 'u8[1024]{0}', space=vmem, size = 0x400, scoped, tag = 'output window, operand 1, single buffered']
    #allocation4 [shape = 's32[1]{0}', space=sflag, size = 0x4, scoped, tag = 'scoped memory for ep_gru_forward.5']
    %12 = vsyncpa [#allocation4], 0
    // Predicated region
    $region2: #{ep_gru_forward.5} parent=1 // pred_check
      _
    $region3: #{ep_gru_forward.5} parent=1 // pred_check_branch
      %14 = sbr.rel (0) target = $region5
    $region4: #{ep_gru_forward.5} parent=1 // pred_region
      _
    $region5: #{ep_gru_forward.5} parent=1 // pred_fallthru
      _
    // Predicated region
    $region6: #{ep_gru_forward.5} parent=1 // pred_check
      _
    $region7: #{ep_gru_forward.5} parent=1 // pred_check_branch
      %16 = sbr.rel (0) target = $region9
    $region8: #{ep_gru_forward.5} parent=1 // pred_region
      _
    $region9: #{ep_gru_forward.5} parent=1 // pred_fallthru
      _
    // Predicated region
    $region10: #{ep_gru_forward.5} parent=1 // pred_check
      _
    $region11: #{ep_gru_forward.5} parent=1 // pred_check_branch
      %18 = sbr.rel (0) target = $region13
    $region12: #{ep_gru_forward.5} parent=1 // pred_region
      _
    $region13: #{ep_gru_forward.5} parent=1 // pred_fallthru
      _
    // Predicated region
    $region14: #{ep_gru_forward.5} parent=1 // pred_check
      _
    $region15: #{ep_gru_forward.5} parent=1 // pred_check_branch
      %20 = sbr.rel (0) target = $region17
    $region16: #{ep_gru_forward.5} parent=1 // pred_region
      _
    $region17: #{ep_gru_forward.5} parent=1 // pred_fallthru
      _
    // Predicated region
    $region18: #{ep_gru_forward.5} parent=1 // pred_check
      _
    $region19: #{ep_gru_forward.5} parent=1 // pred_check_branch
      %22 = sbr.rel (0) target = $region21
    $region20: #{ep_gru_forward.5} parent=1 // pred_region
      _
    $region21: #{ep_gru_forward.5} parent=1 // pred_fallthru
      _
    %p24 = scmp.eq.s32.totalorder 0, 0
    // Predicated region
    $region22: #{ep_gru_forward.5} parent=1 // pred_check
      %p25 = pneg %p24
    $region23: #{ep_gru_forward.5} parent=1 // pred_check_branch
      %27 = sbr.rel (%p25) target = $region25
    $region24: #{ep_gru_forward.5} parent=1 // pred_region
      %v28 = vld [vmem:[%s2] sm:$0x3]
      %vm29 = vcmask 254976
      %30 = vst.msk [vmem:[#allocation2] sm:$0x3] %vm29, %v28
    $region25: #{ep_gru_forward.5} parent=1 // pred_fallthru
      _
    %v31 = vld [vmem:[%s3] sm:$0xf]
    %v32 = vld [vmem:[%s3 + $0x4] sm:$0xf]
    %v33 = vld [vmem:[%s3 + $0x8] sm:$0xf]
    %v34 = vld [vmem:[%s3 + $0xc] sm:$0xf]
    %v35 = vld [vmem:[%s4] sm:$0x1]
    %v36 = vld [vmem:[#allocation2] sm:$0x3]
    %v37 = vld [vmem:[%s0] sm:$0x3]
    %v38 = vld [vmem:[%s1] sm:$0x1]
    %v39 = vunpack.c.l.bf16 %v38
    %v40 = vpack.c.bf16 %v36, %v36
    %v42 = vlaneseq
    %v43 = vshrl.u32 %v42, 7
    %v44 = vsub.s32 0, %v43
    %v45 = vrot.slane %v35, %v44
    %v51 = vunpack.c.l.b16 %v31
    %v52 = vunpack.c.l.b16 %v32
    %v53 = vunpack.c.l.b16 %v33
    %v54 = vunpack.c.l.b16 %v34
    %v55 = vpack.c.b16 %v52, %v51
    %v56 = vpack.c.b16 %v54, %v53
    %vm59 = vcmask 261120
    %v61 = vsel %vm59, %v40, 0
    %63 = vmatprep.subr.bf16.mxu0 0
    %64 = vmatpush1.bf16.msra.mxu0 %v55
    %65 = vmatprep.subr.bf16.mxu0 0
    %66 = vmatpush1.bf16.msra.mxu0 %v56
    %67 = vmatprep.subr.bf16.mxu0 0
    %68 = vmatpush1.bf16.msra.mxu0 0
    %69 = vmatprep.subr.bf16.mxu0 0
    %70 = vmatpush1.bf16.msra.mxu0 0
    %71 = vmatprep.subr.bf16.mxu0 0
    %72 = vmatpush1.bf16.msra.mxu0 0
    %73 = vmatprep.subr.bf16.mxu0 0
    %74 = vmatpush1.bf16.msra.mxu0 0
    %75 = vmatprep.subr.bf16.mxu0 0
    %76 = vmatpush1.bf16.msra.mxu0 0
    %77 = vmatprep.subr.bf16.mxu0 0
    %78 = vmatpush1.bf16.msra.mxu0 0
    %79 = vmatprep.subr.bf16.mxu0 0
    %80 = vmatpush1.bf16.msra.mxu0 0
    %81 = vmatprep.subr.bf16.mxu0 0
    %82 = vmatpush1.bf16.msra.mxu0 0
    %83 = vmatprep.subr.bf16.mxu0 0
    %84 = vmatpush1.bf16.msra.mxu0 0
    %85 = vmatprep.subr.bf16.mxu0 0
    %86 = vmatpush1.bf16.msra.mxu0 0
    %87 = vmatprep.subr.bf16.mxu0 0
    %88 = vmatpush1.bf16.msra.mxu0 0
    %89 = vmatprep.subr.bf16.mxu0 0
    %90 = vmatpush1.bf16.msra.mxu0 0
    %91 = vmatprep.subr.bf16.mxu0 0
    %92 = vmatpush1.bf16.msra.mxu0 0
    %93 = vmatprep.subr.bf16.mxu0 0
    %94 = vmatpush1.bf16.msra.mxu0 0
    %95 = vmatprep.mubr.bf16.mxu0 0
    %96 = vmatmul.mubr.bf16.gmra.mrb[0].mxu0 %v61
    %v97 = vpop.f32.mrb[0].mxu0
    %v98 = vadd.f32 %v45, %v97
    %v99 = vpop.f32.mrb[0].mxu0
    %v100 = vpop.f32.mrb[0].mxu0
    %v101 = vpop.f32.mrb[0].mxu0
    %102 = vdwg.mxu0
    %v103 = vadd.f32 %v37, %v98
    %v104 = vxor.u32 %v103, 2147483648
    %v105 = vmul.f32 %v104, 1.442695
    %v106 = vpow.pop %v105
    %v107 = vadd.f32 %v106, 1.0
    %v108 = vrcp.pop %v107
    %v109 = vmul.f32 1.0, %v108
    %111 = vrot.lane.b32.xlu0 %v98, 64
    %v112 = vpop.permute.xlu0 %111
    %v114 = vmul.f32 %v109, %v112
    %116 = vrot.lane.b32.xlu0 %v114, 64
    %v117 = vpop.permute.xlu0 %116
    %v119 = vadd.f32 %v37, %v117
    %v120 = vtanh.pop %v119
    %122 = vrot.lane.b32.xlu0 %v120, 64
    %v123 = vpop.permute.xlu0 %122
    %v125 = vsub.f32 %v36, %v123
    %127 = vrot.lane.b32.xlu0 %v125, 32
    %v128 = vpop.permute.xlu0 %127
    %v130 = vmul.f32 %v109, %v128
    %132 = vrot.lane.b32.xlu0 %v130, 32
    %v133 = vpop.permute.xlu0 %132
    %v135 = vadd.f32 %v120, %v133
    %137 = vrot.lane.b32.xlu0 %v36, 64
    %v138 = vpop.permute.xlu0 %137
    %v140 = vsub.f32 %v135, %v138
    %v143 = vunpack.c.l.s4 1983009808
    %v144 = vunpack.c.0.s8 %v143
    %v145 = vlaneseq
    %v146 = vshrl.u32 %v145, 7
    %v147 = vsub.s32 %v144, %v146
    %v148 = vrot.slane %v140, %v147
    %149 = vrot.lane.b32.xlu0 %v148, 64
    %v150 = vpop.permute.xlu0 %149
    %v152 = vmul.f32 %v39, %v150
    %v153 = vadd.f32 %v36, %v152
    %vm154 = vcmask 254976
    %155 = vst.msk [vmem:[%s5] sm:$0x3] %vm154, %v153
    %s156 = scalar_lea.vmem %s0, 2
    %v157 = vld [vmem:[%s156] sm:$0x3]
    %s158 = scalar_lea.vmem %s1, 1
    %v159 = vld [vmem:[%s158] sm:$0x1]
    %v160 = vunpack.c.l.bf16 %v159
    %v161 = vpack.c.bf16 %v153, %v153
    %v163 = vsel %vm59, %v161, 0
    %165 = vmatprep.subr.bf16.mxu0 0
    %166 = vmatpush1.bf16.msra.mxu0 %v55
    %167 = vmatprep.subr.bf16.mxu0 0
    %168 = vmatpush1.bf16.msra.mxu0 %v56
    %169 = vmatprep.subr.bf16.mxu0 0
    %170 = vmatpush1.bf16.msra.mxu0 0
    %171 = vmatprep.subr.bf16.mxu0 0
    %172 = vmatpush1.bf16.msra.mxu0 0
    %173 = vmatprep.subr.bf16.mxu0 0
    %174 = vmatpush1.bf16.msra.mxu0 0
    %175 = vmatprep.subr.bf16.mxu0 0
    %176 = vmatpush1.bf16.msra.mxu0 0
    %177 = vmatprep.subr.bf16.mxu0 0
    %178 = vmatpush1.bf16.msra.mxu0 0
    %179 = vmatprep.subr.bf16.mxu0 0
    %180 = vmatpush1.bf16.msra.mxu0 0
    %181 = vmatprep.subr.bf16.mxu0 0
    %182 = vmatpush1.bf16.msra.mxu0 0
    %183 = vmatprep.subr.bf16.mxu0 0
    %184 = vmatpush1.bf16.msra.mxu0 0
    %185 = vmatprep.subr.bf16.mxu0 0
    %186 = vmatpush1.bf16.msra.mxu0 0
    %187 = vmatprep.subr.bf16.mxu0 0
    %188 = vmatpush1.bf16.msra.mxu0 0
    %189 = vmatprep.subr.bf16.mxu0 0
    %190 = vmatpush1.bf16.msra.mxu0 0
    %191 = vmatprep.subr.bf16.mxu0 0
    %192 = vmatpush1.bf16.msra.mxu0 0
    %193 = vmatprep.subr.bf16.mxu0 0
    %194 = vmatpush1.bf16.msra.mxu0 0
    %195 = vmatprep.subr.bf16.mxu0 0
    %196 = vmatpush1.bf16.msra.mxu0 0
    %197 = vmatprep.mubr.bf16.mxu0 0
    %198 = vmatmul.mubr.bf16.gmra.mrb[0].mxu0 %v163
    %v199 = vpop.f32.mrb[0].mxu0
    %v200 = vadd.f32 %v45, %v199
    %v201 = vpop.f32.mrb[0].mxu0
    %v202 = vpop.f32.mrb[0].mxu0
    %v203 = vpop.f32.mrb[0].mxu0
    %204 = vdwg.mxu0
    %v205 = vadd.f32 %v157, %v200
    %v206 = vxor.u32 %v205, 2147483648
    %v207 = vmul.f32 %v206, 1.442695
    %v208 = vpow.pop %v207
    %v209 = vadd.f32 %v208, 1.0
    %v210 = vrcp.pop %v209
    %v211 = vmul.f32 1.0, %v210
    %213 = vrot.lane.b32.xlu0 %v200, 64
    %v214 = vpop.permute.xlu0 %213
    %v216 = vmul.f32 %v211, %v214
    %218 = vrot.lane.b32.xlu0 %v216, 64
    %v219 = vpop.permute.xlu0 %218
    %v221 = vadd.f32 %v157, %v219
    %v222 = vtanh.pop %v221
    %224 = vrot.lane.b32.xlu0 %v222, 64
    %v225 = vpop.permute.xlu0 %224
    %v227 = vsub.f32 %v153, %v225
    %229 = vrot.lane.b32.xlu0 %v227, 32
    %v230 = vpop.permute.xlu0 %229
    %v232 = vmul.f32 %v211, %v230
    %234 = vrot.lane.b32.xlu0 %v232, 32
    %v235 = vpop.permute.xlu0 %234
    %v237 = vadd.f32 %v222, %v235
    %239 = vrot.lane.b32.xlu0 %v153, 64
    %v240 = vpop.permute.xlu0 %239
    %v242 = vsub.f32 %v237, %v240
    %v245 = vunpack.c.l.s4 1983009808
    %v246 = vunpack.c.0.s8 %v245
    %v247 = vlaneseq
    %v248 = vshrl.u32 %v247, 7
    %v249 = vsub.s32 %v246, %v248
    %v250 = vrot.slane %v242, %v249
    %251 = vrot.lane.b32.xlu0 %v250, 64
    %v252 = vpop.permute.xlu0 %251
    %v254 = vmul.f32 %v160, %v252
    %v255 = vadd.f32 %v153, %v254
    %s256 = scalar_lea.vmem %s5, 2
    %257 = vst.msk [vmem:[%s256] sm:$0x3] %vm154, %v255
    %s258 = scalar_lea.vmem %s0, 4
    %v259 = vld [vmem:[%s258] sm:$0x3]
    %s260 = scalar_lea.vmem %s1, 2
    %v261 = vld [vmem:[%s260] sm:$0x1]
    %v262 = vunpack.c.l.bf16 %v261
    %v263 = vpack.c.bf16 %v255, %v255
    %v265 = vsel %vm59, %v263, 0
    %267 = vmatprep.subr.bf16.mxu0 0
    %268 = vmatpush1.bf16.msra.mxu0 %v55
    %269 = vmatprep.subr.bf16.mxu0 0
    %270 = vmatpush1.bf16.msra.mxu0 %v56
    %271 = vmatprep.subr.bf16.mxu0 0
    %272 = vmatpush1.bf16.msra.mxu0 0
    %273 = vmatprep.subr.bf16.mxu0 0
    %274 = vmatpush1.bf16.msra.mxu0 0
    %275 = vmatprep.subr.bf16.mxu0 0
    %276 = vmatpush1.bf16.msra.mxu0 0
    %277 = vmatprep.subr.bf16.mxu0 0
    %278 = vmatpush1.bf16.msra.mxu0 0
    %279 = vmatprep.subr.bf16.mxu0 0
    %280 = vmatpush1.bf16.msra.mxu0 0
    %281 = vmatprep.subr.bf16.mxu0 0
    %282 = vmatpush1.bf16.msra.mxu0 0
    %283 = vmatprep.subr.bf16.mxu0 0
    %284 = vmatpush1.bf16.msra.mxu0 0
    %285 = vmatprep.subr.bf16.mxu0 0
    %286 = vmatpush1.bf16.msra.mxu0 0
    %287 = vmatprep.subr.bf16.mxu0 0
    %288 = vmatpush1.bf16.msra.mxu0 0
    %289 = vmatprep.subr.bf16.mxu0 0
    %290 = vmatpush1.bf16.msra.mxu0 0
    %291 = vmatprep.subr.bf16.mxu0 0
    %292 = vmatpush1.bf16.msra.mxu0 0
    %293 = vmatprep.subr.bf16.mxu0 0
    %294 = vmatpush1.bf16.msra.mxu0 0
    %295 = vmatprep.subr.bf16.mxu0 0
    %296 = vmatpush1.bf16.msra.mxu0 0
    %297 = vmatprep.subr.bf16.mxu0 0
    %298 = vmatpush1.bf16.msra.mxu0 0
    %299 = vmatprep.mubr.bf16.mxu0 0
    %300 = vmatmul.mubr.bf16.gmra.mrb[0].mxu0 %v265
    %v301 = vpop.f32.mrb[0].mxu0
    %v302 = vadd.f32 %v45, %v301
    %v303 = vpop.f32.mrb[0].mxu0
    %v304 = vpop.f32.mrb[0].mxu0
    %v305 = vpop.f32.mrb[0].mxu0
    %306 = vdwg.mxu0
    %v307 = vadd.f32 %v259, %v302
    %v308 = vxor.u32 %v307, 2147483648
    %v309 = vmul.f32 %v308, 1.442695
    %v310 = vpow.pop %v309
    %v311 = vadd.f32 %v310, 1.0
    %v312 = vrcp.pop %v311
    %v313 = vmul.f32 1.0, %v312
    %315 = vrot.lane.b32.xlu0 %v302, 64
    %v316 = vpop.permute.xlu0 %315
    %v318 = vmul.f32 %v313, %v316
    %320 = vrot.lane.b32.xlu0 %v318, 64
    %v321 = vpop.permute.xlu0 %320
    %v323 = vadd.f32 %v259, %v321
    %v324 = vtanh.pop %v323
    %326 = vrot.lane.b32.xlu0 %v324, 64
    %v327 = vpop.permute.xlu0 %326
    %v329 = vsub.f32 %v255, %v327
    %331 = vrot.lane.b32.xlu0 %v329, 32
    %v332 = vpop.permute.xlu0 %331
    %v334 = vmul.f32 %v313, %v332
    %336 = vrot.lane.b32.xlu0 %v334, 32
    %v337 = vpop.permute.xlu0 %336
    %v339 = vadd.f32 %v324, %v337
    %341 = vrot.lane.b32.xlu0 %v255, 64
    %v342 = vpop.permute.xlu0 %341
    %v344 = vsub.f32 %v339, %v342
    %v347 = vunpack.c.l.s4 1983009808
    %v348 = vunpack.c.0.s8 %v347
    %v349 = vlaneseq
    %v350 = vshrl.u32 %v349, 7
    %v351 = vsub.s32 %v348, %v350
    %v352 = vrot.slane %v344, %v351
    %353 = vrot.lane.b32.xlu0 %v352, 64
    %v354 = vpop.permute.xlu0 %353
    %v356 = vmul.f32 %v262, %v354
    %v357 = vadd.f32 %v255, %v356
    %s358 = scalar_lea.vmem %s5, 4
    %359 = vst.msk [vmem:[%s358] sm:$0x3] %vm154, %v357
    %s360 = scalar_lea.vmem %s0, 6
    %v361 = vld [vmem:[%s360] sm:$0x3]
    %s362 = scalar_lea.vmem %s1, 3
    %v363 = vld [vmem:[%s362] sm:$0x1]
    %v364 = vunpack.c.l.bf16 %v363
    %v365 = vpack.c.bf16 %v357, %v357
    %v367 = vsel %vm59, %v365, 0
    %369 = vmatprep.subr.bf16.mxu0 0
    %370 = vmatpush1.bf16.msra.mxu0 %v55
    %371 = vmatprep.subr.bf16.mxu0 0
    %372 = vmatpush1.bf16.msra.mxu0 %v56
    %373 = vmatprep.subr.bf16.mxu0 0
    %374 = vmatpush1.bf16.msra.mxu0 0
    %375 = vmatprep.subr.bf16.mxu0 0
    %376 = vmatpush1.bf16.msra.mxu0 0
    %377 = vmatprep.subr.bf16.mxu0 0
    %378 = vmatpush1.bf16.msra.mxu0 0
    %379 = vmatprep.subr.bf16.mxu0 0
    %380 = vmatpush1.bf16.msra.mxu0 0
    %381 = vmatprep.subr.bf16.mxu0 0
    %382 = vmatpush1.bf16.msra.mxu0 0
    %383 = vmatprep.subr.bf16.mxu0 0
    %384 = vmatpush1.bf16.msra.mxu0 0
    %385 = vmatprep.subr.bf16.mxu0 0
    %386 = vmatpush1.bf16.msra.mxu0 0
    %387 = vmatprep.subr.bf16.mxu0 0
    %388 = vmatpush1.bf16.msra.mxu0 0
    %389 = vmatprep.subr.bf16.mxu0 0
    %390 = vmatpush1.bf16.msra.mxu0 0
    %391 = vmatprep.subr.bf16.mxu0 0
    %392 = vmatpush1.bf16.msra.mxu0 0
    %393 = vmatprep.subr.bf16.mxu0 0
    %394 = vmatpush1.bf16.msra.mxu0 0
    %395 = vmatprep.subr.bf16.mxu0 0
    %396 = vmatpush1.bf16.msra.mxu0 0
    %397 = vmatprep.subr.bf16.mxu0 0
    %398 = vmatpush1.bf16.msra.mxu0 0
    %399 = vmatprep.subr.bf16.mxu0 0
    %400 = vmatpush1.bf16.msra.mxu0 0
    %401 = vmatprep.mubr.bf16.mxu0 0
    %402 = vmatmul.mubr.bf16.gmra.mrb[0].mxu0 %v367
    %v403 = vpop.f32.mrb[0].mxu0
    %v404 = vadd.f32 %v45, %v403
    %v405 = vpop.f32.mrb[0].mxu0
    %v406 = vpop.f32.mrb[0].mxu0
    %v407 = vpop.f32.mrb[0].mxu0
    %408 = vdwg.mxu0
    %v409 = vadd.f32 %v361, %v404
    %v410 = vxor.u32 %v409, 2147483648
    %v411 = vmul.f32 %v410, 1.442695
    %v412 = vpow.pop %v411
    %v413 = vadd.f32 %v412, 1.0
    %v414 = vrcp.pop %v413
    %v415 = vmul.f32 1.0, %v414
    %417 = vrot.lane.b32.xlu0 %v404, 64
    %v418 = vpop.permute.xlu0 %417
    %v420 = vmul.f32 %v415, %v418
    %422 = vrot.lane.b32.xlu0 %v420, 64
    %v423 = vpop.permute.xlu0 %422
    %v425 = vadd.f32 %v361, %v423
    %v426 = vtanh.pop %v425
    %428 = vrot.lane.b32.xlu0 %v426, 64
    %v429 = vpop.permute.xlu0 %428
    %v431 = vsub.f32 %v357, %v429
    %433 = vrot.lane.b32.xlu0 %v431, 32
    %v434 = vpop.permute.xlu0 %433
    %v436 = vmul.f32 %v415, %v434
    %438 = vrot.lane.b32.xlu0 %v436, 32
    %v439 = vpop.permute.xlu0 %438
    %v441 = vadd.f32 %v426, %v439
    %443 = vrot.lane.b32.xlu0 %v357, 64
    %v444 = vpop.permute.xlu0 %443
    %v446 = vsub.f32 %v441, %v444
    %v449 = vunpack.c.l.s4 1983009808
    %v450 = vunpack.c.0.s8 %v449
    %v451 = vlaneseq
    %v452 = vshrl.u32 %v451, 7
    %v453 = vsub.s32 %v450, %v452
    %v454 = vrot.slane %v446, %v453
    %455 = vrot.lane.b32.xlu0 %v454, 64
    %v456 = vpop.permute.xlu0 %455
    %v458 = vmul.f32 %v364, %v456
    %v459 = vadd.f32 %v357, %v458
    %s460 = scalar_lea.vmem %s5, 6
    %461 = vst.msk [vmem:[%s460] sm:$0x3] %vm154, %v459
    %s462 = scalar_lea.vmem %s0, 8
    %v463 = vld [vmem:[%s462] sm:$0x3]
    %s464 = scalar_lea.vmem %s1, 4
    %v465 = vld [vmem:[%s464] sm:$0x1]
    %v466 = vunpack.c.l.bf16 %v465
    %v467 = vpack.c.bf16 %v459, %v459
    %v469 = vsel %vm59, %v467, 0
    %471 = vmatprep.subr.bf16.mxu0 0
    %472 = vmatpush1.bf16.msra.mxu0 %v55
    %473 = vmatprep.subr.bf16.mxu0 0
    %474 = vmatpush1.bf16.msra.mxu0 %v56
    %475 = vmatprep.subr.bf16.mxu0 0
    %476 = vmatpush1.bf16.msra.mxu0 0
    %477 = vmatprep.subr.bf16.mxu0 0
    %478 = vmatpush1.bf16.msra.mxu0 0
    %479 = vmatprep.subr.bf16.mxu0 0
    %480 = vmatpush1.bf16.msra.mxu0 0
    %481 = vmatprep.subr.bf16.mxu0 0
    %482 = vmatpush1.bf16.msra.mxu0 0
    %483 = vmatprep.subr.bf16.mxu0 0
    %484 = vmatpush1.bf16.msra.mxu0 0
    %485 = vmatprep.subr.bf16.mxu0 0
    %486 = vmatpush1.bf16.msra.mxu0 0
    %487 = vmatprep.subr.bf16.mxu0 0
    %488 = vmatpush1.bf16.msra.mxu0 0
    %489 = vmatprep.subr.bf16.mxu0 0
    %490 = vmatpush1.bf16.msra.mxu0 0
    %491 = vmatprep.subr.bf16.mxu0 0
    %492 = vmatpush1.bf16.msra.mxu0 0
    %493 = vmatprep.subr.bf16.mxu0 0
    %494 = vmatpush1.bf16.msra.mxu0 0
    %495 = vmatprep.subr.bf16.mxu0 0
    %496 = vmatpush1.bf16.msra.mxu0 0
    %497 = vmatprep.subr.bf16.mxu0 0
    %498 = vmatpush1.bf16.msra.mxu0 0
    %499 = vmatprep.subr.bf16.mxu0 0
    %500 = vmatpush1.bf16.msra.mxu0 0
    %501 = vmatprep.subr.bf16.mxu0 0
    %502 = vmatpush1.bf16.msra.mxu0 0
    %503 = vmatprep.mubr.bf16.mxu0 0
    %504 = vmatmul.mubr.bf16.gmra.mrb[0].mxu0 %v469
    %v505 = vpop.f32.mrb[0].mxu0
    %v506 = vadd.f32 %v45, %v505
    %v507 = vpop.f32.mrb[0].mxu0
    %v508 = vpop.f32.mrb[0].mxu0
    %v509 = vpop.f32.mrb[0].mxu0
    %510 = vdwg.mxu0
    %v511 = vadd.f32 %v463, %v506
    %v512 = vxor.u32 %v511, 2147483648
    %v513 = vmul.f32 %v512, 1.442695
    %v514 = vpow.pop %v513
    %v515 = vadd.f32 %v514, 1.0
    %v516 = vrcp.pop %v515
    %v517 = vmul.f32 1.0, %v516
    %519 = vrot.lane.b32.xlu0 %v506, 64
    %v520 = vpop.permute.xlu0 %519
    %v522 = vmul.f32 %v517, %v520
    %524 = vrot.lane.b32.xlu0 %v522, 64
    %v525 = vpop.permute.xlu0 %524
    %v527 = vadd.f32 %v463, %v525
    %v528 = vtanh.pop %v527
    %530 = vrot.lane.b32.xlu0 %v528, 64
    %v531 = vpop.permute.xlu0 %530
    %v533 = vsub.f32 %v459, %v531
    %535 = vrot.lane.b32.xlu0 %v533, 32
    %v536 = vpop.permute.xlu0 %535
    %v538 = vmul.f32 %v517, %v536
    %540 = vrot.lane.b32.xlu0 %v538, 32
    %v541 = vpop.permute.xlu0 %540
    %v543 = vadd.f32 %v528, %v541
    %545 = vrot.lane.b32.xlu0 %v459, 64
    %v546 = vpop.permute.xlu0 %545
    %v548 = vsub.f32 %v543, %v546
    %v551 = vunpack.c.l.s4 1983009808
    %v552 = vunpack.c.0.s8 %v551
    %v553 = vlaneseq
    %v554 = vshrl.u32 %v553, 7
    %v555 = vsub.s32 %v552, %v554
    %v556 = vrot.slane %v548, %v555
    %557 = vrot.lane.b32.xlu0 %v556, 64
    %v558 = vpop.permute.xlu0 %557
    %v560 = vmul.f32 %v466, %v558
    %v561 = vadd.f32 %v459, %v560
    %s562 = scalar_lea.vmem %s5, 8
    %563 = vst.msk [vmem:[%s562] sm:$0x3] %vm154, %v561
    %s564 = scalar_lea.vmem %s0, 10
    %v565 = vld [vmem:[%s564] sm:$0x3]
    %s566 = scalar_lea.vmem %s1, 5
    %v567 = vld [vmem:[%s566] sm:$0x1]
    %v568 = vunpack.c.l.bf16 %v567
    %v569 = vpack.c.bf16 %v561, %v561
    %v571 = vsel %vm59, %v569, 0
    %573 = vmatprep.subr.bf16.mxu0 0
    %574 = vmatpush1.bf16.msra.mxu0 %v55
    %575 = vmatprep.subr.bf16.mxu0 0
    %576 = vmatpush1.bf16.msra.mxu0 %v56
    %577 = vmatprep.subr.bf16.mxu0 0
    %578 = vmatpush1.bf16.msra.mxu0 0
    %579 = vmatprep.subr.bf16.mxu0 0
    %580 = vmatpush1.bf16.msra.mxu0 0
    %581 = vmatprep.subr.bf16.mxu0 0
    %582 = vmatpush1.bf16.msra.mxu0 0
    %583 = vmatprep.subr.bf16.mxu0 0
    %584 = vmatpush1.bf16.msra.mxu0 0
    %585 = vmatprep.subr.bf16.mxu0 0
    %586 = vmatpush1.bf16.msra.mxu0 0
    %587 = vmatprep.subr.bf16.mxu0 0
    %588 = vmatpush1.bf16.msra.mxu0 0
    %589 = vmatprep.subr.bf16.mxu0 0
    %590 = vmatpush1.bf16.msra.mxu0 0
    %591 = vmatprep.subr.bf16.mxu0 0
    %592 = vmatpush1.bf16.msra.mxu0 0
    %593 = vmatprep.subr.bf16.mxu0 0
    %594 = vmatpush1.bf16.msra.mxu0 0
    %595 = vmatprep.subr.bf16.mxu0 0
    %596 = vmatpush1.bf16.msra.mxu0 0
    %597 = vmatprep.subr.bf16.mxu0 0
    %598 = vmatpush1.bf16.msra.mxu0 0
    %599 = vmatprep.subr.bf16.mxu0 0
    %600 = vmatpush1.bf16.msra.mxu0 0
    %601 = vmatprep.subr.bf16.mxu0 0
    %602 = vmatpush1.bf16.msra.mxu0 0
    %603 = vmatprep.subr.bf16.mxu0 0
    %604 = vmatpush1.bf16.msra.mxu0 0
    %605 = vmatprep.mubr.bf16.mxu0 0
    %606 = vmatmul.mubr.bf16.gmra.mrb[0].mxu0 %v571
    %v607 = vpop.f32.mrb[0].mxu0
    %v608 = vadd.f32 %v45, %v607
    %v609 = vpop.f32.mrb[0].mxu0
    %v610 = vpop.f32.mrb[0].mxu0
    %v611 = vpop.f32.mrb[0].mxu0
    %612 = vdwg.mxu0
    %v613 = vadd.f32 %v565, %v608
    %v614 = vxor.u32 %v613, 2147483648
    %v615 = vmul.f32 %v614, 1.442695
    %v616 = vpow.pop %v615
    %v617 = vadd.f32 %v616, 1.0
    %v618 = vrcp.pop %v617
    %v619 = vmul.f32 1.0, %v618
    %621 = vrot.lane.b32.xlu0 %v608, 64
    %v622 = vpop.permute.xlu0 %621
    %v624 = vmul.f32 %v619, %v622
    %626 = vrot.lane.b32.xlu0 %v624, 64
    %v627 = vpop.permute.xlu0 %626
    %v629 = vadd.f32 %v565, %v627
    %v630 = vtanh.pop %v629
    %632 = vrot.lane.b32.xlu0 %v630, 64
    %v633 = vpop.permute.xlu0 %632
    %v635 = vsub.f32 %v561, %v633
    %637 = vrot.lane.b32.xlu0 %v635, 32
    %v638 = vpop.permute.xlu0 %637
    %v640 = vmul.f32 %v619, %v638
    %642 = vrot.lane.b32.xlu0 %v640, 32
    %v643 = vpop.permute.xlu0 %642
    %v645 = vadd.f32 %v630, %v643
    %647 = vrot.lane.b32.xlu0 %v561, 64
    %v648 = vpop.permute.xlu0 %647
    %v650 = vsub.f32 %v645, %v648
    %v653 = vunpack.c.l.s4 1983009808
    %v654 = vunpack.c.0.s8 %v653
    %v655 = vlaneseq
    %v656 = vshrl.u32 %v655, 7
    %v657 = vsub.s32 %v654, %v656
    %v658 = vrot.slane %v650, %v657
    %659 = vrot.lane.b32.xlu0 %v658, 64
    %v660 = vpop.permute.xlu0 %659
    %v662 = vmul.f32 %v568, %v660
    %v663 = vadd.f32 %v561, %v662
    %s664 = scalar_lea.vmem %s5, 10
    %665 = vst.msk [vmem:[%s664] sm:$0x3] %vm154, %v663
    %s666 = scalar_lea.vmem %s0, 12
    %v667 = vld [vmem:[%s666] sm:$0x3]
    %s668 = scalar_lea.vmem %s1, 6
    %v669 = vld [vmem:[%s668] sm:$0x1]
    %v670 = vunpack.c.l.bf16 %v669
    %v671 = vpack.c.bf16 %v663, %v663
    %v673 = vsel %vm59, %v671, 0
    %675 = vmatprep.subr.bf16.mxu0 0
    %676 = vmatpush1.bf16.msra.mxu0 %v55
    %677 = vmatprep.subr.bf16.mxu0 0
    %678 = vmatpush1.bf16.msra.mxu0 %v56
    %679 = vmatprep.subr.bf16.mxu0 0
    %680 = vmatpush1.bf16.msra.mxu0 0
    %681 = vmatprep.subr.bf16.mxu0 0
    %682 = vmatpush1.bf16.msra.mxu0 0
    %683 = vmatprep.subr.bf16.mxu0 0
    %684 = vmatpush1.bf16.msra.mxu0 0
    %685 = vmatprep.subr.bf16.mxu0 0
    %686 = vmatpush1.bf16.msra.mxu0 0
    %687 = vmatprep.subr.bf16.mxu0 0
    %688 = vmatpush1.bf16.msra.mxu0 0
    %689 = vmatprep.subr.bf16.mxu0 0
    %690 = vmatpush1.bf16.msra.mxu0 0
    %691 = vmatprep.subr.bf16.mxu0 0
    %692 = vmatpush1.bf16.msra.mxu0 0
    %693 = vmatprep.subr.bf16.mxu0 0
    %694 = vmatpush1.bf16.msra.mxu0 0
    %695 = vmatprep.subr.bf16.mxu0 0
    %696 = vmatpush1.bf16.msra.mxu0 0
    %697 = vmatprep.subr.bf16.mxu0 0
    %698 = vmatpush1.bf16.msra.mxu0 0
    %699 = vmatprep.subr.bf16.mxu0 0
    %700 = vmatpush1.bf16.msra.mxu0 0
    %701 = vmatprep.subr.bf16.mxu0 0
    %702 = vmatpush1.bf16.msra.mxu0 0
    %703 = vmatprep.subr.bf16.mxu0 0
    %704 = vmatpush1.bf16.msra.mxu0 0
    %705 = vmatprep.subr.bf16.mxu0 0
    %706 = vmatpush1.bf16.msra.mxu0 0
    %707 = vmatprep.mubr.bf16.mxu0 0
    %708 = vmatmul.mubr.bf16.gmra.mrb[0].mxu0 %v673
    %v709 = vpop.f32.mrb[0].mxu0
    %v710 = vadd.f32 %v45, %v709
    %v711 = vpop.f32.mrb[0].mxu0
    %v712 = vpop.f32.mrb[0].mxu0
    %v713 = vpop.f32.mrb[0].mxu0
    %714 = vdwg.mxu0
    %v715 = vadd.f32 %v667, %v710
    %v716 = vxor.u32 %v715, 2147483648
    %v717 = vmul.f32 %v716, 1.442695
    %v718 = vpow.pop %v717
    %v719 = vadd.f32 %v718, 1.0
    %v720 = vrcp.pop %v719
    %v721 = vmul.f32 1.0, %v720
    %723 = vrot.lane.b32.xlu0 %v710, 64
    %v724 = vpop.permute.xlu0 %723
    %v726 = vmul.f32 %v721, %v724
    %728 = vrot.lane.b32.xlu0 %v726, 64
    %v729 = vpop.permute.xlu0 %728
    %v731 = vadd.f32 %v667, %v729
    %v732 = vtanh.pop %v731
    %734 = vrot.lane.b32.xlu0 %v732, 64
    %v735 = vpop.permute.xlu0 %734
    %v737 = vsub.f32 %v663, %v735
    %739 = vrot.lane.b32.xlu0 %v737, 32
    %v740 = vpop.permute.xlu0 %739
    %v742 = vmul.f32 %v721, %v740
    %744 = vrot.lane.b32.xlu0 %v742, 32
    %v745 = vpop.permute.xlu0 %744
    %v747 = vadd.f32 %v732, %v745
    %749 = vrot.lane.b32.xlu0 %v663, 64
    %v750 = vpop.permute.xlu0 %749
    %v752 = vsub.f32 %v747, %v750
    %v755 = vunpack.c.l.s4 1983009808
    %v756 = vunpack.c.0.s8 %v755
    %v757 = vlaneseq
    %v758 = vshrl.u32 %v757, 7
    %v759 = vsub.s32 %v756, %v758
    %v760 = vrot.slane %v752, %v759
    %761 = vrot.lane.b32.xlu0 %v760, 64
    %v762 = vpop.permute.xlu0 %761
    %v764 = vmul.f32 %v670, %v762
    %v765 = vadd.f32 %v663, %v764
    %s766 = scalar_lea.vmem %s5, 12
    %767 = vst.msk [vmem:[%s766] sm:$0x3] %vm154, %v765
    %s768 = scalar_lea.vmem %s0, 14
    %v769 = vld [vmem:[%s768] sm:$0x3]
    %s770 = scalar_lea.vmem %s1, 7
    %v771 = vld [vmem:[%s770] sm:$0x1]
    %v772 = vunpack.c.l.bf16 %v771
    %v773 = vpack.c.bf16 %v765, %v765
    %v775 = vsel %vm59, %v773, 0
    %777 = vmatprep.subr.bf16.mxu0 0
    %778 = vmatpush1.bf16.msra.mxu0 %v55
    %779 = vmatprep.subr.bf16.mxu0 0
    %780 = vmatpush1.bf16.msra.mxu0 %v56
    %781 = vmatprep.subr.bf16.mxu0 0
    %782 = vmatpush1.bf16.msra.mxu0 0
    %783 = vmatprep.subr.bf16.mxu0 0
    %784 = vmatpush1.bf16.msra.mxu0 0
    %785 = vmatprep.subr.bf16.mxu0 0
    %786 = vmatpush1.bf16.msra.mxu0 0
    %787 = vmatprep.subr.bf16.mxu0 0
    %788 = vmatpush1.bf16.msra.mxu0 0
    %789 = vmatprep.subr.bf16.mxu0 0
    %790 = vmatpush1.bf16.msra.mxu0 0
    %791 = vmatprep.subr.bf16.mxu0 0
    %792 = vmatpush1.bf16.msra.mxu0 0
    %793 = vmatprep.subr.bf16.mxu0 0
    %794 = vmatpush1.bf16.msra.mxu0 0
    %795 = vmatprep.subr.bf16.mxu0 0
    %796 = vmatpush1.bf16.msra.mxu0 0
    %797 = vmatprep.subr.bf16.mxu0 0
    %798 = vmatpush1.bf16.msra.mxu0 0
    %799 = vmatprep.subr.bf16.mxu0 0
    %800 = vmatpush1.bf16.msra.mxu0 0
    %801 = vmatprep.subr.bf16.mxu0 0
    %802 = vmatpush1.bf16.msra.mxu0 0
    %803 = vmatprep.subr.bf16.mxu0 0
    %804 = vmatpush1.bf16.msra.mxu0 0
    %805 = vmatprep.subr.bf16.mxu0 0
    %806 = vmatpush1.bf16.msra.mxu0 0
    %807 = vmatprep.subr.bf16.mxu0 0
    %808 = vmatpush1.bf16.msra.mxu0 0
    %809 = vmatprep.mubr.bf16.mxu0 0
    %810 = vmatmul.mubr.bf16.gmra.mrb[0].mxu0 %v775
    %v811 = vpop.f32.mrb[0].mxu0
    %v812 = vadd.f32 %v45, %v811
    %v813 = vpop.f32.mrb[0].mxu0
    %v814 = vpop.f32.mrb[0].mxu0
    %v815 = vpop.f32.mrb[0].mxu0
    %816 = vdwg.mxu0
    %v817 = vadd.f32 %v769, %v812
    %v818 = vxor.u32 %v817, 2147483648
    %v819 = vmul.f32 %v818, 1.442695
    %v820 = vpow.pop %v819
    %v821 = vadd.f32 %v820, 1.0
    %v822 = vrcp.pop %v821
    %v823 = vmul.f32 1.0, %v822
    %825 = vrot.lane.b32.xlu0 %v812, 64
    %v826 = vpop.permute.xlu0 %825
    %v828 = vmul.f32 %v823, %v826
    %830 = vrot.lane.b32.xlu0 %v828, 64
    %v831 = vpop.permute.xlu0 %830
    %v833 = vadd.f32 %v769, %v831
    %v834 = vtanh.pop %v833
    %836 = vrot.lane.b32.xlu0 %v834, 64
    %v837 = vpop.permute.xlu0 %836
    %v839 = vsub.f32 %v765, %v837
    %841 = vrot.lane.b32.xlu0 %v839, 32
    %v842 = vpop.permute.xlu0 %841
    %v844 = vmul.f32 %v823, %v842
    %846 = vrot.lane.b32.xlu0 %v844, 32
    %v847 = vpop.permute.xlu0 %846
    %v849 = vadd.f32 %v834, %v847
    %851 = vrot.lane.b32.xlu0 %v765, 64
    %v852 = vpop.permute.xlu0 %851
    %v854 = vsub.f32 %v849, %v852
    %v857 = vunpack.c.l.s4 1983009808
    %v858 = vunpack.c.0.s8 %v857
    %v859 = vlaneseq
    %v860 = vshrl.u32 %v859, 7
    %v861 = vsub.s32 %v858, %v860
    %v862 = vrot.slane %v854, %v861
    %863 = vrot.lane.b32.xlu0 %v862, 64
    %v864 = vpop.permute.xlu0 %863
    %v866 = vmul.f32 %v772, %v864
    %v867 = vadd.f32 %v765, %v866
    %s868 = scalar_lea.vmem %s5, 14
    %869 = vst.msk [vmem:[%s868] sm:$0x3] %vm154, %v867
    %870 = vst.msk [vmem:[#allocation2] sm:$0x3] %vm154, %v867
    // Predicated region
    $region26: #{ep_gru_forward.5} parent=1 // pred_check
      %p871 = pneg %p24
    $region27: #{ep_gru_forward.5} parent=1 // pred_check_branch
      %873 = sbr.rel (%p871) target = $region29
    $region28: #{ep_gru_forward.5} parent=1 // pred_region
      %874 = vst.msk [vmem:[#allocation3] sm:$0x3] %vm154, %v867
    $region29: #{ep_gru_forward.5} parent=1 // pred_fallthru
      _
    // Predicated region
    $region30: #{ep_gru_forward.5} parent=1 // pred_check
      _
    $region31: #{ep_gru_forward.5} parent=1 // pred_check_branch
      %876 = sbr.rel (0) target = $region33
    $region32: #{ep_gru_forward.5} parent=1 // pred_region
      _
    $region33: #{ep_gru_forward.5} parent=1 // pred_fallthru
      _
    // Predicated region
    $region34: #{ep_gru_forward.5} parent=1 // pred_check
      _
    $region35: #{ep_gru_forward.5} parent=1 // pred_check_branch
      %878 = sbr.rel (0) target = $region37
    $region36: #{ep_gru_forward.5} parent=1 // pred_region
      %s880 = ssub.s32 32, 32
      %881 = vsyncadd [#allocation4], %s880
      %s883 = sshll.u32 [#allocation3], 4
      %s884 = int_to_ptr.vmem [resolvable:$true] %s883
      %886 = dma.vmem_to_hbm [thread:$0]  %s884, 32, %s6, [#allocation4]
    $region37: #{ep_gru_forward.5} parent=1 // pred_fallthru
      _
    // Predicated region
    $region38: #{ep_gru_forward.5} parent=1 // pred_check
      _
    $region39: #{ep_gru_forward.5} parent=1 // pred_check_branch
      %888 = sbr.rel (0) target = $region41
    $region40: #{ep_gru_forward.5} parent=1 // pred_region
      _
    $region41: #{ep_gru_forward.5} parent=1 // pred_fallthru
      _
    // Predicated region
    $region42: #{ep_gru_forward.5} parent=1 // pred_check
      _
    $region43: #{ep_gru_forward.5} parent=1 // pred_check_branch
      %890 = sbr.rel (0) target = $region45
    $region44: #{ep_gru_forward.5} parent=1 // pred_region
      %891 = dma.done [#allocation4], 32
    $region45: #{ep_gru_forward.5} parent=1 // pred_fallthru
      _
    %892 = vsyncpa [#allocation4], 1

// kernel: ep_gru_forward.7
$region0: #{ep_gru_forward.7}
  #allocation0 [shape = 'u32[]', space=smem, size = 0x4, offset = 0x4, fixed_abs, tag = 'smem constant byte address 0x4 - core index']
  #allocation1 [shape = 'u32[144,128]{1,0:T(1,128)}', space=vmem, size = 0x12000, scoped, tag = 'internal scratch']
  #allocation2 [shape = 'f32[2,32]{1,0:T(2,128)}', space=vmem, size = 0x400, scoped, tag = 'scratch operand']
  %s0 = inlined_call_operand.vmem [shape: f32[8,2,96], index: 0, kind: input, shape index: {}]
  %s1 = inlined_call_operand.vmem [shape: bf16[8,2,32], index: 1, kind: input, shape index: {}]
  %s2 = inlined_call_operand.vmem [shape: f32[2,32], index: 2, kind: input, shape index: {}]
  %s3 = inlined_call_operand.vmem [shape: bf16[32,96], index: 3, kind: input, shape index: {}]
  %s4 = inlined_call_operand.vmem [shape: f32[1,96], index: 4, kind: input, shape index: {}]
  %s5 = inlined_call_operand.hbm [shape: f32[8,2,32], index: 5, kind: output, shape index: {0}]
  %s6 = inlined_call_operand.hbm [shape: f32[2,32], index: 6, kind: output, shape index: {1}]
  %7 = xla_tuple %s5, %s6
  %s8 = sld [smem:[#allocation0]]
  $region46: #{ep_gru_forward.7} parent=0
    _
  %s10 = ssub.s32 1, %s8
  %s11 = scalar_select 0, %s10, %s8
  $region1: #{ep_gru_forward.7} parent=0
    #allocation3 [shape = 'u8[8192]{0}', space=vmem, size = 0x2000, scoped, tag = 'output window, operand 0, single buffered']
    #allocation4 [shape = 's32[1]{0}', space=sflag, size = 0x4, scoped, tag = 'scoped memory for ep_gru_forward.7']
    #allocation5 [shape = 'u8[1024]{0}', space=vmem, size = 0x400, scoped, tag = 'output window, operand 1, single buffered']
    #allocation6 [shape = 's32[1]{0}', space=sflag, size = 0x4, scoped, tag = 'scoped memory for ep_gru_forward.7']
    %12 = vsyncpa [#allocation4], 0
    %13 = vsyncpa [#allocation6], 0
    // Predicated region
    $region2: #{ep_gru_forward.7} parent=1 // pred_check
      _
    $region3: #{ep_gru_forward.7} parent=1 // pred_check_branch
      %15 = sbr.rel (0) target = $region5
    $region4: #{ep_gru_forward.7} parent=1 // pred_region
      _
    $region5: #{ep_gru_forward.7} parent=1 // pred_fallthru
      _
    // Predicated region
    $region6: #{ep_gru_forward.7} parent=1 // pred_check
      _
    $region7: #{ep_gru_forward.7} parent=1 // pred_check_branch
      %17 = sbr.rel (0) target = $region9
    $region8: #{ep_gru_forward.7} parent=1 // pred_region
      _
    $region9: #{ep_gru_forward.7} parent=1 // pred_fallthru
      _
    // Predicated region
    $region10: #{ep_gru_forward.7} parent=1 // pred_check
      _
    $region11: #{ep_gru_forward.7} parent=1 // pred_check_branch
      %19 = sbr.rel (0) target = $region13
    $region12: #{ep_gru_forward.7} parent=1 // pred_region
      _
    $region13: #{ep_gru_forward.7} parent=1 // pred_fallthru
      _
    // Predicated region
    $region14: #{ep_gru_forward.7} parent=1 // pred_check
      _
    $region15: #{ep_gru_forward.7} parent=1 // pred_check_branch
      %21 = sbr.rel (0) target = $region17
    $region16: #{ep_gru_forward.7} parent=1 // pred_region
      _
    $region17: #{ep_gru_forward.7} parent=1 // pred_fallthru
      _
    // Predicated region
    $region18: #{ep_gru_forward.7} parent=1 // pred_check
      _
    $region19: #{ep_gru_forward.7} parent=1 // pred_check_branch
      %23 = sbr.rel (0) target = $region21
    $region20: #{ep_gru_forward.7} parent=1 // pred_region
      _
    $region21: #{ep_gru_forward.7} parent=1 // pred_fallthru
      _
    %p25 = scmp.eq.s32.totalorder 0, 0
    // Predicated region
    $region22: #{ep_gru_forward.7} parent=1 // pred_check
      %p26 = pneg %p25
    $region23: #{ep_gru_forward.7} parent=1 // pred_check_branch
      %28 = sbr.rel (%p26) target = $region25
    $region24: #{ep_gru_forward.7} parent=1 // pred_region
      %v29 = vld [vmem:[%s2] sm:$0x3]
      %vm30 = vcmask 254976
      %31 = vst.msk [vmem:[#allocation2] sm:$0x3] %vm30, %v29
    $region25: #{ep_gru_forward.7} parent=1 // pred_fallthru
      _
    %v32 = vld [vmem:[%s3] sm:$0xf]
    %v33 = vld [vmem:[%s3 + $0x4] sm:$0xf]
    %v34 = vld [vmem:[%s3 + $0x8] sm:$0xf]
    %v35 = vld [vmem:[%s3 + $0xc] sm:$0xf]
    %v36 = vld [vmem:[%s4] sm:$0x1]
    %v37 = vld [vmem:[#allocation2] sm:$0x3]
    %v38 = vld [vmem:[%s0] sm:$0x3]
    %v39 = vld [vmem:[%s1] sm:$0x1]
    %v40 = vunpack.c.l.bf16 %v39
    %v41 = vpack.c.bf16 %v37, %v37
    %v43 = vlaneseq
    %v44 = vshrl.u32 %v43, 7
    %v45 = vsub.s32 0, %v44
    %v46 = vrot.slane %v36, %v45
    %v52 = vunpack.c.l.b16 %v32
    %v53 = vunpack.c.l.b16 %v33
    %v54 = vunpack.c.l.b16 %v34
    %v55 = vunpack.c.l.b16 %v35
    %v56 = vpack.c.b16 %v53, %v52
    %v57 = vpack.c.b16 %v55, %v54
    %vm60 = vcmask 261120
    %v62 = vsel %vm60, %v41, 0
    %64 = vmatprep.subr.bf16.mxu0 0
    %65 = vmatpush1.bf16.msra.mxu0 %v56
    %66 = vmatprep.subr.bf16.mxu0 0
    %67 = vmatpush1.bf16.msra.mxu0 %v57
    %68 = vmatprep.subr.bf16.mxu0 0
    %69 = vmatpush1.bf16.msra.mxu0 0
    %70 = vmatprep.subr.bf16.mxu0 0
    %71 = vmatpush1.bf16.msra.mxu0 0
    %72 = vmatprep.subr.bf16.mxu0 0
    %73 = vmatpush1.bf16.msra.mxu0 0
    %74 = vmatprep.subr.bf16.mxu0 0
    %75 = vmatpush1.bf16.msra.mxu0 0
    %76 = vmatprep.subr.bf16.mxu0 0
    %77 = vmatpush1.bf16.msra.mxu0 0
    %78 = vmatprep.subr.bf16.mxu0 0
    %79 = vmatpush1.bf16.msra.mxu0 0
    %80 = vmatprep.subr.bf16.mxu0 0
    %81 = vmatpush1.bf16.msra.mxu0 0
    %82 = vmatprep.subr.bf16.mxu0 0
    %83 = vmatpush1.bf16.msra.mxu0 0
    %84 = vmatprep.subr.bf16.mxu0 0
    %85 = vmatpush1.bf16.msra.mxu0 0
    %86 = vmatprep.subr.bf16.mxu0 0
    %87 = vmatpush1.bf16.msra.mxu0 0
    %88 = vmatprep.subr.bf16.mxu0 0
    %89 = vmatpush1.bf16.msra.mxu0 0
    %90 = vmatprep.subr.bf16.mxu0 0
    %91 = vmatpush1.bf16.msra.mxu0 0
    %92 = vmatprep.subr.bf16.mxu0 0
    %93 = vmatpush1.bf16.msra.mxu0 0
    %94 = vmatprep.subr.bf16.mxu0 0
    %95 = vmatpush1.bf16.msra.mxu0 0
    %96 = vmatprep.mubr.bf16.mxu0 0
    %97 = vmatmul.mubr.bf16.gmra.mrb[0].mxu0 %v62
    %v98 = vpop.f32.mrb[0].mxu0
    %v99 = vadd.f32 %v46, %v98
    %v100 = vpop.f32.mrb[0].mxu0
    %v101 = vpop.f32.mrb[0].mxu0
    %v102 = vpop.f32.mrb[0].mxu0
    %103 = vdwg.mxu0
    %v104 = vadd.f32 %v38, %v99
    %v105 = vxor.u32 %v104, 2147483648
    %v106 = vmul.f32 %v105, 1.442695
    %v107 = vpow.pop %v106
    %v108 = vadd.f32 %v107, 1.0
    %v109 = vrcp.pop %v108
    %v110 = vmul.f32 1.0, %v109
    %112 = vrot.lane.b32.xlu0 %v99, 64
    %v113 = vpop.permute.xlu0 %112
    %v115 = vmul.f32 %v110, %v113
    %117 = vrot.lane.b32.xlu0 %v115, 64
    %v118 = vpop.permute.xlu0 %117
    %v120 = vadd.f32 %v38, %v118
    %v121 = vtanh.pop %v120
    %123 = vrot.lane.b32.xlu0 %v121, 64
    %v124 = vpop.permute.xlu0 %123
    %v126 = vsub.f32 %v37, %v124
    %128 = vrot.lane.b32.xlu0 %v126, 32
    %v129 = vpop.permute.xlu0 %128
    %v131 = vmul.f32 %v110, %v129
    %133 = vrot.lane.b32.xlu0 %v131, 32
    %v134 = vpop.permute.xlu0 %133
    %v136 = vadd.f32 %v121, %v134
    %138 = vrot.lane.b32.xlu0 %v37, 64
    %v139 = vpop.permute.xlu0 %138
    %v141 = vsub.f32 %v136, %v139
    %v144 = vunpack.c.l.s4 1983009808
    %v145 = vunpack.c.0.s8 %v144
    %v146 = vlaneseq
    %v147 = vshrl.u32 %v146, 7
    %v148 = vsub.s32 %v145, %v147
    %v149 = vrot.slane %v141, %v148
    %150 = vrot.lane.b32.xlu0 %v149, 64
    %v151 = vpop.permute.xlu0 %150
    %v153 = vmul.f32 %v40, %v151
    %v154 = vadd.f32 %v37, %v153
    %vm155 = vcmask 254976
    %156 = vst.msk [vmem:[#allocation3] sm:$0x3] %vm155, %v154
    %s157 = scalar_lea.vmem %s0, 2
    %v158 = vld [vmem:[%s157] sm:$0x3]
    %s159 = scalar_lea.vmem %s1, 1
    %v160 = vld [vmem:[%s159] sm:$0x1]
    %v161 = vunpack.c.l.bf16 %v160
    %v162 = vpack.c.bf16 %v154, %v154
    %v164 = vsel %vm60, %v162, 0
    %166 = vmatprep.subr.bf16.mxu0 0
    %167 = vmatpush1.bf16.msra.mxu0 %v56
    %168 = vmatprep.subr.bf16.mxu0 0
    %169 = vmatpush1.bf16.msra.mxu0 %v57
    %170 = vmatprep.subr.bf16.mxu0 0
    %171 = vmatpush1.bf16.msra.mxu0 0
    %172 = vmatprep.subr.bf16.mxu0 0
    %173 = vmatpush1.bf16.msra.mxu0 0
    %174 = vmatprep.subr.bf16.mxu0 0
    %175 = vmatpush1.bf16.msra.mxu0 0
    %176 = vmatprep.subr.bf16.mxu0 0
    %177 = vmatpush1.bf16.msra.mxu0 0
    %178 = vmatprep.subr.bf16.mxu0 0
    %179 = vmatpush1.bf16.msra.mxu0 0
    %180 = vmatprep.subr.bf16.mxu0 0
    %181 = vmatpush1.bf16.msra.mxu0 0
    %182 = vmatprep.subr.bf16.mxu0 0
    %183 = vmatpush1.bf16.msra.mxu0 0
    %184 = vmatprep.subr.bf16.mxu0 0
    %185 = vmatpush1.bf16.msra.mxu0 0
    %186 = vmatprep.subr.bf16.mxu0 0
    %187 = vmatpush1.bf16.msra.mxu0 0
    %188 = vmatprep.subr.bf16.mxu0 0
    %189 = vmatpush1.bf16.msra.mxu0 0
    %190 = vmatprep.subr.bf16.mxu0 0
    %191 = vmatpush1.bf16.msra.mxu0 0
    %192 = vmatprep.subr.bf16.mxu0 0
    %193 = vmatpush1.bf16.msra.mxu0 0
    %194 = vmatprep.subr.bf16.mxu0 0
    %195 = vmatpush1.bf16.msra.mxu0 0
    %196 = vmatprep.subr.bf16.mxu0 0
    %197 = vmatpush1.bf16.msra.mxu0 0
    %198 = vmatprep.mubr.bf16.mxu0 0
    %199 = vmatmul.mubr.bf16.gmra.mrb[0].mxu0 %v164
    %v200 = vpop.f32.mrb[0].mxu0
    %v201 = vadd.f32 %v46, %v200
    %v202 = vpop.f32.mrb[0].mxu0
    %v203 = vpop.f32.mrb[0].mxu0
    %v204 = vpop.f32.mrb[0].mxu0
    %205 = vdwg.mxu0
    %v206 = vadd.f32 %v158, %v201
    %v207 = vxor.u32 %v206, 2147483648
    %v208 = vmul.f32 %v207, 1.442695
    %v209 = vpow.pop %v208
    %v210 = vadd.f32 %v209, 1.0
    %v211 = vrcp.pop %v210
    %v212 = vmul.f32 1.0, %v211
    %214 = vrot.lane.b32.xlu0 %v201, 64
    %v215 = vpop.permute.xlu0 %214
    %v217 = vmul.f32 %v212, %v215
    %219 = vrot.lane.b32.xlu0 %v217, 64
    %v220 = vpop.permute.xlu0 %219
    %v222 = vadd.f32 %v158, %v220
    %v223 = vtanh.pop %v222
    %225 = vrot.lane.b32.xlu0 %v223, 64
    %v226 = vpop.permute.xlu0 %225
    %v228 = vsub.f32 %v154, %v226
    %230 = vrot.lane.b32.xlu0 %v228, 32
    %v231 = vpop.permute.xlu0 %230
    %v233 = vmul.f32 %v212, %v231
    %235 = vrot.lane.b32.xlu0 %v233, 32
    %v236 = vpop.permute.xlu0 %235
    %v238 = vadd.f32 %v223, %v236
    %240 = vrot.lane.b32.xlu0 %v154, 64
    %v241 = vpop.permute.xlu0 %240
    %v243 = vsub.f32 %v238, %v241
    %v246 = vunpack.c.l.s4 1983009808
    %v247 = vunpack.c.0.s8 %v246
    %v248 = vlaneseq
    %v249 = vshrl.u32 %v248, 7
    %v250 = vsub.s32 %v247, %v249
    %v251 = vrot.slane %v243, %v250
    %252 = vrot.lane.b32.xlu0 %v251, 64
    %v253 = vpop.permute.xlu0 %252
    %v255 = vmul.f32 %v161, %v253
    %v256 = vadd.f32 %v154, %v255
    %s257 = scalar_lea.vmem [#allocation3], 2
    %258 = vst.msk [vmem:[%s257] sm:$0x3] %vm155, %v256
    %s259 = scalar_lea.vmem %s0, 4
    %v260 = vld [vmem:[%s259] sm:$0x3]
    %s261 = scalar_lea.vmem %s1, 2
    %v262 = vld [vmem:[%s261] sm:$0x1]
    %v263 = vunpack.c.l.bf16 %v262
    %v264 = vpack.c.bf16 %v256, %v256
    %v266 = vsel %vm60, %v264, 0
    %268 = vmatprep.subr.bf16.mxu0 0
    %269 = vmatpush1.bf16.msra.mxu0 %v56
    %270 = vmatprep.subr.bf16.mxu0 0
    %271 = vmatpush1.bf16.msra.mxu0 %v57
    %272 = vmatprep.subr.bf16.mxu0 0
    %273 = vmatpush1.bf16.msra.mxu0 0
    %274 = vmatprep.subr.bf16.mxu0 0
    %275 = vmatpush1.bf16.msra.mxu0 0
    %276 = vmatprep.subr.bf16.mxu0 0
    %277 = vmatpush1.bf16.msra.mxu0 0
    %278 = vmatprep.subr.bf16.mxu0 0
    %279 = vmatpush1.bf16.msra.mxu0 0
    %280 = vmatprep.subr.bf16.mxu0 0
    %281 = vmatpush1.bf16.msra.mxu0 0
    %282 = vmatprep.subr.bf16.mxu0 0
    %283 = vmatpush1.bf16.msra.mxu0 0
    %284 = vmatprep.subr.bf16.mxu0 0
    %285 = vmatpush1.bf16.msra.mxu0 0
    %286 = vmatprep.subr.bf16.mxu0 0
    %287 = vmatpush1.bf16.msra.mxu0 0
    %288 = vmatprep.subr.bf16.mxu0 0
    %289 = vmatpush1.bf16.msra.mxu0 0
    %290 = vmatprep.subr.bf16.mxu0 0
    %291 = vmatpush1.bf16.msra.mxu0 0
    %292 = vmatprep.subr.bf16.mxu0 0
    %293 = vmatpush1.bf16.msra.mxu0 0
    %294 = vmatprep.subr.bf16.mxu0 0
    %295 = vmatpush1.bf16.msra.mxu0 0
    %296 = vmatprep.subr.bf16.mxu0 0
    %297 = vmatpush1.bf16.msra.mxu0 0
    %298 = vmatprep.subr.bf16.mxu0 0
    %299 = vmatpush1.bf16.msra.mxu0 0
    %300 = vmatprep.mubr.bf16.mxu0 0
    %301 = vmatmul.mubr.bf16.gmra.mrb[0].mxu0 %v266
    %v302 = vpop.f32.mrb[0].mxu0
    %v303 = vadd.f32 %v46, %v302
    %v304 = vpop.f32.mrb[0].mxu0
    %v305 = vpop.f32.mrb[0].mxu0
    %v306 = vpop.f32.mrb[0].mxu0
    %307 = vdwg.mxu0
    %v308 = vadd.f32 %v260, %v303
    %v309 = vxor.u32 %v308, 2147483648
    %v310 = vmul.f32 %v309, 1.442695
    %v311 = vpow.pop %v310
    %v312 = vadd.f32 %v311, 1.0
    %v313 = vrcp.pop %v312
    %v314 = vmul.f32 1.0, %v313
    %316 = vrot.lane.b32.xlu0 %v303, 64
    %v317 = vpop.permute.xlu0 %316
    %v319 = vmul.f32 %v314, %v317
    %321 = vrot.lane.b32.xlu0 %v319, 64
    %v322 = vpop.permute.xlu0 %321
    %v324 = vadd.f32 %v260, %v322
    %v325 = vtanh.pop %v324
    %327 = vrot.lane.b32.xlu0 %v325, 64
    %v328 = vpop.permute.xlu0 %327
    %v330 = vsub.f32 %v256, %v328
    %332 = vrot.lane.b32.xlu0 %v330, 32
    %v333 = vpop.permute.xlu0 %332
    %v335 = vmul.f32 %v314, %v333
    %337 = vrot.lane.b32.xlu0 %v335, 32
    %v338 = vpop.permute.xlu0 %337
    %v340 = vadd.f32 %v325, %v338
    %342 = vrot.lane.b32.xlu0 %v256, 64
    %v343 = vpop.permute.xlu0 %342
    %v345 = vsub.f32 %v340, %v343
    %v348 = vunpack.c.l.s4 1983009808
    %v349 = vunpack.c.0.s8 %v348
    %v350 = vlaneseq
    %v351 = vshrl.u32 %v350, 7
    %v352 = vsub.s32 %v349, %v351
    %v353 = vrot.slane %v345, %v352
    %354 = vrot.lane.b32.xlu0 %v353, 64
    %v355 = vpop.permute.xlu0 %354
    %v357 = vmul.f32 %v263, %v355
    %v358 = vadd.f32 %v256, %v357
    %s359 = scalar_lea.vmem [#allocation3], 4
    %360 = vst.msk [vmem:[%s359] sm:$0x3] %vm155, %v358
    %s361 = scalar_lea.vmem %s0, 6
    %v362 = vld [vmem:[%s361] sm:$0x3]
    %s363 = scalar_lea.vmem %s1, 3
    %v364 = vld [vmem:[%s363] sm:$0x1]
    %v365 = vunpack.c.l.bf16 %v364
    %v366 = vpack.c.bf16 %v358, %v358
    %v368 = vsel %vm60, %v366, 0
    %370 = vmatprep.subr.bf16.mxu0 0
    %371 = vmatpush1.bf16.msra.mxu0 %v56
    %372 = vmatprep.subr.bf16.mxu0 0
    %373 = vmatpush1.bf16.msra.mxu0 %v57
    %374 = vmatprep.subr.bf16.mxu0 0
    %375 = vmatpush1.bf16.msra.mxu0 0
    %376 = vmatprep.subr.bf16.mxu0 0
    %377 = vmatpush1.bf16.msra.mxu0 0
    %378 = vmatprep.subr.bf16.mxu0 0
    %379 = vmatpush1.bf16.msra.mxu0 0
    %380 = vmatprep.subr.bf16.mxu0 0
    %381 = vmatpush1.bf16.msra.mxu0 0
    %382 = vmatprep.subr.bf16.mxu0 0
    %383 = vmatpush1.bf16.msra.mxu0 0
    %384 = vmatprep.subr.bf16.mxu0 0
    %385 = vmatpush1.bf16.msra.mxu0 0
    %386 = vmatprep.subr.bf16.mxu0 0
    %387 = vmatpush1.bf16.msra.mxu0 0
    %388 = vmatprep.subr.bf16.mxu0 0
    %389 = vmatpush1.bf16.msra.mxu0 0
    %390 = vmatprep.subr.bf16.mxu0 0
    %391 = vmatpush1.bf16.msra.mxu0 0
    %392 = vmatprep.subr.bf16.mxu0 0
    %393 = vmatpush1.bf16.msra.mxu0 0
    %394 = vmatprep.subr.bf16.mxu0 0
    %395 = vmatpush1.bf16.msra.mxu0 0
    %396 = vmatprep.subr.bf16.mxu0 0
    %397 = vmatpush1.bf16.msra.mxu0 0
    %398 = vmatprep.subr.bf16.mxu0 0
    %399 = vmatpush1.bf16.msra.mxu0 0
    %400 = vmatprep.subr.bf16.mxu0 0
    %401 = vmatpush1.bf16.msra.mxu0 0
    %402 = vmatprep.mubr.bf16.mxu0 0
    %403 = vmatmul.mubr.bf16.gmra.mrb[0].mxu0 %v368
    %v404 = vpop.f32.mrb[0].mxu0
    %v405 = vadd.f32 %v46, %v404
    %v406 = vpop.f32.mrb[0].mxu0
    %v407 = vpop.f32.mrb[0].mxu0
    %v408 = vpop.f32.mrb[0].mxu0
    %409 = vdwg.mxu0
    %v410 = vadd.f32 %v362, %v405
    %v411 = vxor.u32 %v410, 2147483648
    %v412 = vmul.f32 %v411, 1.442695
    %v413 = vpow.pop %v412
    %v414 = vadd.f32 %v413, 1.0
    %v415 = vrcp.pop %v414
    %v416 = vmul.f32 1.0, %v415
    %418 = vrot.lane.b32.xlu0 %v405, 64
    %v419 = vpop.permute.xlu0 %418
    %v421 = vmul.f32 %v416, %v419
    %423 = vrot.lane.b32.xlu0 %v421, 64
    %v424 = vpop.permute.xlu0 %423
    %v426 = vadd.f32 %v362, %v424
    %v427 = vtanh.pop %v426
    %429 = vrot.lane.b32.xlu0 %v427, 64
    %v430 = vpop.permute.xlu0 %429
    %v432 = vsub.f32 %v358, %v430
    %434 = vrot.lane.b32.xlu0 %v432, 32
    %v435 = vpop.permute.xlu0 %434
    %v437 = vmul.f32 %v416, %v435
    %439 = vrot.lane.b32.xlu0 %v437, 32
    %v440 = vpop.permute.xlu0 %439
    %v442 = vadd.f32 %v427, %v440
    %444 = vrot.lane.b32.xlu0 %v358, 64
    %v445 = vpop.permute.xlu0 %444
    %v447 = vsub.f32 %v442, %v445
    %v450 = vunpack.c.l.s4 1983009808
    %v451 = vunpack.c.0.s8 %v450
    %v452 = vlaneseq
    %v453 = vshrl.u32 %v452, 7
    %v454 = vsub.s32 %v451, %v453
    %v455 = vrot.slane %v447, %v454
    %456 = vrot.lane.b32.xlu0 %v455, 64
    %v457 = vpop.permute.xlu0 %456
    %v459 = vmul.f32 %v365, %v457
    %v460 = vadd.f32 %v358, %v459
    %s461 = scalar_lea.vmem [#allocation3], 6
    %462 = vst.msk [vmem:[%s461] sm:$0x3] %vm155, %v460
    %s463 = scalar_lea.vmem %s0, 8
    %v464 = vld [vmem:[%s463] sm:$0x3]
    %s465 = scalar_lea.vmem %s1, 4
    %v466 = vld [vmem:[%s465] sm:$0x1]
    %v467 = vunpack.c.l.bf16 %v466
    %v468 = vpack.c.bf16 %v460, %v460
    %v470 = vsel %vm60, %v468, 0
    %472 = vmatprep.subr.bf16.mxu0 0
    %473 = vmatpush1.bf16.msra.mxu0 %v56
    %474 = vmatprep.subr.bf16.mxu0 0
    %475 = vmatpush1.bf16.msra.mxu0 %v57
    %476 = vmatprep.subr.bf16.mxu0 0
    %477 = vmatpush1.bf16.msra.mxu0 0
    %478 = vmatprep.subr.bf16.mxu0 0
    %479 = vmatpush1.bf16.msra.mxu0 0
    %480 = vmatprep.subr.bf16.mxu0 0
    %481 = vmatpush1.bf16.msra.mxu0 0
    %482 = vmatprep.subr.bf16.mxu0 0
    %483 = vmatpush1.bf16.msra.mxu0 0
    %484 = vmatprep.subr.bf16.mxu0 0
    %485 = vmatpush1.bf16.msra.mxu0 0
    %486 = vmatprep.subr.bf16.mxu0 0
    %487 = vmatpush1.bf16.msra.mxu0 0
    %488 = vmatprep.subr.bf16.mxu0 0
    %489 = vmatpush1.bf16.msra.mxu0 0
    %490 = vmatprep.subr.bf16.mxu0 0
    %491 = vmatpush1.bf16.msra.mxu0 0
    %492 = vmatprep.subr.bf16.mxu0 0
    %493 = vmatpush1.bf16.msra.mxu0 0
    %494 = vmatprep.subr.bf16.mxu0 0
    %495 = vmatpush1.bf16.msra.mxu0 0
    %496 = vmatprep.subr.bf16.mxu0 0
    %497 = vmatpush1.bf16.msra.mxu0 0
    %498 = vmatprep.subr.bf16.mxu0 0
    %499 = vmatpush1.bf16.msra.mxu0 0
    %500 = vmatprep.subr.bf16.mxu0 0
    %501 = vmatpush1.bf16.msra.mxu0 0
    %502 = vmatprep.subr.bf16.mxu0 0
    %503 = vmatpush1.bf16.msra.mxu0 0
    %504 = vmatprep.mubr.bf16.mxu0 0
    %505 = vmatmul.mubr.bf16.gmra.mrb[0].mxu0 %v470
    %v506 = vpop.f32.mrb[0].mxu0
    %v507 = vadd.f32 %v46, %v506
    %v508 = vpop.f32.mrb[0].mxu0
    %v509 = vpop.f32.mrb[0].mxu0
    %v510 = vpop.f32.mrb[0].mxu0
    %511 = vdwg.mxu0
    %v512 = vadd.f32 %v464, %v507
    %v513 = vxor.u32 %v512, 2147483648
    %v514 = vmul.f32 %v513, 1.442695
    %v515 = vpow.pop %v514
    %v516 = vadd.f32 %v515, 1.0
    %v517 = vrcp.pop %v516
    %v518 = vmul.f32 1.0, %v517
    %520 = vrot.lane.b32.xlu0 %v507, 64
    %v521 = vpop.permute.xlu0 %520
    %v523 = vmul.f32 %v518, %v521
    %525 = vrot.lane.b32.xlu0 %v523, 64
    %v526 = vpop.permute.xlu0 %525
    %v528 = vadd.f32 %v464, %v526
    %v529 = vtanh.pop %v528
    %531 = vrot.lane.b32.xlu0 %v529, 64
    %v532 = vpop.permute.xlu0 %531
    %v534 = vsub.f32 %v460, %v532
    %536 = vrot.lane.b32.xlu0 %v534, 32
    %v537 = vpop.permute.xlu0 %536
    %v539 = vmul.f32 %v518, %v537
    %541 = vrot.lane.b32.xlu0 %v539, 32
    %v542 = vpop.permute.xlu0 %541
    %v544 = vadd.f32 %v529, %v542
    %546 = vrot.lane.b32.xlu0 %v460, 64
    %v547 = vpop.permute.xlu0 %546
    %v549 = vsub.f32 %v544, %v547
    %v552 = vunpack.c.l.s4 1983009808
    %v553 = vunpack.c.0.s8 %v552
    %v554 = vlaneseq
    %v555 = vshrl.u32 %v554, 7
    %v556 = vsub.s32 %v553, %v555
    %v557 = vrot.slane %v549, %v556
    %558 = vrot.lane.b32.xlu0 %v557, 64
    %v559 = vpop.permute.xlu0 %558
    %v561 = vmul.f32 %v467, %v559
    %v562 = vadd.f32 %v460, %v561
    %s563 = scalar_lea.vmem [#allocation3], 8
    %564 = vst.msk [vmem:[%s563] sm:$0x3] %vm155, %v562
    %s565 = scalar_lea.vmem %s0, 10
    %v566 = vld [vmem:[%s565] sm:$0x3]
    %s567 = scalar_lea.vmem %s1, 5
    %v568 = vld [vmem:[%s567] sm:$0x1]
    %v569 = vunpack.c.l.bf16 %v568
    %v570 = vpack.c.bf16 %v562, %v562
    %v572 = vsel %vm60, %v570, 0
    %574 = vmatprep.subr.bf16.mxu0 0
    %575 = vmatpush1.bf16.msra.mxu0 %v56
    %576 = vmatprep.subr.bf16.mxu0 0
    %577 = vmatpush1.bf16.msra.mxu0 %v57
    %578 = vmatprep.subr.bf16.mxu0 0
    %579 = vmatpush1.bf16.msra.mxu0 0
    %580 = vmatprep.subr.bf16.mxu0 0
    %581 = vmatpush1.bf16.msra.mxu0 0
    %582 = vmatprep.subr.bf16.mxu0 0
    %583 = vmatpush1.bf16.msra.mxu0 0
    %584 = vmatprep.subr.bf16.mxu0 0
    %585 = vmatpush1.bf16.msra.mxu0 0
    %586 = vmatprep.subr.bf16.mxu0 0
    %587 = vmatpush1.bf16.msra.mxu0 0
    %588 = vmatprep.subr.bf16.mxu0 0
    %589 = vmatpush1.bf16.msra.mxu0 0
    %590 = vmatprep.subr.bf16.mxu0 0
    %591 = vmatpush1.bf16.msra.mxu0 0
    %592 = vmatprep.subr.bf16.mxu0 0
    %593 = vmatpush1.bf16.msra.mxu0 0
    %594 = vmatprep.subr.bf16.mxu0 0
    %595 = vmatpush1.bf16.msra.mxu0 0
    %596 = vmatprep.subr.bf16.mxu0 0
    %597 = vmatpush1.bf16.msra.mxu0 0
    %598 = vmatprep.subr.bf16.mxu0 0
    %599 = vmatpush1.bf16.msra.mxu0 0
    %600 = vmatprep.subr.bf16.mxu0 0
    %601 = vmatpush1.bf16.msra.mxu0 0
    %602 = vmatprep.subr.bf16.mxu0 0
    %603 = vmatpush1.bf16.msra.mxu0 0
    %604 = vmatprep.subr.bf16.mxu0 0
    %605 = vmatpush1.bf16.msra.mxu0 0
    %606 = vmatprep.mubr.bf16.mxu0 0
    %607 = vmatmul.mubr.bf16.gmra.mrb[0].mxu0 %v572
    %v608 = vpop.f32.mrb[0].mxu0
    %v609 = vadd.f32 %v46, %v608
    %v610 = vpop.f32.mrb[0].mxu0
    %v611 = vpop.f32.mrb[0].mxu0
    %v612 = vpop.f32.mrb[0].mxu0
    %613 = vdwg.mxu0
    %v614 = vadd.f32 %v566, %v609
    %v615 = vxor.u32 %v614, 2147483648
    %v616 = vmul.f32 %v615, 1.442695
    %v617 = vpow.pop %v616
    %v618 = vadd.f32 %v617, 1.0
    %v619 = vrcp.pop %v618
    %v620 = vmul.f32 1.0, %v619
    %622 = vrot.lane.b32.xlu0 %v609, 64
    %v623 = vpop.permute.xlu0 %622
    %v625 = vmul.f32 %v620, %v623
    %627 = vrot.lane.b32.xlu0 %v625, 64
    %v628 = vpop.permute.xlu0 %627
    %v630 = vadd.f32 %v566, %v628
    %v631 = vtanh.pop %v630
    %633 = vrot.lane.b32.xlu0 %v631, 64
    %v634 = vpop.permute.xlu0 %633
    %v636 = vsub.f32 %v562, %v634
    %638 = vrot.lane.b32.xlu0 %v636, 32
    %v639 = vpop.permute.xlu0 %638
    %v641 = vmul.f32 %v620, %v639
    %643 = vrot.lane.b32.xlu0 %v641, 32
    %v644 = vpop.permute.xlu0 %643
    %v646 = vadd.f32 %v631, %v644
    %648 = vrot.lane.b32.xlu0 %v562, 64
    %v649 = vpop.permute.xlu0 %648
    %v651 = vsub.f32 %v646, %v649
    %v654 = vunpack.c.l.s4 1983009808
    %v655 = vunpack.c.0.s8 %v654
    %v656 = vlaneseq
    %v657 = vshrl.u32 %v656, 7
    %v658 = vsub.s32 %v655, %v657
    %v659 = vrot.slane %v651, %v658
    %660 = vrot.lane.b32.xlu0 %v659, 64
    %v661 = vpop.permute.xlu0 %660
    %v663 = vmul.f32 %v569, %v661
    %v664 = vadd.f32 %v562, %v663
    %s665 = scalar_lea.vmem [#allocation3], 10
    %666 = vst.msk [vmem:[%s665] sm:$0x3] %vm155, %v664
    %s667 = scalar_lea.vmem %s0, 12
    %v668 = vld [vmem:[%s667] sm:$0x3]
    %s669 = scalar_lea.vmem %s1, 6
    %v670 = vld [vmem:[%s669] sm:$0x1]
    %v671 = vunpack.c.l.bf16 %v670
    %v672 = vpack.c.bf16 %v664, %v664
    %v674 = vsel %vm60, %v672, 0
    %676 = vmatprep.subr.bf16.mxu0 0
    %677 = vmatpush1.bf16.msra.mxu0 %v56
    %678 = vmatprep.subr.bf16.mxu0 0
    %679 = vmatpush1.bf16.msra.mxu0 %v57
    %680 = vmatprep.subr.bf16.mxu0 0
    %681 = vmatpush1.bf16.msra.mxu0 0
    %682 = vmatprep.subr.bf16.mxu0 0
    %683 = vmatpush1.bf16.msra.mxu0 0
    %684 = vmatprep.subr.bf16.mxu0 0
    %685 = vmatpush1.bf16.msra.mxu0 0
    %686 = vmatprep.subr.bf16.mxu0 0
    %687 = vmatpush1.bf16.msra.mxu0 0
    %688 = vmatprep.subr.bf16.mxu0 0
    %689 = vmatpush1.bf16.msra.mxu0 0
    %690 = vmatprep.subr.bf16.mxu0 0
    %691 = vmatpush1.bf16.msra.mxu0 0
    %692 = vmatprep.subr.bf16.mxu0 0
    %693 = vmatpush1.bf16.msra.mxu0 0
    %694 = vmatprep.subr.bf16.mxu0 0
    %695 = vmatpush1.bf16.msra.mxu0 0
    %696 = vmatprep.subr.bf16.mxu0 0
    %697 = vmatpush1.bf16.msra.mxu0 0
    %698 = vmatprep.subr.bf16.mxu0 0
    %699 = vmatpush1.bf16.msra.mxu0 0
    %700 = vmatprep.subr.bf16.mxu0 0
    %701 = vmatpush1.bf16.msra.mxu0 0
    %702 = vmatprep.subr.bf16.mxu0 0
    %703 = vmatpush1.bf16.msra.mxu0 0
    %704 = vmatprep.subr.bf16.mxu0 0
    %705 = vmatpush1.bf16.msra.mxu0 0
    %706 = vmatprep.subr.bf16.mxu0 0
    %707 = vmatpush1.bf16.msra.mxu0 0
    %708 = vmatprep.mubr.bf16.mxu0 0
    %709 = vmatmul.mubr.bf16.gmra.mrb[0].mxu0 %v674
    %v710 = vpop.f32.mrb[0].mxu0
    %v711 = vadd.f32 %v46, %v710
    %v712 = vpop.f32.mrb[0].mxu0
    %v713 = vpop.f32.mrb[0].mxu0
    %v714 = vpop.f32.mrb[0].mxu0
    %715 = vdwg.mxu0
    %v716 = vadd.f32 %v668, %v711
    %v717 = vxor.u32 %v716, 2147483648
    %v718 = vmul.f32 %v717, 1.442695
    %v719 = vpow.pop %v718
    %v720 = vadd.f32 %v719, 1.0
    %v721 = vrcp.pop %v720
    %v722 = vmul.f32 1.0, %v721
    %724 = vrot.lane.b32.xlu0 %v711, 64
    %v725 = vpop.permute.xlu0 %724
    %v727 = vmul.f32 %v722, %v725
    %729 = vrot.lane.b32.xlu0 %v727, 64
    %v730 = vpop.permute.xlu0 %729
    %v732 = vadd.f32 %v668, %v730
    %v733 = vtanh.pop %v732
    %735 = vrot.lane.b32.xlu0 %v733, 64
    %v736 = vpop.permute.xlu0 %735
    %v738 = vsub.f32 %v664, %v736
    %740 = vrot.lane.b32.xlu0 %v738, 32
    %v741 = vpop.permute.xlu0 %740
    %v743 = vmul.f32 %v722, %v741
    %745 = vrot.lane.b32.xlu0 %v743, 32
    %v746 = vpop.permute.xlu0 %745
    %v748 = vadd.f32 %v733, %v746
    %750 = vrot.lane.b32.xlu0 %v664, 64
    %v751 = vpop.permute.xlu0 %750
    %v753 = vsub.f32 %v748, %v751
    %v756 = vunpack.c.l.s4 1983009808
    %v757 = vunpack.c.0.s8 %v756
    %v758 = vlaneseq
    %v759 = vshrl.u32 %v758, 7
    %v760 = vsub.s32 %v757, %v759
    %v761 = vrot.slane %v753, %v760
    %762 = vrot.lane.b32.xlu0 %v761, 64
    %v763 = vpop.permute.xlu0 %762
    %v765 = vmul.f32 %v671, %v763
    %v766 = vadd.f32 %v664, %v765
    %s767 = scalar_lea.vmem [#allocation3], 12
    %768 = vst.msk [vmem:[%s767] sm:$0x3] %vm155, %v766
    %s769 = scalar_lea.vmem %s0, 14
    %v770 = vld [vmem:[%s769] sm:$0x3]
    %s771 = scalar_lea.vmem %s1, 7
    %v772 = vld [vmem:[%s771] sm:$0x1]
    %v773 = vunpack.c.l.bf16 %v772
    %v774 = vpack.c.bf16 %v766, %v766
    %v776 = vsel %vm60, %v774, 0
    %778 = vmatprep.subr.bf16.mxu0 0
    %779 = vmatpush1.bf16.msra.mxu0 %v56
    %780 = vmatprep.subr.bf16.mxu0 0
    %781 = vmatpush1.bf16.msra.mxu0 %v57
    %782 = vmatprep.subr.bf16.mxu0 0
    %783 = vmatpush1.bf16.msra.mxu0 0
    %784 = vmatprep.subr.bf16.mxu0 0
    %785 = vmatpush1.bf16.msra.mxu0 0
    %786 = vmatprep.subr.bf16.mxu0 0
    %787 = vmatpush1.bf16.msra.mxu0 0
    %788 = vmatprep.subr.bf16.mxu0 0
    %789 = vmatpush1.bf16.msra.mxu0 0
    %790 = vmatprep.subr.bf16.mxu0 0
    %791 = vmatpush1.bf16.msra.mxu0 0
    %792 = vmatprep.subr.bf16.mxu0 0
    %793 = vmatpush1.bf16.msra.mxu0 0
    %794 = vmatprep.subr.bf16.mxu0 0
    %795 = vmatpush1.bf16.msra.mxu0 0
    %796 = vmatprep.subr.bf16.mxu0 0
    %797 = vmatpush1.bf16.msra.mxu0 0
    %798 = vmatprep.subr.bf16.mxu0 0
    %799 = vmatpush1.bf16.msra.mxu0 0
    %800 = vmatprep.subr.bf16.mxu0 0
    %801 = vmatpush1.bf16.msra.mxu0 0
    %802 = vmatprep.subr.bf16.mxu0 0
    %803 = vmatpush1.bf16.msra.mxu0 0
    %804 = vmatprep.subr.bf16.mxu0 0
    %805 = vmatpush1.bf16.msra.mxu0 0
    %806 = vmatprep.subr.bf16.mxu0 0
    %807 = vmatpush1.bf16.msra.mxu0 0
    %808 = vmatprep.subr.bf16.mxu0 0
    %809 = vmatpush1.bf16.msra.mxu0 0
    %810 = vmatprep.mubr.bf16.mxu0 0
    %811 = vmatmul.mubr.bf16.gmra.mrb[0].mxu0 %v776
    %v812 = vpop.f32.mrb[0].mxu0
    %v813 = vadd.f32 %v46, %v812
    %v814 = vpop.f32.mrb[0].mxu0
    %v815 = vpop.f32.mrb[0].mxu0
    %v816 = vpop.f32.mrb[0].mxu0
    %817 = vdwg.mxu0
    %v818 = vadd.f32 %v770, %v813
    %v819 = vxor.u32 %v818, 2147483648
    %v820 = vmul.f32 %v819, 1.442695
    %v821 = vpow.pop %v820
    %v822 = vadd.f32 %v821, 1.0
    %v823 = vrcp.pop %v822
    %v824 = vmul.f32 1.0, %v823
    %826 = vrot.lane.b32.xlu0 %v813, 64
    %v827 = vpop.permute.xlu0 %826
    %v829 = vmul.f32 %v824, %v827
    %831 = vrot.lane.b32.xlu0 %v829, 64
    %v832 = vpop.permute.xlu0 %831
    %v834 = vadd.f32 %v770, %v832
    %v835 = vtanh.pop %v834
    %837 = vrot.lane.b32.xlu0 %v835, 64
    %v838 = vpop.permute.xlu0 %837
    %v840 = vsub.f32 %v766, %v838
    %842 = vrot.lane.b32.xlu0 %v840, 32
    %v843 = vpop.permute.xlu0 %842
    %v845 = vmul.f32 %v824, %v843
    %847 = vrot.lane.b32.xlu0 %v845, 32
    %v848 = vpop.permute.xlu0 %847
    %v850 = vadd.f32 %v835, %v848
    %852 = vrot.lane.b32.xlu0 %v766, 64
    %v853 = vpop.permute.xlu0 %852
    %v855 = vsub.f32 %v850, %v853
    %v858 = vunpack.c.l.s4 1983009808
    %v859 = vunpack.c.0.s8 %v858
    %v860 = vlaneseq
    %v861 = vshrl.u32 %v860, 7
    %v862 = vsub.s32 %v859, %v861
    %v863 = vrot.slane %v855, %v862
    %864 = vrot.lane.b32.xlu0 %v863, 64
    %v865 = vpop.permute.xlu0 %864
    %v867 = vmul.f32 %v773, %v865
    %v868 = vadd.f32 %v766, %v867
    %s869 = scalar_lea.vmem [#allocation3], 14
    %870 = vst.msk [vmem:[%s869] sm:$0x3] %vm155, %v868
    %871 = vst.msk [vmem:[#allocation2] sm:$0x3] %vm155, %v868
    // Predicated region
    $region26: #{ep_gru_forward.7} parent=1 // pred_check
      %p872 = pneg %p25
    $region27: #{ep_gru_forward.7} parent=1 // pred_check_branch
      %874 = sbr.rel (%p872) target = $region29
    $region28: #{ep_gru_forward.7} parent=1 // pred_region
      %875 = vst.msk [vmem:[#allocation5] sm:$0x3] %vm155, %v868
    $region29: #{ep_gru_forward.7} parent=1 // pred_fallthru
      _
    // Predicated region
    $region30: #{ep_gru_forward.7} parent=1 // pred_check
      _
    $region31: #{ep_gru_forward.7} parent=1 // pred_check_branch
      %877 = sbr.rel (0) target = $region33
    $region32: #{ep_gru_forward.7} parent=1 // pred_region
      %s879 = ssub.s32 256, 256
      %880 = vsyncadd [#allocation4], %s879
      %s881 = sshll.u32 [#allocation3], 4
      %s882 = int_to_ptr.vmem [resolvable:$true] %s881
      %887 = dma.vmem_to_hbm [thread:$0]  %s882, 256, %s5, [#allocation4], 32, 32, 2
    $region33: #{ep_gru_forward.7} parent=1 // pred_fallthru
      _
    // Predicated region
    $region34: #{ep_gru_forward.7} parent=1 // pred_check
      _
    $region35: #{ep_gru_forward.7} parent=1 // pred_check_branch
      %889 = sbr.rel (0) target = $region37
    $region36: #{ep_gru_forward.7} parent=1 // pred_region
      %s891 = ssub.s32 32, 32
      %892 = vsyncadd [#allocation6], %s891
      %s894 = sshll.u32 [#allocation5], 4
      %s895 = int_to_ptr.vmem [resolvable:$true] %s894
      %897 = dma.vmem_to_hbm [thread:$0]  %s895, 32, %s6, [#allocation6]
    $region37: #{ep_gru_forward.7} parent=1 // pred_fallthru
      _
    // Predicated region
    $region38: #{ep_gru_forward.7} parent=1 // pred_check
      _
    $region39: #{ep_gru_forward.7} parent=1 // pred_check_branch
      %899 = sbr.rel (0) target = $region41
    $region40: #{ep_gru_forward.7} parent=1 // pred_region
      %900 = dma.done [#allocation4], 256
    $region41: #{ep_gru_forward.7} parent=1 // pred_fallthru
      _
    // Predicated region
    $region42: #{ep_gru_forward.7} parent=1 // pred_check
      _
    $region43: #{ep_gru_forward.7} parent=1 // pred_check_branch
      %902 = sbr.rel (0) target = $region45
    $region44: #{ep_gru_forward.7} parent=1 // pred_region
      %903 = dma.done [#allocation6], 32
    $region45: #{ep_gru_forward.7} parent=1 // pred_fallthru
      _
    %904 = vsyncpa [#allocation4], 1
    %905 = vsyncpa [#allocation6], 1

</llo_original>
